<compile_context>
chip_gen: v7x
topology: tpu7x:2x2x1
jax: 0.10.0
libtpu: 0.0.40
codegen_flags: <defaults>
</compile_context>

<pallas_src>
import functools
import math

import numpy as np
import jax
import jax.numpy as jnp
from jax import lax
from jax.experimental import pallas as pl
from jax.experimental.pallas import tpu as pltpu


# ---------------------------------------------------------------------------
# Helpers
# ---------------------------------------------------------------------------

_VMEM_LIMIT = 32 * 1024 * 1024   # explicit scoped-VMEM budget; fits v5e/v6e/v7x


def _cparams(sem):
    return pltpu.CompilerParams(dimension_semantics=sem,
                                vmem_limit_bytes=_VMEM_LIMIT)


def _ru(n, m):
    return ((n + m - 1) // m) * m


def _interp_matrix(Lin, Lout):
    """Dense linear map reproducing F.interpolate(mode='linear', align_corners=False)."""
    P = np.zeros((Lin, Lout), np.float32)
    if Lin == 1:
        P[0, :] = 1.0
        return P
    scale = Lin / Lout
    for i in range(Lout):
        src = max((i + 0.5) * scale - 0.5, 0.0)
        i0 = min(int(math.floor(src)), Lin - 1)
        i1 = i0 + 1 if i0 < Lin - 1 else i0
        l1 = src - i0
        P[i0, i] += 1.0 - l1
        P[i1, i] += l1
    return P


def _pick_l_tile(L, maxpad, tl_max):
    """Largest lane tile: full L if within budget, else a multiple-of-128 divisor.

    With the default tl_max=2048 the per-step VMEM footprint of the block kernel
    is a few MiB (double-buffered x/out/pmat tiles + FiLM temporaries), far under
    the 32 MiB scoped limit; halve tl_max on v7x (64 MiB physical VMEM) only if
    C / num_layers grow substantially.
    """
    if L <= tl_max:
        return L
    cand = (tl_max // 128) * 128
    while cand >= 128:
        if cand >= maxpad and L % cand == 0:
            return cand
        cand -= 128
    return L


# ---------------------------------------------------------------------------
# Fused FilterBlock kernel (all ModulatedCausalConv1d layers of one block)
# ---------------------------------------------------------------------------

def _block_kernel(c_ref, x_ref, pmat_ref, wfilm_ref, wconv_ref, bconv_ref,
                  o_ref, win_ref, *carry_refs, K, dils):
    """One whole FilterBlock for one (batch, L-tile) grid step.

    c_ref    : (F+1, Lc)         conditioning + ones row (bias fold)
    x_ref    : (C, TL)           block-input activation tile (f32)
    pmat_ref : (Lc, TL)          linear-interpolation matrix tile (shared by layers)
    wfilm_ref: (2*N*C, F+1)      stacked to_scale|to_shift weights (f32)
    wconv_ref: (N, C, K*C)       causal conv taps, flattened (k*C + ci)   (bf16)
    bconv_ref: (N, C, 1)         causal conv biases
    o_ref    : (C, TL)           block output tile (f32)
    win_ref  : (C, maxpad+TL)    bf16 scratch: [causal halo | modulated tile]
    carry_refs: per-layer (C, (K-1)*dil) bf16 carries (only when L is tiled)
    """
    C, TL = o_ref.shape
    n = len(dils)
    maxpad = (K - 1) * max(dils)
    t = pl.program_id(1)

    if carry_refs:
        # Sequence start for this batch element: causal context is all zeros.
        @pl.when(t == 0)
        def _():
            for cr in carry_refs:
                cr[...] = jnp.zeros_like(cr)
    else:
        # Single tile covers the whole sequence: static zero halo.
        win_ref[:, :maxpad] = jnp.zeros((C, maxpad), jnp.bfloat16)

    # FiLM parameters of *all* layers in two MXU passes:
    #   (2NC, F+1) @ (F+1, Lc) -> (2NC, Lc)  then  (2NC, Lc) @ (Lc, TL) -> (2NC, TL)
    cfeat = c_ref[...]
    film_small = jnp.dot(wfilm_ref[...], cfeat, preferred_element_type=jnp.float32)
    film = jnp.dot(film_small, pmat_ref[...], preferred_element_type=jnp.float32)

    act = x_ref[...]                                           # (C, TL) f32
    for l, dil in enumerate(dils):
        pad = (K - 1) * dil
        scale = film[l * C:(l + 1) * C, :]
        shift = film[(n + l) * C:(n + l + 1) * C, :]
        # FiLM modulation, cast to bf16 exactly once (review item: no per-tap casts).
        xm = (act * scale + shift).astype(jnp.bfloat16)        # (C, TL)
        if carry_refs:
            # Causal context = modulated tail of the previous tile (carried state).
            win_ref[:, maxpad - pad:maxpad] = carry_refs[l][...]
            carry_refs[l][...] = xm[:, TL - pad:]
        win_ref[:, maxpad:] = xm
        # Single MXU push over the stacked (K*C, TL) operand instead of K small dots.
        stacked = jnp.concatenate(
            [win_ref[:, pl.ds(maxpad - pad + k * dil, TL)] for k in range(K)], axis=0)
        act = jnp.dot(wconv_ref[l], stacked,
                      preferred_element_type=jnp.float32) + bconv_ref[l]
    o_ref[...] = act


def filter_block(x, c_aug, p, kernel_size, l_tile_max=2048):
    """Fused FilterBlock: all FiLM + causal-conv layers in one pallas_call."""
    B, C, L = x.shape
    F1, Lcond = c_aug.shape[1], c_aug.shape[2]
    K = kernel_size
    n_layers = p["wconv"].shape[0]
    dils = tuple([1] + [2 ** (d + 1) for d in range(n_layers - 1)])
    pads = [(K - 1) * d for d in dils]
    maxpad = max(pads)

    TL = _pick_l_tile(L, maxpad, l_tile_max)
    nLt = L // TL
    pmat = jnp.asarray(_interp_matrix(Lcond, L))        # one matrix per block, shared

    scratch = [pltpu.VMEM((C, maxpad + TL), jnp.bfloat16)]
    if nLt > 1:
        scratch += [pltpu.VMEM((C, pd), jnp.bfloat16) for pd in pads]

    return pl.pallas_call(
        functools.partial(_block_kernel, K=K, dils=dils),
        out_shape=jax.ShapeDtypeStruct((B, C, L), jnp.float32),
        grid=(B, nLt),
        in_specs=[
            pl.BlockSpec((None, F1, Lcond), lambda b, t: (b, 0, 0)),    # conditioning
            pl.BlockSpec((None, C, TL), lambda b, t: (b, 0, t)),        # activation tile
            pl.BlockSpec((Lcond, TL), lambda b, t: (0, t)),             # interp matrix tile
            pl.BlockSpec((2 * n_layers * C, F1), lambda b, t: (0, 0)),  # FiLM weights
            pl.BlockSpec((n_layers, C, K * C), lambda b, t: (0, 0, 0)), # conv taps
            pl.BlockSpec((n_layers, C, 1), lambda b, t: (0, 0, 0)),     # conv biases
        ],
        out_specs=pl.BlockSpec((None, C, TL), lambda b, t: (b, 0, t)),
        scratch_shapes=scratch,
        compiler_params=_cparams(("parallel", "arbitrary")),
    )(c_aug, x, pmat, p["wfilm"], p["wconv"], p["bconv"])


# ---------------------------------------------------------------------------
# source_in / source_out convs and kernel==stride down/up convs
# ---------------------------------------------------------------------------

def _tapconv_kernel(x_ref, w_ref, b_ref, o_ref, *, K, act):
    """Stride-1 symmetric-pad conv (source_in / source_out), one batch per step."""
    Cout, L = o_ref.shape
    if len(w_ref.shape) == 3:
        # Cin == 1 (source_in): degenerate contraction -> VPU broadcast, f32.
        acc = jnp.zeros((Cout, L), jnp.float32) + b_ref[...]
        for k in range(K):
            acc = acc + w_ref[k].astype(jnp.float32) * x_ref[:, pl.ds(k, L)]
    else:
        # Tap collapse: one dot over the stacked (K*Cin, L) operand.
        stacked = jnp.concatenate(
            [x_ref[:, pl.ds(k, L)].astype(jnp.bfloat16) for k in range(K)], axis=0)
        acc = jnp.dot(w_ref[...], stacked,
                      preferred_element_type=jnp.float32) + b_ref[...]
    if act == "tanh":
        acc = jnp.tanh(acc)
    o_ref[...] = acc


def tap_conv(x, p, *, pad, act=None):
    B, Cin, L = x.shape
    w = p["w"]
    if w.ndim == 3:
        K, Cout, _ = w.shape
        w_spec = pl.BlockSpec((K, Cout, Cin), lambda b: (0, 0, 0))
    else:
        Cout, KC = w.shape
        K = KC // Cin
        w_spec = pl.BlockSpec((Cout, KC), lambda b: (0, 0))
    Lp = L + 2 * pad
    Lout = Lp - (K - 1)
    xp = jnp.pad(x, ((0, 0), (0, 0), (pad, pad)))
    # TODO(synk): tile over L with a (K-1)-wide symmetric halo for very long audio.
    return pl.pallas_call(
        functools.partial(_tapconv_kernel, K=K, act=act),
        out_shape=jax.ShapeDtypeStruct((B, Cout, Lout), jnp.float32),
        grid=(B,),
        in_specs=[pl.BlockSpec((None, Cin, Lp), lambda b: (b, 0, 0)),
                  w_spec,
                  pl.BlockSpec((Cout, 1), lambda b: (0, 0))],
        out_specs=pl.BlockSpec((None, Cout, Lout), lambda b: (b, 0, 0)),
        compiler_params=_cparams(("parallel",)),
    )(xp, w, p["b"])


def _matmul_kernel(a_ref, x_ref, b_ref, o_ref):
    """o = a @ x + b.  a:(M,K) bf16 resident, x:(K,TN) streamed, b:(M,1)."""
    acc = jnp.dot(a_ref[...], x_ref[...].astype(jnp.bfloat16),
                  preferred_element_type=jnp.float32)
    o_ref[...] = acc + b_ref[...]


_MAX_TN = 2048  # single lane-dense block up to this width, tile beyond it


def matmul_bias(a, x, bias):
    """(M,K)bf16 @ (K,N)f32 + bias(M,1).  Full-K / full-M blocks, N tiled."""
    M, Kd = a.shape
    _, N = x.shape
    if N <= _MAX_TN:
        xp, Np, TN = x, N, N
    else:
        Np = _ru(N, 128)
        TN = next(t for t in (2048, 1024, 512, 256, 128) if Np % t == 0)
        xp = jnp.pad(x, ((0, 0), (0, Np - N))) if Np != N else x
    out = pl.pallas_call(
        _matmul_kernel,
        out_shape=jax.ShapeDtypeStruct((M, Np), jnp.float32),
        grid=(Np // TN,),
        in_specs=[
            pl.BlockSpec((M, Kd), lambda j: (0, 0)),   # weights resident
            pl.BlockSpec((Kd, TN), lambda j: (0, j)),  # stream columns
            pl.BlockSpec((M, 1), lambda j: (0, 0)),    # bias resident
        ],
        out_specs=pl.BlockSpec((M, TN), lambda j: (0, j)),
        compiler_params=_cparams(("parallel",)),
    )(a, xp, bias)
    return out if Np == N else out[:, :N]


def down_conv(x, p, r):
    """Conv1d with kernel==stride==r, pad 0 -> lane-dense matmul over B*Lout."""
    # TODO(synk): move this reshape/transpose in-kernel (strided lane reads) to
    # avoid the HBM layout round trip at real audio lengths.
    B, Cin, L = x.shape
    Lout = L // r
    X = x.reshape(B, Cin, Lout, r).transpose(1, 3, 0, 2).reshape(Cin * r, B * Lout)
    Y = matmul_bias(p["w2"], X, p["b"])                       # (Cout, B*Lout)
    Cout = p["w2"].shape[0]
    return Y.reshape(Cout, B, Lout).transpose(1, 0, 2)


def up_convT(x, p, r):
    """ConvTranspose1d with kernel==stride==r, pad 0 -> matmul + host interleave."""
    # TODO(synk): fuse this matmul + interleave + skip-add into the front of the
    # fused block kernel (strided VMEM stores) to drop one HBM round trip.
    B, Cin, L = x.shape
    X = x.transpose(1, 0, 2).reshape(Cin, B * L)
    Y = matmul_bias(p["w2"], X, p["b"])                       # (Cout*r, B*L)
    Cout = p["w2"].shape[0] // r
    return Y.reshape(Cout, r, B, L).transpose(2, 0, 3, 1).reshape(B, Cout, L * r)


# ---------------------------------------------------------------------------
# Forward pass (mirrors Filter.forward exactly)
# ---------------------------------------------------------------------------

def filter_forward(params, x, c, *, rates, kernel_size, l_tile_max=2048):
    B, _, Lcond = c.shape
    # Trailing ones row folds the FiLM 1x1-conv biases into the in-kernel matmul.
    c_aug = jnp.concatenate([c, jnp.ones((B, 1, Lcond), c.dtype)], axis=1)

    x = tap_conv(x, params["source_in"], pad=3)
    skips = []
    for dp, r in zip(params["downs"], rates):
        x = down_conv(x, dp, r)
        skips.append(x)

    for up_p, blk_p, s in zip(params["ups"], params["blocks"], reversed(skips)):
        x = up_convT(x + s, up_p, 2 if False else up_p["w2"].shape[0] // (up_p["w2"].shape[0] // (up_p["w2"].shape[0] // 1)))  # placeholder, replaced below
    # (rewritten below without the placeholder)
    raise RuntimeError  # pragma: no cover


def filter_forward(params, x, c, *, rates, kernel_size, l_tile_max=2048):  # noqa: F811
    B, _, Lcond = c.shape
    c_aug = jnp.concatenate([c, jnp.ones((B, 1, Lcond), c.dtype)], axis=1)

    x = tap_conv(x, params["source_in"], pad=3)
    skips = []
    for dp, r in zip(params["downs"], rates):
        x = down_conv(x, dp, r)
        skips.append(x)

    for up_p, blk_p, s, r in zip(params["ups"], params["blocks"],
                                 reversed(skips), reversed(rates)):
        x = up_convT(x + s, up_p, r)
        # NOTE: the reference FilterBlock calls F.gelu(x) and discards the result
        # (a no-op); reproduced exactly by not applying it.
        x = filter_block(x, c_aug, blk_p, kernel_size, l_tile_max)

    x = tap_conv(x, params["source_out"], pad=3, act="tanh")   # tanh fused in kernel
    return x


# ---------------------------------------------------------------------------
# Parameter init (PyTorch-default-style uniform) + kernel-layout preparation
# ---------------------------------------------------------------------------

def init_conv1d(key, cin, cout, k):
    k1, k2 = jax.random.split(key)
    bound = 1.0 / math.sqrt(cin * k)
    return {"w": jax.random.uniform(k1, (cout, cin, k), jnp.float32, -bound, bound),
            "b": jax.random.uniform(k2, (cout,), jnp.float32, -bound, bound)}


def init_convT1d(key, cin, cout, k):
    k1, k2 = jax.random.split(key)
    bound = 1.0 / math.sqrt(cout * k)
    return {"w": jax.random.uniform(k1, (cin, cout, k), jnp.float32, -bound, bound),
            "b": jax.random.uniform(k2, (cout,), jnp.float32, -bound, bound)}


def init_filter(key, feat_channels, rates, channels, kernel_size, num_layers):
    keys = iter(jax.random.split(key, 256))
    params = {"source_in": init_conv1d(next(keys), 1, channels[0], 7)}
    downs = []
    channels_nexts = channels[1:] + [channels[-1]]
    for ch, ch_next, r in zip(channels, channels_nexts, rates):
        downs.append(init_conv1d(next(keys), ch, ch_next, r))
    params["downs"] = downs
    ch_r = list(reversed(channels))
    rt_r = list(reversed(rates))
    ch_prev = [ch_r[0]] + ch_r[:-1]
    ups, blocks = [], []
    for ch, ch_p, r in zip(ch_r, ch_prev, rt_r):
        ups.append(init_convT1d(next(keys), ch_p, ch, r))
        layers = []
        for _ in range(num_layers):
            layers.append({"conv": init_conv1d(next(keys), ch, ch, kernel_size),
                           "to_scale": init_conv1d(next(keys), feat_channels, ch, 1),
                           "to_shift": init_conv1d(next(keys), feat_channels, ch, 1)})
        blocks.append(layers)
    params["ups"] = ups
    params["blocks"] = blocks
    params["source_out"] = init_conv1d(next(keys), ch_r[-1], 1, 7)
    return params


def prepare_params(raw):
    """Rearrange weights into kernel layouts; hot matmul operands stored bf16."""
    bf = lambda w: w.astype(jnp.bfloat16)
    col = lambda b: b.astype(jnp.float32).reshape(-1, 1)

    def tap_in(p):     # Cin == 1: per-tap layout for the VPU broadcast path
        return {"w": bf(jnp.transpose(p["w"], (2, 0, 1))), "b": col(p["b"])}

    def tap_flat(p):   # stacked (Cout, K*Cin) layout for the single-dot path
        cout, cin, k = p["w"].shape
        return {"w": bf(jnp.transpose(p["w"], (0, 2, 1)).reshape(cout, k * cin)),
                "b": col(p["b"])}

    prep = {"source_in": tap_in(raw["source_in"]),
            "source_out": tap_flat(raw["source_out"])}

    downs = []
    for dp in raw["downs"]:
        cout, cin, k = dp["w"].shape
        downs.append({"w2": bf(dp["w"].reshape(cout, cin * k)), "b": col(dp["b"])})
    prep["downs"] = downs

    ups = []
    for up in raw["ups"]:
        cin, cout, r = up["w"].shape
        w2 = jnp.transpose(up["w"], (1, 2, 0)).reshape(cout * r, cin)
        ups.append({"w2": bf(w2), "b": col(jnp.repeat(up["b"], r))})
    prep["ups"] = ups

    blocks = []
    for blk in raw["blocks"]:
        wsc, wsh, wcv, bcv = [], [], [], []
        for layer in blk:
            wsc.append(jnp.concatenate([layer["to_scale"]["w"][:, :, 0],
                                        layer["to_scale"]["b"][:, None]], axis=1))
            wsh.append(jnp.concatenate([layer["to_shift"]["w"][:, :, 0],
                                        layer["to_shift"]["b"][:, None]], axis=1))
            w = layer["conv"]["w"]                            # (C, C, K)
            wcv.append(jnp.transpose(w, (0, 2, 1)).reshape(w.shape[0], -1))
            bcv.append(layer["conv"]["b"].reshape(-1, 1))
        blocks.append({
            "wfilm": jnp.concatenate(wsc + wsh, axis=0).astype(jnp.float32),
            "wconv": bf(jnp.stack(wcv, axis=0)),              # (N, C, K*C)
            "bconv": jnp.stack(bcv, axis=0).astype(jnp.float32),
        })
    prep["blocks"] = blocks
    return prep


# ---------------------------------------------------------------------------
# Pure-JAX reference (f32, gather-based interpolation) for the self-check
# ---------------------------------------------------------------------------

def _ref_conv1d(x, w, b, stride=1, padding=0, dilation=1):
    B, Cin, L = x.shape
    Cout, _, K = w.shape
    if padding > 0:
        x = jnp.pad(x, ((0, 0), (0, 0), (padding, padding)))
    Lp = x.shape[2]
    Lout = (Lp - dilation * (K - 1) - 1) // stride + 1
    cols = []
    for k in range(K):
        start = k * dilation
        limit = start + (Lout - 1) * stride + 1
        cols.append(lax.slice_in_dim(x, start, limit, stride=stride, axis=2))
    xc = jnp.stack(cols, axis=2).reshape(B, Cin * K, Lout)
    return jnp.einsum("ok,bkl->bol", w.reshape(Cout, Cin * K), xc) + b[None, :, None]


def _ref_convT1d(x, w, b):
    B, Cin, L = x.shape
    _, Cout, r = w.shape
    y = jnp.einsum("coj,bct->botj", w, x).reshape(B, Cout, L * r)
    return y + b[None, :, None]


def _ref_interp(x, Lout):
    """F.interpolate(mode='linear', align_corners=False), gather formulation."""
    B, C, Lin = x.shape
    if Lin == 1:
        return jnp.broadcast_to(x, (B, C, Lout))
    src = (jnp.arange(Lout, dtype=jnp.float32) + 0.5) * (Lin / Lout) - 0.5
    src = jnp.clip(src, 0.0, Lin - 1.0)
    i0 = jnp.clip(jnp.floor(src).astype(jnp.int32), 0, Lin - 1)
    i1 = jnp.minimum(i0 + 1, Lin - 1)
    lam = src - i0.astype(jnp.float32)
    x0 = jnp.take(x, i0, axis=2)
    x1 = jnp.take(x, i1, axis=2)
    return x0 * (1.0 - lam) + x1 * lam


def _ref_forward(raw, x, c, *, rates, kernel_size, num_layers):
    # Conv weights are quantized to bf16 exactly as in the kernel path so the
    # comparison isolates kernel correctness from the deliberate precision choice.
    q = lambda w: w.astype(jnp.bfloat16).astype(jnp.float32)
    x = _ref_conv1d(x, q(raw["source_in"]["w"]), raw["source_in"]["b"], padding=3)
    skips = []
    for dp, r in zip(raw["downs"], rates):
        x = _ref_conv1d(x, q(dp["w"]), dp["b"], stride=r)
        skips.append(x)
    dils = [1] + [2 ** (d + 1) for d in range(num_layers - 1)]
    for up, blk, s in zip(raw["ups"], raw["blocks"], reversed(skips)):
        x = _ref_convT1d(x + s, q(up["w"]), up["b"])
        for layer, dil in zip(blk, dils):
            scale = _ref_conv1d(c, layer["to_scale"]["w"], layer["to_scale"]["b"])
            shift = _ref_conv1d(c, layer["to_shift"]["w"], layer["to_shift"]["b"])
            L = x.shape[2]
            xm = x * _ref_interp(scale, L) + _ref_interp(shift, L)
            pad = (kernel_size - 1) * dil
            xm = jnp.pad(xm, ((0, 0), (0, 0), (pad, 0)))
            x = _ref_conv1d(xm, q(layer["conv"]["w"]), layer["conv"]["b"], dilation=dil)
    x = _ref_conv1d(x, q(raw["source_out"]["w"]), raw["source_out"]["b"], padding=3)
    return jnp.tanh(x)


# ---------------------------------------------------------------------------
# Main
# ---------------------------------------------------------------------------

if __name__ == "__main__":
    # Small, structure-preserving configuration of Filter(...).
    feat_channels = 32
    rates = (2, 2)                 # product 4 -> input length must be a multiple of 4
    channels = [8, 16]
    kernel_size = 5
    num_layers = 2

    B, T, Lc = 2, 256, 8

    key = jax.random.PRNGKey(0)
    kp, kx, kc = jax.random.split(key, 3)
    raw_params = init_filter(kp, feat_channels, list(rates), channels,
                             kernel_size, num_layers)
    params = prepare_params(raw_params)

    x = jax.random.normal(kx, (B, 1, T), jnp.float32)               # source waveform (N, 1, L)
    c = jax.random.normal(kc, (B, feat_channels, Lc), jnp.float32)  # conditioning features

    # l_tile_max=128 so the L=256 block exercises the multi-tile (carry) path;
    # production default is 2048.
    fwd = jax.jit(functools.partial(filter_forward, rates=rates,
                                    kernel_size=kernel_size, l_tile_max=128))
    y = jax.block_until_ready(fwd(params, x, c))

    assert y.shape == (B, 1, T), y.shape
    assert bool(jnp.all(jnp.isfinite(y)))
    assert bool(jnp.all(jnp.abs(y) <= 1.0))   # tanh output range

    # Correctness self-check against the pure-JAX reference.
    y_ref = _ref_forward(raw_params, x, c, rates=rates,
                         kernel_size=kernel_size, num_layers=num_layers)
    err = float(jnp.max(jnp.abs(y - y_ref)))
    assert err < 5e-2, f"max abs err vs reference: {err}"

    print("KERNEL_OK")
</pallas_src>

<mosaic_0001>
module attributes {stable_mosaic.version = 11 : i64} {
  func.func @_tapconv_kernel(%arg0: i32, %arg1: memref<1x1x262xf32, #tpu.memory_space<vmem>>, %arg2: memref<7x8x1xbf16, #tpu.memory_space<vmem>>, %arg3: memref<8x1xf32, #tpu.memory_space<vmem>>, %arg4: memref<1x8x256xf32, #tpu.memory_space<vmem>>) attributes {dimension_semantics = [#tpu.dimension_semantics<parallel>], iteration_bounds = array<i64: 2>, scalar_prefetch = 0 : i64, scratch_operands = 0 : i64, tpu.core_type = #tpu.core_type<tc>, window_params = [{transform_indices = @transform_0, window_bounds = array<i64: 1, 1, 262>}, {pipeline_mode = #tpu.pipeline_mode<synchronous>, transform_indices = @transform_1, window_bounds = array<i64: 7, 8, 1>}, {pipeline_mode = #tpu.pipeline_mode<synchronous>, transform_indices = @transform_2, window_bounds = array<i64: 8, 1>}, {transform_indices = @transform_3, window_bounds = array<i64: 1, 8, 256>}]} {
    %cst = arith.constant 0.000000e+00 : f32
    %0 = vector.broadcast %cst : f32 to vector<8x256xf32>
    %c0 = arith.constant 0 : index
    %c0_0 = arith.constant 0 : index
    %1 = vector.load %arg3[%c0, %c0_0] : memref<8x1xf32, #tpu.memory_space<vmem>>, vector<8x1xf32>
    %2 = vector.broadcast %1 : vector<8x1xf32> to vector<8x256xf32>
    %3 = arith.addf %0, %2 : vector<8x256xf32>
    %c0_1 = arith.constant 0 : index
    %c0_2 = arith.constant 0 : index
    %c0_3 = arith.constant 0 : index
    %4 = vector.load %arg2[%c0_1, %c0_2, %c0_3] : memref<7x8x1xbf16, #tpu.memory_space<vmem>>, vector<1x8x1xbf16>
    %5 = vector.shape_cast %4 : vector<1x8x1xbf16> to vector<8x1xbf16>
    %6 = arith.extf %5 : vector<8x1xbf16> to vector<8x1xf32>
    %c0_4 = arith.constant 0 : index
    %c0_5 = arith.constant 0 : index
    %c0_6 = arith.constant 0 : index
    %7 = vector.load %arg1[%c0_4, %c0_5, %c0_6] : memref<1x1x262xf32, #tpu.memory_space<vmem>>, vector<1x1x256xf32>
    %8 = vector.shape_cast %7 : vector<1x1x256xf32> to vector<1x256xf32>
    %9 = vector.broadcast %6 : vector<8x1xf32> to vector<8x256xf32>
    %10 = vector.broadcast %8 : vector<1x256xf32> to vector<8x256xf32>
    %11 = arith.mulf %9, %10 : vector<8x256xf32>
    %12 = arith.addf %3, %11 : vector<8x256xf32>
    %c1 = arith.constant 1 : index
    %c0_7 = arith.constant 0 : index
    %c0_8 = arith.constant 0 : index
    %13 = vector.load %arg2[%c1, %c0_7, %c0_8] : memref<7x8x1xbf16, #tpu.memory_space<vmem>>, vector<1x8x1xbf16>
    %14 = vector.shape_cast %13 : vector<1x8x1xbf16> to vector<8x1xbf16>
    %15 = arith.extf %14 : vector<8x1xbf16> to vector<8x1xf32>
    %c0_9 = arith.constant 0 : index
    %c0_10 = arith.constant 0 : index
    %c1_11 = arith.constant 1 : index
    %16 = vector.load %arg1[%c0_9, %c0_10, %c1_11] : memref<1x1x262xf32, #tpu.memory_space<vmem>>, vector<1x1x256xf32>
    %17 = vector.shape_cast %16 : vector<1x1x256xf32> to vector<1x256xf32>
    %18 = vector.broadcast %15 : vector<8x1xf32> to vector<8x256xf32>
    %19 = vector.broadcast %17 : vector<1x256xf32> to vector<8x256xf32>
    %20 = arith.mulf %18, %19 : vector<8x256xf32>
    %21 = arith.addf %12, %20 : vector<8x256xf32>
    %c2 = arith.constant 2 : index
    %c0_12 = arith.constant 0 : index
    %c0_13 = arith.constant 0 : index
    %22 = vector.load %arg2[%c2, %c0_12, %c0_13] : memref<7x8x1xbf16, #tpu.memory_space<vmem>>, vector<1x8x1xbf16>
    %23 = vector.shape_cast %22 : vector<1x8x1xbf16> to vector<8x1xbf16>
    %24 = arith.extf %23 : vector<8x1xbf16> to vector<8x1xf32>
    %c0_14 = arith.constant 0 : index
    %c0_15 = arith.constant 0 : index
    %c2_16 = arith.constant 2 : index
    %25 = vector.load %arg1[%c0_14, %c0_15, %c2_16] : memref<1x1x262xf32, #tpu.memory_space<vmem>>, vector<1x1x256xf32>
    %26 = vector.shape_cast %25 : vector<1x1x256xf32> to vector<1x256xf32>
    %27 = vector.broadcast %24 : vector<8x1xf32> to vector<8x256xf32>
    %28 = vector.broadcast %26 : vector<1x256xf32> to vector<8x256xf32>
    %29 = arith.mulf %27, %28 : vector<8x256xf32>
    %30 = arith.addf %21, %29 : vector<8x256xf32>
    %c3 = arith.constant 3 : index
    %c0_17 = arith.constant 0 : index
    %c0_18 = arith.constant 0 : index
    %31 = vector.load %arg2[%c3, %c0_17, %c0_18] : memref<7x8x1xbf16, #tpu.memory_space<vmem>>, vector<1x8x1xbf16>
    %32 = vector.shape_cast %31 : vector<1x8x1xbf16> to vector<8x1xbf16>
    %33 = arith.extf %32 : vector<8x1xbf16> to vector<8x1xf32>
    %c0_19 = arith.constant 0 : index
    %c0_20 = arith.constant 0 : index
    %c3_21 = arith.constant 3 : index
    %34 = vector.load %arg1[%c0_19, %c0_20, %c3_21] : memref<1x1x262xf32, #tpu.memory_space<vmem>>, vector<1x1x256xf32>
    %35 = vector.shape_cast %34 : vector<1x1x256xf32> to vector<1x256xf32>
    %36 = vector.broadcast %33 : vector<8x1xf32> to vector<8x256xf32>
    %37 = vector.broadcast %35 : vector<1x256xf32> to vector<8x256xf32>
    %38 = arith.mulf %36, %37 : vector<8x256xf32>
    %39 = arith.addf %30, %38 : vector<8x256xf32>
    %c4 = arith.constant 4 : index
    %c0_22 = arith.constant 0 : index
    %c0_23 = arith.constant 0 : index
    %40 = vector.load %arg2[%c4, %c0_22, %c0_23] : memref<7x8x1xbf16, #tpu.memory_space<vmem>>, vector<1x8x1xbf16>
    %41 = vector.shape_cast %40 : vector<1x8x1xbf16> to vector<8x1xbf16>
    %42 = arith.extf %41 : vector<8x1xbf16> to vector<8x1xf32>
    %c0_24 = arith.constant 0 : index
    %c0_25 = arith.constant 0 : index
    %c4_26 = arith.constant 4 : index
    %43 = vector.load %arg1[%c0_24, %c0_25, %c4_26] : memref<1x1x262xf32, #tpu.memory_space<vmem>>, vector<1x1x256xf32>
    %44 = vector.shape_cast %43 : vector<1x1x256xf32> to vector<1x256xf32>
    %45 = vector.broadcast %42 : vector<8x1xf32> to vector<8x256xf32>
    %46 = vector.broadcast %44 : vector<1x256xf32> to vector<8x256xf32>
    %47 = arith.mulf %45, %46 : vector<8x256xf32>
    %48 = arith.addf %39, %47 : vector<8x256xf32>
    %c5 = arith.constant 5 : index
    %c0_27 = arith.constant 0 : index
    %c0_28 = arith.constant 0 : index
    %49 = vector.load %arg2[%c5, %c0_27, %c0_28] : memref<7x8x1xbf16, #tpu.memory_space<vmem>>, vector<1x8x1xbf16>
    %50 = vector.shape_cast %49 : vector<1x8x1xbf16> to vector<8x1xbf16>
    %51 = arith.extf %50 : vector<8x1xbf16> to vector<8x1xf32>
    %c0_29 = arith.constant 0 : index
    %c0_30 = arith.constant 0 : index
    %c5_31 = arith.constant 5 : index
    %52 = vector.load %arg1[%c0_29, %c0_30, %c5_31] : memref<1x1x262xf32, #tpu.memory_space<vmem>>, vector<1x1x256xf32>
    %53 = vector.shape_cast %52 : vector<1x1x256xf32> to vector<1x256xf32>
    %54 = vector.broadcast %51 : vector<8x1xf32> to vector<8x256xf32>
    %55 = vector.broadcast %53 : vector<1x256xf32> to vector<8x256xf32>
    %56 = arith.mulf %54, %55 : vector<8x256xf32>
    %57 = arith.addf %48, %56 : vector<8x256xf32>
    %c6 = arith.constant 6 : index
    %c0_32 = arith.constant 0 : index
    %c0_33 = arith.constant 0 : index
    %58 = vector.load %arg2[%c6, %c0_32, %c0_33] : memref<7x8x1xbf16, #tpu.memory_space<vmem>>, vector<1x8x1xbf16>
    %59 = vector.shape_cast %58 : vector<1x8x1xbf16> to vector<8x1xbf16>
    %60 = arith.extf %59 : vector<8x1xbf16> to vector<8x1xf32>
    %c0_34 = arith.constant 0 : index
    %c0_35 = arith.constant 0 : index
    %c6_36 = arith.constant 6 : index
    %61 = vector.load %arg1[%c0_34, %c0_35, %c6_36] : memref<1x1x262xf32, #tpu.memory_space<vmem>>, vector<1x1x256xf32>
    %62 = vector.shape_cast %61 : vector<1x1x256xf32> to vector<1x256xf32>
    %63 = vector.broadcast %60 : vector<8x1xf32> to vector<8x256xf32>
    %64 = vector.broadcast %62 : vector<1x256xf32> to vector<8x256xf32>
    %65 = arith.mulf %63, %64 : vector<8x256xf32>
    %66 = arith.addf %57, %65 : vector<8x256xf32>
    %c0_37 = arith.constant 0 : index
    %c0_38 = arith.constant 0 : index
    %c0_39 = arith.constant 0 : index
    %67 = vector.load %arg4[%c0_37, %c0_38, %c0_39] : memref<1x8x256xf32, #tpu.memory_space<vmem>>, vector<1x8x256xf32>
    %68 = vector.shape_cast %67 : vector<1x8x256xf32> to vector<8x256xf32>
    %69 = vector.shape_cast %66 : vector<8x256xf32> to vector<1x8x256xf32>
    tpu.vector_store %arg4[%c0_37, %c0_38, %c0_39], %69 {strides = array<i32>} : memref<1x8x256xf32, #tpu.memory_space<vmem>>, vector<1x8x256xf32>,
    return
  }
  func.func @transform_0(%arg0: i32) -> (i32, i32, i32) {
    %c0_i32 = arith.constant 0 : i32
    %c0_i32_0 = arith.constant 0 : i32
    %c0_i32_1 = arith.constant 0 : i32
    return %arg0, %c0_i32, %c0_i32_0 : i32, i32, i32
  }
  func.func @transform_1(%arg0: i32) -> (i32, i32, i32) {
    %c0_i32 = arith.constant 0 : i32
    %c0_i32_0 = arith.constant 0 : i32
    %c0_i32_1 = arith.constant 0 : i32
    %c0_i32_2 = arith.constant 0 : i32
    return %c0_i32, %c0_i32_0, %c0_i32_1 : i32, i32, i32
  }
  func.func @transform_2(%arg0: i32) -> (i32, i32) {
    %c0_i32 = arith.constant 0 : i32
    %c0_i32_0 = arith.constant 0 : i32
    %c0_i32_1 = arith.constant 0 : i32
    return %c0_i32, %c0_i32_0 : i32, i32
  }
  func.func @transform_3(%arg0: i32) -> (i32, i32, i32) {
    %c0_i32 = arith.constant 0 : i32
    %c0_i32_0 = arith.constant 0 : i32
    %c0_i32_1 = arith.constant 0 : i32
    return %arg0, %c0_i32, %c0_i32_0 : i32, i32, i32
  }
}

module attributes {stable_mosaic.version = 11 : i64} {
  func.func @_matmul_kernel(%arg0: i32, %arg1: memref<16x16xbf16, #tpu.memory_space<vmem>>, %arg2: memref<16x256xf32, #tpu.memory_space<vmem>>, %arg3: memref<16x1xf32, #tpu.memory_space<vmem>>, %arg4: memref<16x256xf32, #tpu.memory_space<vmem>>) attributes {dimension_semantics = [#tpu.dimension_semantics<parallel>], iteration_bounds = array<i64: 1>, scalar_prefetch = 0 : i64, scratch_operands = 0 : i64, tpu.core_type = #tpu.core_type<tc>, window_params = [{pipeline_mode = #tpu.pipeline_mode<synchronous>, transform_indices = @transform_0, window_bounds = array<i64: 16, 16>}, {transform_indices = @transform_1, window_bounds = array<i64: 16, 256>}, {pipeline_mode = #tpu.pipeline_mode<synchronous>, transform_indices = @transform_2, window_bounds = array<i64: 16, 1>}, {transform_indices = @transform_3, window_bounds = array<i64: 16, 256>}]} {
    %c0 = arith.constant 0 : index
    %c0_0 = arith.constant 0 : index
    %0 = vector.load %arg1[%c0, %c0_0] : memref<16x16xbf16, #tpu.memory_space<vmem>>, vector<16x16xbf16>
    %c0_1 = arith.constant 0 : index
    %c0_2 = arith.constant 0 : index
    %1 = vector.load %arg2[%c0_1, %c0_2] : memref<16x256xf32, #tpu.memory_space<vmem>>, vector<16x256xf32>
    %2 = arith.truncf %1 : vector<16x256xf32> to vector<16x256xbf16>
    %cst = arith.constant dense<0.000000e+00> : vector<16x256xf32>
    %3 = tpu.matmul %0, %2, %cst {dimension_numbers = #tpu.dot_dimension_numbers<[1], [0], [0], [1], [0, 0, 1, 1], [], []>} : vector<16x16xbf16>, vector<16x256xbf16>, vector<16x256xf32> -> vector<16x256xf32>
    %c0_3 = arith.constant 0 : index
    %c0_4 = arith.constant 0 : index
    %4 = vector.load %arg3[%c0_3, %c0_4] : memref<16x1xf32, #tpu.memory_space<vmem>>, vector<16x1xf32>
    %5 = vector.broadcast %4 : vector<16x1xf32> to vector<16x256xf32>
    %6 = arith.addf %3, %5 : vector<16x256xf32>
    %c0_5 = arith.constant 0 : index
    %c0_6 = arith.constant 0 : index
    %7 = vector.load %arg4[%c0_5, %c0_6] : memref<16x256xf32, #tpu.memory_space<vmem>>, vector<16x256xf32>
    tpu.vector_store %arg4[%c0_5, %c0_6], %6 {strides = array<i32>} : memref<16x256xf32, #tpu.memory_space<vmem>>, vector<16x256xf32>,
    return
  }
  func.func @transform_0(%arg0: i32) -> (i32, i32) {
    %c0_i32 = arith.constant 0 : i32
    %c0_i32_0 = arith.constant 0 : i32
    %c0_i32_1 = arith.constant 0 : i32
    return %c0_i32, %c0_i32_0 : i32, i32
  }
  func.func @transform_1(%arg0: i32) -> (i32, i32) {
    %c0_i32 = arith.constant 0 : i32
    %c0_i32_0 = arith.constant 0 : i32
    return %c0_i32, %arg0 : i32, i32
  }
  func.func @transform_2(%arg0: i32) -> (i32, i32) {
    %c0_i32 = arith.constant 0 : i32
    %c0_i32_0 = arith.constant 0 : i32
    %c0_i32_1 = arith.constant 0 : i32
    return %c0_i32, %c0_i32_0 : i32, i32
  }
  func.func @transform_3(%arg0: i32) -> (i32, i32) {
    %c0_i32 = arith.constant 0 : i32
    %c0_i32_0 = arith.constant 0 : i32
    return %c0_i32, %arg0 : i32, i32
  }
}

module attributes {stable_mosaic.version = 11 : i64} {
  func.func @_matmul_kernel(%arg0: i32, %arg1: memref<16x32xbf16, #tpu.memory_space<vmem>>, %arg2: memref<32x128xf32, #tpu.memory_space<vmem>>, %arg3: memref<16x1xf32, #tpu.memory_space<vmem>>, %arg4: memref<16x128xf32, #tpu.memory_space<vmem>>) attributes {dimension_semantics = [#tpu.dimension_semantics<parallel>], iteration_bounds = array<i64: 1>, scalar_prefetch = 0 : i64, scratch_operands = 0 : i64, tpu.core_type = #tpu.core_type<tc>, window_params = [{pipeline_mode = #tpu.pipeline_mode<synchronous>, transform_indices = @transform_0, window_bounds = array<i64: 16, 32>}, {transform_indices = @transform_1, window_bounds = array<i64: 32, 128>}, {pipeline_mode = #tpu.pipeline_mode<synchronous>, transform_indices = @transform_2, window_bounds = array<i64: 16, 1>}, {transform_indices = @transform_3, window_bounds = array<i64: 16, 128>}]} {
    %c0 = arith.constant 0 : index
    %c0_0 = arith.constant 0 : index
    %0 = vector.load %arg1[%c0, %c0_0] : memref<16x32xbf16, #tpu.memory_space<vmem>>, vector<16x32xbf16>
    %c0_1 = arith.constant 0 : index
    %c0_2 = arith.constant 0 : index
    %1 = vector.load %arg2[%c0_1, %c0_2] : memref<32x128xf32, #tpu.memory_space<vmem>>, vector<32x128xf32>
    %2 = arith.truncf %1 : vector<32x128xf32> to vector<32x128xbf16>
    %cst = arith.constant dense<0.000000e+00> : vector<16x128xf32>
    %3 = tpu.matmul %0, %2, %cst {dimension_numbers = #tpu.dot_dimension_numbers<[1], [0], [0], [1], [0, 0, 1, 1], [], []>} : vector<16x32xbf16>, vector<32x128xbf16>, vector<16x128xf32> -> vector<16x128xf32>
    %c0_3 = arith.constant 0 : index
    %c0_4 = arith.constant 0 : index
    %4 = vector.load %arg3[%c0_3, %c0_4] : memref<16x1xf32, #tpu.memory_space<vmem>>, vector<16x1xf32>
    %5 = vector.broadcast %4 : vector<16x1xf32> to vector<16x128xf32>
    %6 = arith.addf %3, %5 : vector<16x128xf32>
    %c0_5 = arith.constant 0 : index
    %c0_6 = arith.constant 0 : index
    %7 = vector.load %arg4[%c0_5, %c0_6] : memref<16x128xf32, #tpu.memory_space<vmem>>, vector<16x128xf32>
    tpu.vector_store %arg4[%c0_5, %c0_6], %6 {strides = array<i32>} : memref<16x128xf32, #tpu.memory_space<vmem>>, vector<16x128xf32>,
    return
  }
  func.func @transform_0(%arg0: i32) -> (i32, i32) {
    %c0_i32 = arith.constant 0 : i32
    %c0_i32_0 = arith.constant 0 : i32
    %c0_i32_1 = arith.constant 0 : i32
    return %c0_i32, %c0_i32_0 : i32, i32
  }
  func.func @transform_1(%arg0: i32) -> (i32, i32) {
    %c0_i32 = arith.constant 0 : i32
    %c0_i32_0 = arith.constant 0 : i32
    return %c0_i32, %arg0 : i32, i32
  }
  func.func @transform_2(%arg0: i32) -> (i32, i32) {
    %c0_i32 = arith.constant 0 : i32
    %c0_i32_0 = arith.constant 0 : i32
    %c0_i32_1 = arith.constant 0 : i32
    return %c0_i32, %c0_i32_0 : i32, i32
  }
  func.func @transform_3(%arg0: i32) -> (i32, i32) {
    %c0_i32 = arith.constant 0 : i32
    %c0_i32_0 = arith.constant 0 : i32
    return %c0_i32, %arg0 : i32, i32
  }
}

module attributes {stable_mosaic.version = 11 : i64} {
  func.func @_matmul_kernel(%arg0: i32, %arg1: memref<32x16xbf16, #tpu.memory_space<vmem>>, %arg2: memref<16x128xf32, #tpu.memory_space<vmem>>, %arg3: memref<32x1xf32, #tpu.memory_space<vmem>>, %arg4: memref<32x128xf32, #tpu.memory_space<vmem>>) attributes {dimension_semantics = [#tpu.dimension_semantics<parallel>], iteration_bounds = array<i64: 1>, scalar_prefetch = 0 : i64, scratch_operands = 0 : i64, tpu.core_type = #tpu.core_type<tc>, window_params = [{pipeline_mode = #tpu.pipeline_mode<synchronous>, transform_indices = @transform_0, window_bounds = array<i64: 32, 16>}, {transform_indices = @transform_1, window_bounds = array<i64: 16, 128>}, {pipeline_mode = #tpu.pipeline_mode<synchronous>, transform_indices = @transform_2, window_bounds = array<i64: 32, 1>}, {transform_indices = @transform_3, window_bounds = array<i64: 32, 128>}]} {
    %c0 = arith.constant 0 : index
    %c0_0 = arith.constant 0 : index
    %0 = vector.load %arg1[%c0, %c0_0] : memref<32x16xbf16, #tpu.memory_space<vmem>>, vector<32x16xbf16>
    %c0_1 = arith.constant 0 : index
    %c0_2 = arith.constant 0 : index
    %1 = vector.load %arg2[%c0_1, %c0_2] : memref<16x128xf32, #tpu.memory_space<vmem>>, vector<16x128xf32>
    %2 = arith.truncf %1 : vector<16x128xf32> to vector<16x128xbf16>
    %cst = arith.constant dense<0.000000e+00> : vector<32x128xf32>
    %3 = tpu.matmul %0, %2, %cst {dimension_numbers = #tpu.dot_dimension_numbers<[1], [0], [0], [1], [0, 0, 1, 1], [], []>} : vector<32x16xbf16>, vector<16x128xbf16>, vector<32x128xf32> -> vector<32x128xf32>
    %c0_3 = arith.constant 0 : index
    %c0_4 = arith.constant 0 : index
    %4 = vector.load %arg3[%c0_3, %c0_4] : memref<32x1xf32, #tpu.memory_space<vmem>>, vector<32x1xf32>
    %5 = vector.broadcast %4 : vector<32x1xf32> to vector<32x128xf32>
    %6 = arith.addf %3, %5 : vector<32x128xf32>
    %c0_5 = arith.constant 0 : index
    %c0_6 = arith.constant 0 : index
    %7 = vector.load %arg4[%c0_5, %c0_6] : memref<32x128xf32, #tpu.memory_space<vmem>>, vector<32x128xf32>
    tpu.vector_store %arg4[%c0_5, %c0_6], %6 {strides = array<i32>} : memref<32x128xf32, #tpu.memory_space<vmem>>, vector<32x128xf32>,
    return
  }
  func.func @transform_0(%arg0: i32) -> (i32, i32) {
    %c0_i32 = arith.constant 0 : i32
    %c0_i32_0 = arith.constant 0 : i32
    %c0_i32_1 = arith.constant 0 : i32
    return %c0_i32, %c0_i32_0 : i32, i32
  }
  func.func @transform_1(%arg0: i32) -> (i32, i32) {
    %c0_i32 = arith.constant 0 : i32
    %c0_i32_0 = arith.constant 0 : i32
    return %c0_i32, %arg0 : i32, i32
  }
  func.func @transform_2(%arg0: i32) -> (i32, i32) {
    %c0_i32 = arith.constant 0 : i32
    %c0_i32_0 = arith.constant 0 : i32
    %c0_i32_1 = arith.constant 0 : i32
    return %c0_i32, %c0_i32_0 : i32, i32
  }
  func.func @transform_3(%arg0: i32) -> (i32, i32) {
    %c0_i32 = arith.constant 0 : i32
    %c0_i32_0 = arith.constant 0 : i32
    return %c0_i32, %arg0 : i32, i32
  }
}

module attributes {stable_mosaic.version = 11 : i64} {
  func.func @_block_kernel(%arg0: i32, %arg1: i32, %arg2: memref<1x33x8xf32, #tpu.memory_space<vmem>>, %arg3: memref<1x16x128xf32, #tpu.memory_space<vmem>>, %arg4: memref<8x128xf32, #tpu.memory_space<vmem>>, %arg5: memref<64x33xf32, #tpu.memory_space<vmem>>, %arg6: memref<2x16x80xbf16, #tpu.memory_space<vmem>>, %arg7: memref<2x16x1xf32, #tpu.memory_space<vmem>>, %arg8: memref<1x16x128xf32, #tpu.memory_space<vmem>>, %arg9: memref<16x136xbf16, #tpu.memory_space<vmem>>) attributes {dimension_semantics = [#tpu.dimension_semantics<parallel>, #tpu.dimension_semantics<arbitrary>], iteration_bounds = array<i64: 2, 1>, scalar_prefetch = 0 : i64, scratch_operands = 1 : i64, tpu.core_type = #tpu.core_type<tc>, window_params = [{transform_indices = @transform_0, window_bounds = array<i64: 1, 33, 8>}, {transform_indices = @transform_1, window_bounds = array<i64: 1, 16, 128>}, {transform_indices = @transform_2, window_bounds = array<i64: 8, 128>}, {pipeline_mode = #tpu.pipeline_mode<synchronous>, transform_indices = @transform_3, window_bounds = array<i64: 64, 33>}, {pipeline_mode = #tpu.pipeline_mode<synchronous>, transform_indices = @transform_4, window_bounds = array<i64: 2, 16, 80>}, {pipeline_mode = #tpu.pipeline_mode<synchronous>, transform_indices = @transform_5, window_bounds = array<i64: 2, 16, 1>}, {transform_indices = @transform_6, window_bounds = array<i64: 1, 16, 128>}]} {
    %cst = arith.constant 0.000000e+00 : bf16
    %0 = vector.broadcast %cst : bf16 to vector<16x8xbf16>
    %c0 = arith.constant 0 : index
    %c0_0 = arith.constant 0 : index
    %1 = vector.load %arg9[%c0, %c0_0] : memref<16x136xbf16, #tpu.memory_space<vmem>>, vector<16x8xbf16>
    tpu.vector_store %arg9[%c0, %c0_0], %0 {strides = array<i32>} : memref<16x136xbf16, #tpu.memory_space<vmem>>, vector<16x8xbf16>,
    %c0_1 = arith.constant 0 : index
    %c0_2 = arith.constant 0 : index
    %c0_3 = arith.constant 0 : index
    %2 = vector.load %arg2[%c0_1, %c0_2, %c0_3] : memref<1x33x8xf32, #tpu.memory_space<vmem>>, vector<1x33x8xf32>
    %3 = vector.shape_cast %2 : vector<1x33x8xf32> to vector<33x8xf32>
    %c0_4 = arith.constant 0 : index
    %c0_5 = arith.constant 0 : index
    %4 = vector.load %arg5[%c0_4, %c0_5] : memref<64x33xf32, #tpu.memory_space<vmem>>, vector<64x33xf32>
    %cst_6 = arith.constant dense<0.000000e+00> : vector<64x8xf32>
    %5 = tpu.matmul %4, %3, %cst_6 {dimension_numbers = #tpu.dot_dimension_numbers<[1], [0], [0], [1], [0, 0, 1, 1], [], []>} : vector<64x33xf32>, vector<33x8xf32>, vector<64x8xf32> -> vector<64x8xf32>
    %c0_7 = arith.constant 0 : index
    %c0_8 = arith.constant 0 : index
    %6 = vector.load %arg4[%c0_7, %c0_8] : memref<8x128xf32, #tpu.memory_space<vmem>>, vector<8x128xf32>
    %cst_9 = arith.constant dense<0.000000e+00> : vector<64x128xf32>
    %7 = tpu.matmul %5, %6, %cst_9 {dimension_numbers = #tpu.dot_dimension_numbers<[1], [0], [0], [1], [0, 0, 1, 1], [], []>} : vector<64x8xf32>, vector<8x128xf32>, vector<64x128xf32> -> vector<64x128xf32>
    %c0_10 = arith.constant 0 : index
    %c0_11 = arith.constant 0 : index
    %c0_12 = arith.constant 0 : index
    %8 = vector.load %arg3[%c0_10, %c0_11, %c0_12] : memref<1x16x128xf32, #tpu.memory_space<vmem>>, vector<1x16x128xf32>
    %9 = vector.shape_cast %8 : vector<1x16x128xf32> to vector<16x128xf32>
    %10 = vector.extract_strided_slice %7 {offsets = [0, 0], sizes = [16, 128], strides = [1, 1]} : vector<64x128xf32> to vector<16x128xf32>
    %11 = vector.extract_strided_slice %7 {offsets = [32, 0], sizes = [16, 128], strides = [1, 1]} : vector<64x128xf32> to vector<16x128xf32>
    %12 = arith.mulf %9, %10 : vector<16x128xf32>
    %13 = arith.addf %12, %11 : vector<16x128xf32>
    %14 = arith.truncf %13 : vector<16x128xf32> to vector<16x128xbf16>
    %c0_13 = arith.constant 0 : index
    %c8 = arith.constant 8 : index
    %15 = vector.load %arg9[%c0_13, %c8] : memref<16x136xbf16, #tpu.memory_space<vmem>>, vector<16x128xbf16>
    tpu.vector_store %arg9[%c0_13, %c8], %14 {strides = array<i32>} : memref<16x136xbf16, #tpu.memory_space<vmem>>, vector<16x128xbf16>,
    %c0_14 = arith.constant 0 : index
    %c4 = arith.constant 4 : index
    %16 = vector.load %arg9[%c0_14, %c4] : memref<16x136xbf16, #tpu.memory_space<vmem>>, vector<16x128xbf16>
    %c0_15 = arith.constant 0 : index
    %c5 = arith.constant 5 : index
    %17 = vector.load %arg9[%c0_15, %c5] : memref<16x136xbf16, #tpu.memory_space<vmem>>, vector<16x128xbf16>
    %c0_16 = arith.constant 0 : index
    %c6 = arith.constant 6 : index
    %18 = vector.load %arg9[%c0_16, %c6] : memref<16x136xbf16, #tpu.memory_space<vmem>>, vector<16x128xbf16>
    %c0_17 = arith.constant 0 : index
    %c7 = arith.constant 7 : index
    %19 = vector.load %arg9[%c0_17, %c7] : memref<16x136xbf16, #tpu.memory_space<vmem>>, vector<16x128xbf16>
    %c0_18 = arith.constant 0 : index
    %c8_19 = arith.constant 8 : index
    %20 = vector.load %arg9[%c0_18, %c8_19] : memref<16x136xbf16, #tpu.memory_space<vmem>>, vector<16x128xbf16>
    %21 = tpu.concatenate %16, %17, %18, %19, %20 in 0 : vector<16x128xbf16>, vector<16x128xbf16>, vector<16x128xbf16>, vector<16x128xbf16>, vector<16x128xbf16> -> vector<80x128xbf16>
    %c0_20 = arith.constant 0 : index
    %c0_21 = arith.constant 0 : index
    %c0_22 = arith.constant 0 : index
    %22 = vector.load %arg6[%c0_20, %c0_21, %c0_22] : memref<2x16x80xbf16, #tpu.memory_space<vmem>>, vector<1x16x80xbf16>
    %23 = vector.shape_cast %22 : vector<1x16x80xbf16> to vector<16x80xbf16>
    %cst_23 = arith.constant dense<0.000000e+00> : vector<16x128xf32>
    %24 = tpu.matmul %23, %21, %cst_23 {dimension_numbers = #tpu.dot_dimension_numbers<[1], [0], [0], [1], [0, 0, 1, 1], [], []>} : vector<16x80xbf16>, vector<80x128xbf16>, vector<16x128xf32> -> vector<16x128xf32>
    %c0_24 = arith.constant 0 : index
    %c0_25 = arith.constant 0 : index
    %c0_26 = arith.constant 0 : index
    %25 = vector.load %arg7[%c0_24, %c0_25, %c0_26] : memref<2x16x1xf32, #tpu.memory_space<vmem>>, vector<1x16x1xf32>
    %26 = vector.shape_cast %25 : vector<1x16x1xf32> to vector<16x1xf32>
    %27 = vector.broadcast %26 : vector<16x1xf32> to vector<16x128xf32>
    %28 = arith.addf %24, %27 : vector<16x128xf32>
    %29 = vector.extract_strided_slice %7 {offsets = [16, 0], sizes = [16, 128], strides = [1, 1]} : vector<64x128xf32> to vector<16x128xf32>
    %30 = vector.extract_strided_slice %7 {offsets = [48, 0], sizes = [16, 128], strides = [1, 1]} : vector<64x128xf32> to vector<16x128xf32>
    %31 = arith.mulf %28, %29 : vector<16x128xf32>
    %32 = arith.addf %31, %30 : vector<16x128xf32>
    %33 = arith.truncf %32 : vector<16x128xf32> to vector<16x128xbf16>
    %c0_27 = arith.constant 0 : index
    %c8_28 = arith.constant 8 : index
    %34 = vector.load %arg9[%c0_27, %c8_28] : memref<16x136xbf16, #tpu.memory_space<vmem>>, vector<16x128xbf16>
    tpu.vector_store %arg9[%c0_27, %c8_28], %33 {strides = array<i32>} : memref<16x136xbf16, #tpu.memory_space<vmem>>, vector<16x128xbf16>,
    %c0_29 = arith.constant 0 : index
    %c0_30 = arith.constant 0 : index
    %35 = vector.load %arg9[%c0_29, %c0_30] : memref<16x136xbf16, #tpu.memory_space<vmem>>, vector<16x128xbf16>
    %c0_31 = arith.constant 0 : index
    %c2 = arith.constant 2 : index
    %36 = vector.load %arg9[%c0_31, %c2] : memref<16x136xbf16, #tpu.memory_space<vmem>>, vector<16x128xbf16>
    %c0_32 = arith.constant 0 : index
    %c4_33 = arith.constant 4 : index
    %37 = vector.load %arg9[%c0_32, %c4_33] : memref<16x136xbf16, #tpu.memory_space<vmem>>, vector<16x128xbf16>
    %c0_34 = arith.constant 0 : index
    %c6_35 = arith.constant 6 : index
    %38 = vector.load %arg9[%c0_34, %c6_35] : memref<16x136xbf16, #tpu.memory_space<vmem>>, vector<16x128xbf16>
    %c0_36 = arith.constant 0 : index
    %c8_37 = arith.constant 8 : index
    %39 = vector.load %arg9[%c0_36, %c8_37] : memref<16x136xbf16, #tpu.memory_space<vmem>>, vector<16x128xbf16>
    %40 = tpu.concatenate %35, %36, %37, %38, %39 in 0 : vector<16x128xbf16>, vector<16x128xbf16>, vector<16x128xbf16>, vector<16x128xbf16>, vector<16x128xbf16> -> vector<80x128xbf16>
    %c1 = arith.constant 1 : index
    %c0_38 = arith.constant 0 : index
    %c0_39 = arith.constant 0 : index
    %41 = vector.load %arg6[%c1, %c0_38, %c0_39] : memref<2x16x80xbf16, #tpu.memory_space<vmem>>, vector<1x16x80xbf16>
    %42 = vector.shape_cast %41 : vector<1x16x80xbf16> to vector<16x80xbf16>
    %cst_40 = arith.constant dense<0.000000e+00> : vector<16x128xf32>
    %43 = tpu.matmul %42, %40, %cst_40 {dimension_numbers = #tpu.dot_dimension_numbers<[1], [0], [0], [1], [0, 0, 1, 1], [], []>} : vector<16x80xbf16>, vector<80x128xbf16>, vector<16x128xf32> -> vector<16x128xf32>
    %c1_41 = arith.constant 1 : index
    %c0_42 = arith.constant 0 : index
    %c0_43 = arith.constant 0 : index
    %44 = vector.load %arg7[%c1_41, %c0_42, %c0_43] : memref<2x16x1xf32, #tpu.memory_space<vmem>>, vector<1x16x1xf32>
    %45 = vector.shape_cast %44 : vector<1x16x1xf32> to vector<16x1xf32>
    %46 = vector.broadcast %45 : vector<16x1xf32> to vector<16x128xf32>
    %47 = arith.addf %43, %46 : vector<16x128xf32>
    %c0_44 = arith.constant 0 : index
    %c0_45 = arith.constant 0 : index
    %c0_46 = arith.constant 0 : index
    %48 = vector.load %arg8[%c0_44, %c0_45, %c0_46] : memref<1x16x128xf32, #tpu.memory_space<vmem>>, vector<1x16x128xf32>
    %49 = vector.shape_cast %48 : vector<1x16x128xf32> to vector<16x128xf32>
    %50 = vector.shape_cast %47 : vector<16x128xf32> to vector<1x16x128xf32>
    tpu.vector_store %arg8[%c0_44, %c0_45, %c0_46], %50 {strides = array<i32>} : memref<1x16x128xf32, #tpu.memory_space<vmem>>, vector<1x16x128xf32>,
    return
  }
  func.func @transform_0(%arg0: i32, %arg1: i32) -> (i32, i32, i32) {
    %c0_i32 = arith.constant 0 : i32
    %c0_i32_0 = arith.constant 0 : i32
    %c0_i32_1 = arith.constant 0 : i32
    return %arg0, %c0_i32, %c0_i32_0 : i32, i32, i32
  }
  func.func @transform_1(%arg0: i32, %arg1: i32) -> (i32, i32, i32) {
    %c0_i32 = arith.constant 0 : i32
    %c0_i32_0 = arith.constant 0 : i32
    return %arg0, %c0_i32, %arg1 : i32, i32, i32
  }
  func.func @transform_2(%arg0: i32, %arg1: i32) -> (i32, i32) {
    %c0_i32 = arith.constant 0 : i32
    %c0_i32_0 = arith.constant 0 : i32
    return %c0_i32, %arg1 : i32, i32
  }
  func.func @transform_3(%arg0: i32, %arg1: i32) -> (i32, i32) {
    %c0_i32 = arith.constant 0 : i32
    %c0_i32_0 = arith.constant 0 : i32
    %c0_i32_1 = arith.constant 0 : i32
    return %c0_i32, %c0_i32_0 : i32, i32
  }
  func.func @transform_4(%arg0: i32, %arg1: i32) -> (i32, i32, i32) {
    %c0_i32 = arith.constant 0 : i32
    %c0_i32_0 = arith.constant 0 : i32
    %c0_i32_1 = arith.constant 0 : i32
    %c0_i32_2 = arith.constant 0 : i32
    return %c0_i32, %c0_i32_0, %c0_i32_1 : i32, i32, i32
  }
  func.func @transform_5(%arg0: i32, %arg1: i32) -> (i32, i32, i32) {
    %c0_i32 = arith.constant 0 : i32
    %c0_i32_0 = arith.constant 0 : i32
    %c0_i32_1 = arith.constant 0 : i32
    %c0_i32_2 = arith.constant 0 : i32
    return %c0_i32, %c0_i32_0, %c0_i32_1 : i32, i32, i32
  }
  func.func @transform_6(%arg0: i32, %arg1: i32) -> (i32, i32, i32) {
    %c0_i32 = arith.constant 0 : i32
    %c0_i32_0 = arith.constant 0 : i32
    return %arg0, %c0_i32, %arg1 : i32, i32, i32
  }
}

module attributes {stable_mosaic.version = 11 : i64} {
  func.func @_block_kernel(%arg0: i32, %arg1: i32, %arg2: memref<1x33x8xf32, #tpu.memory_space<vmem>>, %arg3: memref<1x8x128xf32, #tpu.memory_space<vmem>>, %arg4: memref<8x128xf32, #tpu.memory_space<vmem>>, %arg5: memref<32x33xf32, #tpu.memory_space<vmem>>, %arg6: memref<2x8x40xbf16, #tpu.memory_space<vmem>>, %arg7: memref<2x8x1xf32, #tpu.memory_space<vmem>>, %arg8: memref<1x8x128xf32, #tpu.memory_space<vmem>>, %arg9: memref<8x136xbf16, #tpu.memory_space<vmem>>, %arg10: memref<8x4xbf16, #tpu.memory_space<vmem>>, %arg11: memref<8x8xbf16, #tpu.memory_space<vmem>>) attributes {dimension_semantics = [#tpu.dimension_semantics<parallel>, #tpu.dimension_semantics<arbitrary>], iteration_bounds = array<i64: 2, 2>, scalar_prefetch = 0 : i64, scratch_operands = 3 : i64, tpu.core_type = #tpu.core_type<tc>, window_params = [{transform_indices = @transform_0, window_bounds = array<i64: 1, 33, 8>}, {transform_indices = @transform_1, window_bounds = array<i64: 1, 8, 128>}, {transform_indices = @transform_2, window_bounds = array<i64: 8, 128>}, {pipeline_mode = #tpu.pipeline_mode<synchronous>, transform_indices = @transform_3, window_bounds = array<i64: 32, 33>}, {pipeline_mode = #tpu.pipeline_mode<synchronous>, transform_indices = @transform_4, window_bounds = array<i64: 2, 8, 40>}, {pipeline_mode = #tpu.pipeline_mode<synchronous>, transform_indices = @transform_5, window_bounds = array<i64: 2, 8, 1>}, {transform_indices = @transform_6, window_bounds = array<i64: 1, 8, 128>}]} {
    %c0_i32 = arith.constant 0 : i32
    %0 = arith.cmpi eq, %arg1, %c0_i32 : i32
    %1 = arith.extui %0 : i1 to i32
    %c0_i32_0 = arith.constant 0 : i32
    %2 = arith.cmpi ne, %1, %c0_i32_0 : i32
    scf.if %2 {
      %cst_57 = arith.constant 0.000000e+00 : bf16
      %60 = vector.broadcast %cst_57 : bf16 to vector<8x4xbf16>
      %c0_58 = arith.constant 0 : index
      %c0_59 = arith.constant 0 : index
      %61 = vector.load %arg10[%c0_58, %c0_59] : memref<8x4xbf16, #tpu.memory_space<vmem>>, vector<8x4xbf16>
      tpu.vector_store %arg10[%c0_58, %c0_59], %60 {strides = array<i32>} : memref<8x4xbf16, #tpu.memory_space<vmem>>, vector<8x4xbf16>,
      %cst_60 = arith.constant 0.000000e+00 : bf16
      %62 = vector.broadcast %cst_60 : bf16 to vector<8x8xbf16>
      %c0_61 = arith.constant 0 : index
      %c0_62 = arith.constant 0 : index
      %63 = vector.load %arg11[%c0_61, %c0_62] : memref<8x8xbf16, #tpu.memory_space<vmem>>, vector<8x8xbf16>
      tpu.vector_store %arg11[%c0_61, %c0_62], %62 {strides = array<i32>} : memref<8x8xbf16, #tpu.memory_space<vmem>>, vector<8x8xbf16>,
    } else {
    }
    %c0 = arith.constant 0 : index
    %c0_1 = arith.constant 0 : index
    %c0_2 = arith.constant 0 : index
    %3 = vector.load %arg2[%c0, %c0_1, %c0_2] : memref<1x33x8xf32, #tpu.memory_space<vmem>>, vector<1x33x8xf32>
    %4 = vector.shape_cast %3 : vector<1x33x8xf32> to vector<33x8xf32>
    %c0_3 = arith.constant 0 : index
    %c0_4 = arith.constant 0 : index
    %5 = vector.load %arg5[%c0_3, %c0_4] : memref<32x33xf32, #tpu.memory_space<vmem>>, vector<32x33xf32>
    %cst = arith.constant dense<0.000000e+00> : vector<32x8xf32>
    %6 = tpu.matmul %5, %4, %cst {dimension_numbers = #tpu.dot_dimension_numbers<[1], [0], [0], [1], [0, 0, 1, 1], [], []>} : vector<32x33xf32>, vector<33x8xf32>, vector<32x8xf32> -> vector<32x8xf32>
    %c0_5 = arith.constant 0 : index
    %c0_6 = arith.constant 0 : index
    %7 = vector.load %arg4[%c0_5, %c0_6] : memref<8x128xf32, #tpu.memory_space<vmem>>, vector<8x128xf32>
    %cst_7 = arith.constant dense<0.000000e+00> : vector<32x128xf32>
    %8 = tpu.matmul %6, %7, %cst_7 {dimension_numbers = #tpu.dot_dimension_numbers<[1], [0], [0], [1], [0, 0, 1, 1], [], []>} : vector<32x8xf32>, vector<8x128xf32>, vector<32x128xf32> -> vector<32x128xf32>
    %c0_8 = arith.constant 0 : index
    %c0_9 = arith.constant 0 : index
    %c0_10 = arith.constant 0 : index
    %9 = vector.load %arg3[%c0_8, %c0_9, %c0_10] : memref<1x8x128xf32, #tpu.memory_space<vmem>>, vector<1x8x128xf32>
    %10 = vector.shape_cast %9 : vector<1x8x128xf32> to vector<8x128xf32>
    %11 = vector.extract_strided_slice %8 {offsets = [0, 0], sizes = [8, 128], strides = [1, 1]} : vector<32x128xf32> to vector<8x128xf32>
    %12 = vector.extract_strided_slice %8 {offsets = [16, 0], sizes = [8, 128], strides = [1, 1]} : vector<32x128xf32> to vector<8x128xf32>
    %13 = arith.mulf %10, %11 : vector<8x128xf32>
    %14 = arith.addf %13, %12 : vector<8x128xf32>
    %15 = arith.truncf %14 : vector<8x128xf32> to vector<8x128xbf16>
    %c0_11 = arith.constant 0 : index
    %c0_12 = arith.constant 0 : index
    %16 = vector.load %arg10[%c0_11, %c0_12] : memref<8x4xbf16, #tpu.memory_space<vmem>>, vector<8x4xbf16>
    %c0_13 = arith.constant 0 : index
    %c4 = arith.constant 4 : index
    %17 = vector.load %arg9[%c0_13, %c4] : memref<8x136xbf16, #tpu.memory_space<vmem>>, vector<8x4xbf16>
    tpu.vector_store %arg9[%c0_13, %c4], %16 {strides = array<i32>} : memref<8x136xbf16, #tpu.memory_space<vmem>>, vector<8x4xbf16>,
    %18 = vector.extract_strided_slice %15 {offsets = [0, 124], sizes = [8, 4], strides = [1, 1]} : vector<8x128xbf16> to vector<8x4xbf16>
    %c0_14 = arith.constant 0 : index
    %c0_15 = arith.constant 0 : index
    %19 = vector.load %arg10[%c0_14, %c0_15] : memref<8x4xbf16, #tpu.memory_space<vmem>>, vector<8x4xbf16>
    tpu.vector_store %arg10[%c0_14, %c0_15], %18 {strides = array<i32>} : memref<8x4xbf16, #tpu.memory_space<vmem>>, vector<8x4xbf16>,
    %c0_16 = arith.constant 0 : index
    %c8 = arith.constant 8 : index
    %20 = vector.load %arg9[%c0_16, %c8] : memref<8x136xbf16, #tpu.memory_space<vmem>>, vector<8x128xbf16>
    tpu.vector_store %arg9[%c0_16, %c8], %15 {strides = array<i32>} : memref<8x136xbf16, #tpu.memory_space<vmem>>, vector<8x128xbf16>,
    %c0_17 = arith.constant 0 : index
    %c4_18 = arith.constant 4 : index
    %21 = vector.load %arg9[%c0_17, %c4_18] : memref<8x136xbf16, #tpu.memory_space<vmem>>, vector<8x128xbf16>
    %c0_19 = arith.constant 0 : index
    %c5 = arith.constant 5 : index
    %22 = vector.load %arg9[%c0_19, %c5] : memref<8x136xbf16, #tpu.memory_space<vmem>>, vector<8x128xbf16>
    %c0_20 = arith.constant 0 : index
    %c6 = arith.constant 6 : index
    %23 = vector.load %arg9[%c0_20, %c6] : memref<8x136xbf16, #tpu.memory_space<vmem>>, vector<8x128xbf16>
    %c0_21 = arith.constant 0 : index
    %c7 = arith.constant 7 : index
    %24 = vector.load %arg9[%c0_21, %c7] : memref<8x136xbf16, #tpu.memory_space<vmem>>, vector<8x128xbf16>
    %c0_22 = arith.constant 0 : index
    %c8_23 = arith.constant 8 : index
    %25 = vector.load %arg9[%c0_22, %c8_23] : memref<8x136xbf16, #tpu.memory_space<vmem>>, vector<8x128xbf16>
    %26 = tpu.concatenate %21, %22, %23, %24, %25 in 0 : vector<8x128xbf16>, vector<8x128xbf16>, vector<8x128xbf16>, vector<8x128xbf16>, vector<8x128xbf16> -> vector<40x128xbf16>
    %c0_24 = arith.constant 0 : index
    %c0_25 = arith.constant 0 : index
    %c0_26 = arith.constant 0 : index
    %27 = vector.load %arg6[%c0_24, %c0_25, %c0_26] : memref<2x8x40xbf16, #tpu.memory_space<vmem>>, vector<1x8x40xbf16>
    %28 = vector.shape_cast %27 : vector<1x8x40xbf16> to vector<8x40xbf16>
    %cst_27 = arith.constant dense<0.000000e+00> : vector<8x128xf32>
    %29 = tpu.matmul %28, %26, %cst_27 {dimension_numbers = #tpu.dot_dimension_numbers<[1], [0], [0], [1], [0, 0, 1, 1], [], []>} : vector<8x40xbf16>, vector<40x128xbf16>, vector<8x128xf32> -> vector<8x128xf32>
    %c0_28 = arith.constant 0 : index
    %c0_29 = arith.constant 0 : index
    %c0_30 = arith.constant 0 : index
    %30 = vector.load %arg7[%c0_28, %c0_29, %c0_30] : memref<2x8x1xf32, #tpu.memory_space<vmem>>, vector<1x8x1xf32>
    %31 = vector.shape_cast %30 : vector<1x8x1xf32> to vector<8x1xf32>
    %32 = vector.broadcast %31 : vector<8x1xf32> to vector<8x128xf32>
    %33 = arith.addf %29, %32 : vector<8x128xf32>
    %34 = vector.extract_strided_slice %8 {offsets = [8, 0], sizes = [8, 128], strides = [1, 1]} : vector<32x128xf32> to vector<8x128xf32>
    %35 = vector.extract_strided_slice %8 {offsets = [24, 0], sizes = [8, 128], strides = [1, 1]} : vector<32x128xf32> to vector<8x128xf32>
    %36 = arith.mulf %33, %34 : vector<8x128xf32>
    %37 = arith.addf %36, %35 : vector<8x128xf32>
    %38 = arith.truncf %37 : vector<8x128xf32> to vector<8x128xbf16>
    %c0_31 = arith.constant 0 : index
    %c0_32 = arith.constant 0 : index
    %39 = vector.load %arg11[%c0_31, %c0_32] : memref<8x8xbf16, #tpu.memory_space<vmem>>, vector<8x8xbf16>
    %c0_33 = arith.constant 0 : index
    %c0_34 = arith.constant 0 : index
    %40 = vector.load %arg9[%c0_33, %c0_34] : memref<8x136xbf16, #tpu.memory_space<vmem>>, vector<8x8xbf16>
    tpu.vector_store %arg9[%c0_33, %c0_34], %39 {strides = array<i32>} : memref<8x136xbf16, #tpu.memory_space<vmem>>, vector<8x8xbf16>,
    %41 = vector.extract_strided_slice %38 {offsets = [0, 120], sizes = [8, 8], strides = [1, 1]} : vector<8x128xbf16> to vector<8x8xbf16>
    %c0_35 = arith.constant 0 : index
    %c0_36 = arith.constant 0 : index
    %42 = vector.load %arg11[%c0_35, %c0_36] : memref<8x8xbf16, #tpu.memory_space<vmem>>, vector<8x8xbf16>
    tpu.vector_store %arg11[%c0_35, %c0_36], %41 {strides = array<i32>} : memref<8x8xbf16, #tpu.memory_space<vmem>>, vector<8x8xbf16>,
    %c0_37 = arith.constant 0 : index
    %c8_38 = arith.constant 8 : index
    %43 = vector.load %arg9[%c0_37, %c8_38] : memref<8x136xbf16, #tpu.memory_space<vmem>>, vector<8x128xbf16>
    tpu.vector_store %arg9[%c0_37, %c8_38], %38 {strides = array<i32>} : memref<8x136xbf16, #tpu.memory_space<vmem>>, vector<8x128xbf16>,
    %c0_39 = arith.constant 0 : index
    %c0_40 = arith.constant 0 : index
    %44 = vector.load %arg9[%c0_39, %c0_40] : memref<8x136xbf16, #tpu.memory_space<vmem>>, vector<8x128xbf16>
    %c0_41 = arith.constant 0 : index
    %c2 = arith.constant 2 : index
    %45 = vector.load %arg9[%c0_41, %c2] : memref<8x136xbf16, #tpu.memory_space<vmem>>, vector<8x128xbf16>
    %c0_42 = arith.constant 0 : index
    %c4_43 = arith.constant 4 : index
    %46 = vector.load %arg9[%c0_42, %c4_43] : memref<8x136xbf16, #tpu.memory_space<vmem>>, vector<8x128xbf16>
    %c0_44 = arith.constant 0 : index
    %c6_45 = arith.constant 6 : index
    %47 = vector.load %arg9[%c0_44, %c6_45] : memref<8x136xbf16, #tpu.memory_space<vmem>>, vector<8x128xbf16>
    %c0_46 = arith.constant 0 : index
    %c8_47 = arith.constant 8 : index
    %48 = vector.load %arg9[%c0_46, %c8_47] : memref<8x136xbf16, #tpu.memory_space<vmem>>, vector<8x128xbf16>
    %49 = tpu.concatenate %44, %45, %46, %47, %48 in 0 : vector<8x128xbf16>, vector<8x128xbf16>, vector<8x128xbf16>, vector<8x128xbf16>, vector<8x128xbf16> -> vector<40x128xbf16>
    %c1 = arith.constant 1 : index
    %c0_48 = arith.constant 0 : index
    %c0_49 = arith.constant 0 : index
    %50 = vector.load %arg6[%c1, %c0_48, %c0_49] : memref<2x8x40xbf16, #tpu.memory_space<vmem>>, vector<1x8x40xbf16>
    %51 = vector.shape_cast %50 : vector<1x8x40xbf16> to vector<8x40xbf16>
    %cst_50 = arith.constant dense<0.000000e+00> : vector<8x128xf32>
    %52 = tpu.matmul %51, %49, %cst_50 {dimension_numbers = #tpu.dot_dimension_numbers<[1], [0], [0], [1], [0, 0, 1, 1], [], []>} : vector<8x40xbf16>, vector<40x128xbf16>, vector<8x128xf32> -> vector<8x128xf32>
    %c1_51 = arith.constant 1 : index
    %c0_52 = arith.constant 0 : index
    %c0_53 = arith.constant 0 : index
    %53 = vector.load %arg7[%c1_51, %c0_52, %c0_53] : memref<2x8x1xf32, #tpu.memory_space<vmem>>, vector<1x8x1xf32>
    %54 = vector.shape_cast %53 : vector<1x8x1xf32> to vector<8x1xf32>
    %55 = vector.broadcast %54 : vector<8x1xf32> to vector<8x128xf32>
    %56 = arith.addf %52, %55 : vector<8x128xf32>
    %c0_54 = arith.constant 0 : index
    %c0_55 = arith.constant 0 : index
    %c0_56 = arith.constant 0 : index
    %57 = vector.load %arg8[%c0_54, %c0_55, %c0_56] : memref<1x8x128xf32, #tpu.memory_space<vmem>>, vector<1x8x128xf32>
    %58 = vector.shape_cast %57 : vector<1x8x128xf32> to vector<8x128xf32>
    %59 = vector.shape_cast %56 : vector<8x128xf32> to vector<1x8x128xf32>
    tpu.vector_store %arg8[%c0_54, %c0_55, %c0_56], %59 {strides = array<i32>} : memref<1x8x128xf32, #tpu.memory_space<vmem>>, vector<1x8x128xf32>,
    return
  }
  func.func @transform_0(%arg0: i32, %arg1: i32) -> (i32, i32, i32) {
    %c0_i32 = arith.constant 0 : i32
    %c0_i32_0 = arith.constant 0 : i32
    %c0_i32_1 = arith.constant 0 : i32
    return %arg0, %c0_i32, %c0_i32_0 : i32, i32, i32
  }
  func.func @transform_1(%arg0: i32, %arg1: i32) -> (i32, i32, i32) {
    %c0_i32 = arith.constant 0 : i32
    %c0_i32_0 = arith.constant 0 : i32
    return %arg0, %c0_i32, %arg1 : i32, i32, i32
  }
  func.func @transform_2(%arg0: i32, %arg1: i32) -> (i32, i32) {
    %c0_i32 = arith.constant 0 : i32
    %c0_i32_0 = arith.constant 0 : i32
    return %c0_i32, %arg1 : i32, i32
  }
  func.func @transform_3(%arg0: i32, %arg1: i32) -> (i32, i32) {
    %c0_i32 = arith.constant 0 : i32
    %c0_i32_0 = arith.constant 0 : i32
    %c0_i32_1 = arith.constant 0 : i32
    return %c0_i32, %c0_i32_0 : i32, i32
  }
  func.func @transform_4(%arg0: i32, %arg1: i32) -> (i32, i32, i32) {
    %c0_i32 = arith.constant 0 : i32
    %c0_i32_0 = arith.constant 0 : i32
    %c0_i32_1 = arith.constant 0 : i32
    %c0_i32_2 = arith.constant 0 : i32
    return %c0_i32, %c0_i32_0, %c0_i32_1 : i32, i32, i32
  }
  func.func @transform_5(%arg0: i32, %arg1: i32) -> (i32, i32, i32) {
    %c0_i32 = arith.constant 0 : i32
    %c0_i32_0 = arith.constant 0 : i32
    %c0_i32_1 = arith.constant 0 : i32
    %c0_i32_2 = arith.constant 0 : i32
    return %c0_i32, %c0_i32_0, %c0_i32_1 : i32, i32, i32
  }
  func.func @transform_6(%arg0: i32, %arg1: i32) -> (i32, i32, i32) {
    %c0_i32 = arith.constant 0 : i32
    %c0_i32_0 = arith.constant 0 : i32
    return %arg0, %c0_i32, %arg1 : i32, i32, i32
  }
}

module attributes {stable_mosaic.version = 11 : i64} {
  func.func @_tapconv_kernel(%arg0: i32, %arg1: memref<1x8x262xf32, #tpu.memory_space<vmem>>, %arg2: memref<1x56xbf16, #tpu.memory_space<vmem>>, %arg3: memref<1x1xf32, #tpu.memory_space<vmem>>, %arg4: memref<1x1x256xf32, #tpu.memory_space<vmem>>) attributes {dimension_semantics = [#tpu.dimension_semantics<parallel>], iteration_bounds = array<i64: 2>, scalar_prefetch = 0 : i64, scratch_operands = 0 : i64, tpu.core_type = #tpu.core_type<tc>, window_params = [{transform_indices = @transform_0, window_bounds = array<i64: 1, 8, 262>}, {pipeline_mode = #tpu.pipeline_mode<synchronous>, transform_indices = @transform_1, window_bounds = array<i64: 1, 56>}, {pipeline_mode = #tpu.pipeline_mode<synchronous>, transform_indices = @transform_2, window_bounds = array<i64: 1, 1>}, {transform_indices = @transform_3, window_bounds = array<i64: 1, 1, 256>}]} {
    %c0 = arith.constant 0 : index
    %c0_0 = arith.constant 0 : index
    %c0_1 = arith.constant 0 : index
    %0 = vector.load %arg1[%c0, %c0_0, %c0_1] : memref<1x8x262xf32, #tpu.memory_space<vmem>>, vector<1x8x256xf32>
    %1 = vector.shape_cast %0 : vector<1x8x256xf32> to vector<8x256xf32>
    %2 = arith.truncf %1 : vector<8x256xf32> to vector<8x256xbf16>
    %c0_2 = arith.constant 0 : index
    %c0_3 = arith.constant 0 : index
    %c1 = arith.constant 1 : index
    %3 = vector.load %arg1[%c0_2, %c0_3, %c1] : memref<1x8x262xf32, #tpu.memory_space<vmem>>, vector<1x8x256xf32>
    %4 = vector.shape_cast %3 : vector<1x8x256xf32> to vector<8x256xf32>
    %5 = arith.truncf %4 : vector<8x256xf32> to vector<8x256xbf16>
    %c0_4 = arith.constant 0 : index
    %c0_5 = arith.constant 0 : index
    %c2 = arith.constant 2 : index
    %6 = vector.load %arg1[%c0_4, %c0_5, %c2] : memref<1x8x262xf32, #tpu.memory_space<vmem>>, vector<1x8x256xf32>
    %7 = vector.shape_cast %6 : vector<1x8x256xf32> to vector<8x256xf32>
    %8 = arith.truncf %7 : vector<8x256xf32> to vector<8x256xbf16>
    %c0_6 = arith.constant 0 : index
    %c0_7 = arith.constant 0 : index
    %c3 = arith.constant 3 : index
    %9 = vector.load %arg1[%c0_6, %c0_7, %c3] : memref<1x8x262xf32, #tpu.memory_space<vmem>>, vector<1x8x256xf32>
    %10 = vector.shape_cast %9 : vector<1x8x256xf32> to vector<8x256xf32>
    %11 = arith.truncf %10 : vector<8x256xf32> to vector<8x256xbf16>
    %c0_8 = arith.constant 0 : index
    %c0_9 = arith.constant 0 : index
    %c4 = arith.constant 4 : index
    %12 = vector.load %arg1[%c0_8, %c0_9, %c4] : memref<1x8x262xf32, #tpu.memory_space<vmem>>, vector<1x8x256xf32>
    %13 = vector.shape_cast %12 : vector<1x8x256xf32> to vector<8x256xf32>
    %14 = arith.truncf %13 : vector<8x256xf32> to vector<8x256xbf16>
    %c0_10 = arith.constant 0 : index
    %c0_11 = arith.constant 0 : index
    %c5 = arith.constant 5 : index
    %15 = vector.load %arg1[%c0_10, %c0_11, %c5] : memref<1x8x262xf32, #tpu.memory_space<vmem>>, vector<1x8x256xf32>
    %16 = vector.shape_cast %15 : vector<1x8x256xf32> to vector<8x256xf32>
    %17 = arith.truncf %16 : vector<8x256xf32> to vector<8x256xbf16>
    %c0_12 = arith.constant 0 : index
    %c0_13 = arith.constant 0 : index
    %c6 = arith.constant 6 : index
    %18 = vector.load %arg1[%c0_12, %c0_13, %c6] : memref<1x8x262xf32, #tpu.memory_space<vmem>>, vector<1x8x256xf32>
    %19 = vector.shape_cast %18 : vector<1x8x256xf32> to vector<8x256xf32>
    %20 = arith.truncf %19 : vector<8x256xf32> to vector<8x256xbf16>
    %21 = tpu.concatenate %2, %5, %8, %11, %14, %17, %20 in 0 : vector<8x256xbf16>, vector<8x256xbf16>, vector<8x256xbf16>, vector<8x256xbf16>, vector<8x256xbf16>, vector<8x256xbf16>, vector<8x256xbf16> -> vector<56x256xbf16>
    %c0_14 = arith.constant 0 : index
    %c0_15 = arith.constant 0 : index
    %22 = vector.load %arg2[%c0_14, %c0_15] : memref<1x56xbf16, #tpu.memory_space<vmem>>, vector<1x56xbf16>
    %cst = arith.constant dense<0.000000e+00> : vector<1x256xf32>
    %23 = tpu.matmul %22, %21, %cst {dimension_numbers = #tpu.dot_dimension_numbers<[1], [0], [0], [1], [0, 0, 1, 1], [], []>} : vector<1x56xbf16>, vector<56x256xbf16>, vector<1x256xf32> -> vector<1x256xf32>
    %c0_16 = arith.constant 0 : index
    %c0_17 = arith.constant 0 : index
    %24 = vector.load %arg3[%c0_16, %c0_17] : memref<1x1xf32, #tpu.memory_space<vmem>>, vector<1x1xf32>
    %25 = vector.broadcast %24 : vector<1x1xf32> to vector<1x256xf32>
    %26 = arith.addf %23, %25 : vector<1x256xf32>
    %27 = math.tanh %26 : vector<1x256xf32>
    %c0_18 = arith.constant 0 : index
    %c0_19 = arith.constant 0 : index
    %c0_20 = arith.constant 0 : index
    %28 = vector.load %arg4[%c0_18, %c0_19, %c0_20] : memref<1x1x256xf32, #tpu.memory_space<vmem>>, vector<1x1x256xf32>
    %29 = vector.shape_cast %28 : vector<1x1x256xf32> to vector<1x256xf32>
    %30 = vector.shape_cast %27 : vector<1x256xf32> to vector<1x1x256xf32>
    tpu.vector_store %arg4[%c0_18, %c0_19, %c0_20], %30 {strides = array<i32>} : memref<1x1x256xf32, #tpu.memory_space<vmem>>, vector<1x1x256xf32>,
    return
  }
  func.func @transform_0(%arg0: i32) -> (i32, i32, i32) {
    %c0_i32 = arith.constant 0 : i32
    %c0_i32_0 = arith.constant 0 : i32
    %c0_i32_1 = arith.constant 0 : i32
    return %arg0, %c0_i32, %c0_i32_0 : i32, i32, i32
  }
  func.func @transform_1(%arg0: i32) -> (i32, i32) {
    %c0_i32 = arith.constant 0 : i32
    %c0_i32_0 = arith.constant 0 : i32
    %c0_i32_1 = arith.constant 0 : i32
    return %c0_i32, %c0_i32_0 : i32, i32
  }
  func.func @transform_2(%arg0: i32) -> (i32, i32) {
    %c0_i32 = arith.constant 0 : i32
    %c0_i32_0 = arith.constant 0 : i32
    %c0_i32_1 = arith.constant 0 : i32
    return %c0_i32, %c0_i32_0 : i32, i32
  }
  func.func @transform_3(%arg0: i32) -> (i32, i32, i32) {
    %c0_i32 = arith.constant 0 : i32
    %c0_i32_0 = arith.constant 0 : i32
    %c0_i32_1 = arith.constant 0 : i32
    return %arg0, %c0_i32, %c0_i32_0 : i32, i32, i32
  }
}

</mosaic_0001>

<llo_original>
// kernel: filter_forward.9
$region0: #{filter_forward.9}
  #allocation0 [shape = 'u32[]', space=smem, size = 0x4, offset = 0x4, fixed_abs, tag = 'smem constant byte address 0x4 - core index']
  #allocation1 [shape = 'u32[144,128]{1,0:T(1,128)}', space=vmem, size = 0x12000, scoped, tag = 'internal scratch']
  %s0 = inlined_call_operand.vmem [shape: bf16[16,16], index: 0, kind: input, shape index: {}]
  %s1 = inlined_call_operand.vmem [shape: f32[16,256], index: 1, kind: input, shape index: {}]
  %s2 = inlined_call_operand.vmem [shape: f32[16,1], index: 2, kind: input, shape index: {}]
  %s3 = inlined_call_operand.vmem [shape: f32[16,256], index: 3, kind: output, shape index: {}]
  %s4 = sld [smem:[#allocation0]]
  $region22: #{filter_forward.9} parent=0
    _
  %s6 = ssub.s32 1, %s4
  %s7 = scalar_select 0, %s6, %s4
  // Predicated region
  $region2: #{filter_forward.9} parent=0 // pred_check
    _
  $region3: #{filter_forward.9} parent=0 // pred_check_branch
    %9 = sbr.rel (0) target = $region5
  $region4: #{filter_forward.9} parent=0 // pred_region
    _
  $region5: #{filter_forward.9} parent=0 // pred_fallthru
    _
  // Predicated region
  $region6: #{filter_forward.9} parent=0 // pred_check
    _
  $region7: #{filter_forward.9} parent=0 // pred_check_branch
    %11 = sbr.rel (0) target = $region9
  $region8: #{filter_forward.9} parent=0 // pred_region
    _
  $region9: #{filter_forward.9} parent=0 // pred_fallthru
    _
  // Predicated region
  $region10: #{filter_forward.9} parent=0 // pred_check
    _
  $region11: #{filter_forward.9} parent=0 // pred_check_branch
    %13 = sbr.rel (0) target = $region13
  $region12: #{filter_forward.9} parent=0 // pred_region
    _
  $region13: #{filter_forward.9} parent=0 // pred_fallthru
    _
  %v15 = vld [vmem:[%s0] sm:$0xf]
  %v16 = vld [vmem:[%s0 + $0x4] sm:$0xf]
  %v17 = vld [vmem:[%s1] sm:$0xff]
  %v18 = vld [vmem:[%s1 + $0x8] sm:$0xff]
  %v19 = vld [vmem:[%s1 + $0x10] sm:$0xff]
  %v20 = vld [vmem:[%s1 + $0x18] sm:$0xff]
  %v21 = vpack.c.bf16 %v19, %v17
  %v22 = vpack.c.bf16 %v20, %v18
  %v23 = vld [vmem:[%s2] sm:$0xff]
  %v24 = vld [vmem:[%s2 + $0x8] sm:$0xff]
  %26 = vset.pattern.permute.xlu0 0
  %27 = vperm.xlu0 %26, %v23
  %v28 = vpop.permute.xlu0 %27
  %31 = vset.pattern.permute.xlu0 0
  %32 = vperm.xlu0 %31, %v24
  %v33 = vpop.permute.xlu0 %32
  %v37 = vunpack.c.l.b16 %v15
  %v38 = vunpack.c.l.b16 %v16
  %v39 = vpack.c.b16 %v38, %v37
  %vm40 = vcmask 130048
  %v42 = vsel %vm40, %v39, 0
  %44 = vmatprep.subr.bf16.mxu0 %v22
  %45 = vmatpush1.bf16.msra.mxu0 %v21
  %46 = vmatprep.subr.bf16.mxu0 0
  %47 = vmatpush1.bf16.msra.mxu0 0
  %48 = vmatprep.subr.bf16.mxu0 0
  %49 = vmatpush1.bf16.msra.mxu0 0
  %50 = vmatprep.subr.bf16.mxu0 0
  %51 = vmatpush1.bf16.msra.mxu0 0
  %52 = vmatprep.subr.bf16.mxu0 0
  %53 = vmatpush1.bf16.msra.mxu0 0
  %54 = vmatprep.subr.bf16.mxu0 0
  %55 = vmatpush1.bf16.msra.mxu0 0
  %56 = vmatprep.subr.bf16.mxu0 0
  %57 = vmatpush1.bf16.msra.mxu0 0
  %58 = vmatprep.subr.bf16.mxu0 0
  %59 = vmatpush1.bf16.msra.mxu0 0
  %60 = vmatprep.subr.bf16.mxu0 0
  %61 = vmatpush1.bf16.msra.mxu0 0
  %62 = vmatprep.subr.bf16.mxu0 0
  %63 = vmatpush1.bf16.msra.mxu0 0
  %64 = vmatprep.subr.bf16.mxu0 0
  %65 = vmatpush1.bf16.msra.mxu0 0
  %66 = vmatprep.subr.bf16.mxu0 0
  %67 = vmatpush1.bf16.msra.mxu0 0
  %68 = vmatprep.subr.bf16.mxu0 0
  %69 = vmatpush1.bf16.msra.mxu0 0
  %70 = vmatprep.subr.bf16.mxu0 0
  %71 = vmatpush1.bf16.msra.mxu0 0
  %72 = vmatprep.subr.bf16.mxu0 0
  %73 = vmatpush1.bf16.msra.mxu0 0
  %74 = vmatprep.subr.bf16.mxu0 0
  %75 = vmatpush1.bf16.msra.mxu0 0
  %76 = vmatprep.mubr.bf16.mxu0 0
  %77 = vmatmul.mubr.bf16.gmra.mrb[0].mxu0 %v42
  %v78 = vpop.f32.mrb[0].mxu0
  %v79 = vadd.f32 %v28, %v78
  %v80 = vpop.f32.mrb[0].mxu0
  %v81 = vadd.f32 %v28, %v80
  %v82 = vpop.f32.mrb[0].mxu0
  %v83 = vadd.f32 %v33, %v82
  %v84 = vpop.f32.mrb[0].mxu0
  %v85 = vadd.f32 %v33, %v84
  %86 = vdwg.mxu0
  %87 = vst [vmem:[%s3] sm:$0xff] %v79
  %88 = vst [vmem:[%s3 + $0x8] sm:$0xff] %v81
  %89 = vst [vmem:[%s3 + $0x10] sm:$0xff] %v83
  %90 = vst [vmem:[%s3 + $0x18] sm:$0xff] %v85
  // Predicated region
  $region14: #{filter_forward.9} parent=0 // pred_check
    _
  $region15: #{filter_forward.9} parent=0 // pred_check_branch
    %92 = sbr.rel (0) target = $region17
  $region16: #{filter_forward.9} parent=0 // pred_region
    _
  $region17: #{filter_forward.9} parent=0 // pred_fallthru
    _
  // Predicated region
  $region18: #{filter_forward.9} parent=0 // pred_check
    _
  $region19: #{filter_forward.9} parent=0 // pred_check_branch
    %94 = sbr.rel (0) target = $region21
  $region20: #{filter_forward.9} parent=0 // pred_region
    _
  $region21: #{filter_forward.9} parent=0 // pred_fallthru
    _

// kernel: filter_forward.8
$region0: #{filter_forward.8}
  #allocation0 [shape = 'u32[]', space=smem, size = 0x4, offset = 0x4, fixed_abs, tag = 'smem constant byte address 0x4 - core index']
  #allocation1 [shape = 'u32[144,128]{1,0:T(1,128)}', space=vmem, size = 0x12000, scoped, tag = 'internal scratch']
  %s0 = inlined_call_operand.vmem [shape: f32[2,1,262], index: 0, kind: input, shape index: {}]
  %s1 = inlined_call_operand.vmem [shape: bf16[7,8,1], index: 1, kind: input, shape index: {}]
  %s2 = inlined_call_operand.vmem [shape: f32[8,1], index: 2, kind: input, shape index: {}]
  %s3 = inlined_call_operand.vmem [shape: f32[2,8,256], index: 3, kind: output, shape index: {}]
  %s4 = sld [smem:[#allocation0]]
  $region45: #{filter_forward.8} parent=0
    _
  %s6 = ssub.s32 1, %s4
  %s7 = scalar_select 0, %s6, %s4
  loop: start=0, step=1, limit=4
  $region2: #{filter_forward.8} parent=0 // loop_pre_header
    _
  $region3: #{filter_forward.8} parent=0 // loop_header
    %s9 = sphi 0, %s13
    %p10 = scmp.ge.s32.totalorder %s9, 4
    %s19 = sphi 0, %s21
    %s22 = sphi 0, %s19
    %s23 = sphi 0, %s22
    %s39 = sphi 0, %s23
    %s43 = sphi 0, %s43
    %s45 = sphi 0, %s43
    %s46 = sphi 0, %s45
    %s60 = sphi 0, %s46
    %s64 = sphi 0, %s64
    %s66 = sphi 0, %s64
    %s67 = sphi 0, %s66
    %s81 = sphi 0, %s67
    %s87 = sphi 0, %s89
    %s90 = sphi 0, %s87
    %s91 = sphi 0, %s90
    %s107 = sphi 0, %s91
  $region4: #{filter_forward.8} parent=0 // loop_header_branch
    %12 = sbr.rel (%p10) target = $region8
  $region5: #{filter_forward.8} parent=0 // loop_body
    %s14 = ssub.s32 %s9, 1
    %s15 = ssub.s32 %s9, 2
    %s16 = sadd.s32 %s9, 1
    %s17 = ssub.s32 %s9, %s16
    %p18 = scmp.eq.s32.totalorder %s17, 0
    %s20 = sadd.s32 %s19, 1
    %s21 = scalar_select %p18, %s19, %s20
    %p24 = pneg %p18
    %p25 = scmp.eq.s32.totalorder %s9, 1
    %p26 = por %p24, %p25
    %p27 = scmp.ne.s32.totalorder %s19, %s22
    %p28 = scmp.eq.s32.totalorder %s9, 0
    %p29 = por %p27, %p28
    %p30 = scmp.ne.s32.totalorder %s19, %s22
    %p31 = scmp.eq.s32.totalorder %s14, 1
    %p32 = por %p30, %p31
    %p33 = scmp.ne.s32.totalorder %s22, %s23
    %p34 = scmp.eq.s32.totalorder %s14, 0
    %p35 = por %p33, %p34
    %p36 = scmp.ne.s32.totalorder %s22, %s23
    %p37 = scmp.eq.s32.totalorder %s15, 1
    %p38 = por %p36, %p37
    %p40 = scmp.ne.s32.totalorder %s23, %s39
    %p41 = scmp.eq.s32.totalorder %s15, 0
    %p42 = por %p40, %p41
    %s44 = sadd.s32 %s43, 1
    %p47 = scmp.eq.s32.totalorder %s9, 1
    %p48 = scmp.ne.s32.totalorder %s43, %s45
    %p49 = scmp.eq.s32.totalorder %s9, 0
    %p50 = por %p48, %p49
    %p51 = scmp.ne.s32.totalorder %s43, %s45
    %p52 = scmp.eq.s32.totalorder %s14, 1
    %p53 = por %p51, %p52
    %p54 = scmp.ne.s32.totalorder %s45, %s46
    %p55 = scmp.eq.s32.totalorder %s14, 0
    %p56 = por %p54, %p55
    %p57 = scmp.ne.s32.totalorder %s45, %s46
    %p58 = scmp.eq.s32.totalorder %s15, 1
    %p59 = por %p57, %p58
    %p61 = scmp.ne.s32.totalorder %s46, %s60
    %p62 = scmp.eq.s32.totalorder %s15, 0
    %p63 = por %p61, %p62
    %s65 = sadd.s32 %s64, 1
    %p68 = scmp.eq.s32.totalorder %s9, 1
    %p69 = scmp.ne.s32.totalorder %s64, %s66
    %p70 = scmp.eq.s32.totalorder %s9, 0
    %p71 = por %p69, %p70
    %p72 = scmp.ne.s32.totalorder %s64, %s66
    %p73 = scmp.eq.s32.totalorder %s14, 1
    %p74 = por %p72, %p73
    %p75 = scmp.ne.s32.totalorder %s66, %s67
    %p76 = scmp.eq.s32.totalorder %s14, 0
    %p77 = por %p75, %p76
    %p78 = scmp.ne.s32.totalorder %s66, %s67
    %p79 = scmp.eq.s32.totalorder %s15, 1
    %p80 = por %p78, %p79
    %p82 = scmp.ne.s32.totalorder %s67, %s81
    %p83 = scmp.eq.s32.totalorder %s15, 0
    %p84 = por %p82, %p83
    %s85 = ssub.s32 %s9, %s16
    %p86 = scmp.eq.s32.totalorder %s85, 0
    %s88 = sadd.s32 %s87, 1
    %s89 = scalar_select %p86, %s87, %s88
    %p92 = pneg %p86
    %p93 = scmp.eq.s32.totalorder %s9, 1
    %p94 = por %p92, %p93
    %p95 = scmp.ne.s32.totalorder %s87, %s90
    %p96 = scmp.eq.s32.totalorder %s9, 0
    %p97 = por %p95, %p96
    %p98 = scmp.ne.s32.totalorder %s87, %s90
    %p99 = scmp.eq.s32.totalorder %s14, 1
    %p100 = por %p98, %p99
    %p101 = scmp.ne.s32.totalorder %s90, %s91
    %p102 = scmp.eq.s32.totalorder %s14, 0
    %p103 = por %p101, %p102
    %p104 = scmp.ne.s32.totalorder %s90, %s91
    %p105 = scmp.eq.s32.totalorder %s15, 1
    %p106 = por %p104, %p105
    %p108 = scmp.ne.s32.totalorder %s91, %s107
    %p109 = scmp.eq.s32.totalorder %s15, 0
    %p110 = por %p108, %p109
    %p111 = scmp.le.s32.totalorder 1, %s9
    %p112 = scmp.lt.s32.totalorder %s9, 3
    %p113 = pnand %p111, %p112
    %p114 = pneg %p113
    // Predicated region
    $region9: #{filter_forward.8} parent=5 // pred_check
      _
    $region10: #{filter_forward.8} parent=5 // pred_check_branch
      %116 = sbr.rel (%p113) target = $region12
    $region11: #{filter_forward.8} parent=5 // pred_region
      %s117 = ssub.s32 %s9, 1
      // Predicated region
      $region13: #{filter_forward.8} parent=11 // pred_check
        %p118 = pneg %p56
      $region14: #{filter_forward.8} parent=11 // pred_check_branch
        %120 = sbr.rel (%p118) target = $region16
      $region15: #{filter_forward.8} parent=11 // pred_region
        _
      $region16: #{filter_forward.8} parent=11 // pred_fallthru
        _
      // Predicated region
      $region17: #{filter_forward.8} parent=11 // pred_check
        %p121 = pneg %p77
      $region18: #{filter_forward.8} parent=11 // pred_check_branch
        %123 = sbr.rel (%p121) target = $region20
      $region19: #{filter_forward.8} parent=11 // pred_region
        _
      $region20: #{filter_forward.8} parent=11 // pred_fallthru
        _
    $region12: #{filter_forward.8} parent=5 // pred_fallthru
      _
    %p124 = scmp.lt.s32.totalorder %s9, 2
    // Predicated region
    $region21: #{filter_forward.8} parent=5 // pred_check
      %p125 = pneg %p124
    $region22: #{filter_forward.8} parent=5 // pred_check_branch
      %127 = sbr.rel (%p125) target = $region24
    $region23: #{filter_forward.8} parent=5 // pred_region
      // Predicated region
      $region25: #{filter_forward.8} parent=23 // pred_check
        %p128 = pneg %p29
      $region26: #{filter_forward.8} parent=23 // pred_check_branch
        %130 = sbr.rel (%p128) target = $region28
      $region27: #{filter_forward.8} parent=23 // pred_region
        %p131 = scmp.lt.s32.totalorder %s9, 1
        %s132 = scalar_select %p131, %s9, 1
        %s133 = smul.addr %s132, 3
        %s134 = scalar_lea.vmem %s0, %s133
      $region28: #{filter_forward.8} parent=23 // pred_fallthru
        _
    $region24: #{filter_forward.8} parent=5 // pred_fallthru
      _
    %p135 = scmp.le.s32.totalorder 1, %s9
    %p136 = scmp.lt.s32.totalorder %s9, 3
    %p137 = pnand %p135, %p136
    %p138 = pneg %p137
    // Predicated region
    $region29: #{filter_forward.8} parent=5 // pred_check
      _
    $region30: #{filter_forward.8} parent=5 // pred_check_branch
      %140 = sbr.rel (%p137) target = $region32
    $region31: #{filter_forward.8} parent=5 // pred_region
      %s141 = ssub.s32 %s9, 1
      %p142 = scmp.lt.s32.totalorder %s14, 1
      %s143 = scalar_select %p142, %s14, 1
      %s144 = smul.addr %s143, 3
      %s145 = scalar_lea.vmem %s0, %s144
      %p146 = pneg %p35
      %p147 = pneg %p32
      %p148 = pneg %p56
      %p149 = pneg %p53
      %p150 = pneg %p77
      %p151 = pneg %p74
      %p152 = pneg %p103
      %p153 = pneg %p100
      %p154 = scmp.lt.s32.totalorder %s14, 1
      %s155 = scalar_select %p154, %s14, 1
      %s156 = smul.addr %s155, 2
      %s157 = smul.addr %s156, 8
      %s158 = scalar_lea.vmem %s3, %s157
      %p159 = scmp.lt.s32.totalorder %s14, 1
      %s160 = scalar_select %p159, %s14, 1
      %s161 = smul.addr %s160, 3
      %s162 = scalar_lea.vmem %s0, %s161
      %p163 = scmp.lt.s32.totalorder %s14, 1
      %s164 = scalar_select %p163, %s14, 1
      %s165 = smul.addr %s164, 2
      %s166 = smul.addr %s165, 8
      %s167 = scalar_lea.vmem %s3, %s166
      %v168 = vld [vmem:[%s2] sm:$0xff]
      %170 = vset.pattern.permute.xlu0 0
      %171 = vperm.xlu0 %170, %v168
      %v172 = vpop.permute.xlu0 %171
      %v174 = vadd.f32 %v172, 0.0
      %v175 = vld [vmem:[%s1] sm:$0xf]
      %v176 = vunpack.c.l.bf16 %v175
      %v177 = vld [vmem:[%s162] sm:$0x3]
      %179 = vset.pattern.permute.xlu0 0
      %180 = vperm.xlu0 %179, %v176
      %v181 = vpop.permute.xlu0 %180
      %v184 = vlaneseq
      %v185 = vshrl.u32 %v184, 7
      %v186 = vsub.s32 0, %v185
      %v187 = vrot.slane %v177, %v186
      %v188 = vlaneseq
      %v189 = vshrl.u32 %v188, 7
      %v190 = vsub.s32 1, %v189
      %v191 = vrot.slane %v177, %v190
      %v194 = vmul.f32 %v181, %v187
      %v195 = vmul.f32 %v181, %v191
      %v196 = vadd.f32 %v174, %v194
      %v197 = vadd.f32 %v174, %v195
      %s198 = scalar_lea.vmem %s1, 4
      %v199 = vld [vmem:[%s198] sm:$0xf]
      %v200 = vunpack.c.l.bf16 %v199
      %v201 = vld [vmem:[%s162] sm:$0x7]
      %203 = vset.pattern.permute.xlu0 0
      %204 = vperm.xlu0 %203, %v200
      %v205 = vpop.permute.xlu0 %204
      %v208 = vlaneseq
      %v209 = vshrl.u32 %v208, 7
      %v210 = vsub.s32 0, %v209
      %v211 = vrot.slane %v201, %v210
      %v212 = vlaneseq
      %v213 = vshrl.u32 %v212, 7
      %v214 = vsub.s32 1, %v213
      %v215 = vrot.slane %v201, %v214
      %v216 = vlaneseq
      %v217 = vshrl.u32 %v216, 7
      %v218 = vsub.s32 2, %v217
      %v219 = vrot.slane %v201, %v218
      %v223 = vmul.f32 %v205, %v211
      %v224 = vmul.f32 %v205, %v215
      %v225 = vmul.f32 %v205, %v219
      %229 = vrot.lane.b32.xlu0 %v223, 127
      %v230 = vpop.permute.xlu0 %229
      %231 = vrot.lane.b32.xlu0 %v224, 127
      %v232 = vpop.permute.xlu0 %231
      %233 = vrot.lane.b32.xlu0 %v225, 127
      %v234 = vpop.permute.xlu0 %233
      %vm235 = vcmask 1039360
      %v236 = vsel %vm235, %v230, %v232
      %v237 = vsel %vm235, %v232, %v234
      %v240 = vadd.f32 %v196, %v236
      %v241 = vadd.f32 %v197, %v237
      %s242 = scalar_lea.vmem %s1, 8
      %v243 = vld [vmem:[%s242] sm:$0xf]
      %v244 = vunpack.c.l.bf16 %v243
      %246 = vset.pattern.permute.xlu0 0
      %247 = vperm.xlu0 %246, %v244
      %v248 = vpop.permute.xlu0 %247
      %v250 = vmul.f32 %v248, %v211
      %v251 = vmul.f32 %v248, %v215
      %v252 = vmul.f32 %v248, %v219
      %256 = vrot.lane.b32.xlu0 %v250, 126
      %v257 = vpop.permute.xlu0 %256
      %258 = vrot.lane.b32.xlu0 %v251, 126
      %v259 = vpop.permute.xlu0 %258
      %260 = vrot.lane.b32.xlu0 %v252, 126
      %v261 = vpop.permute.xlu0 %260
      %vm262 = vcmask 1031168
      %v263 = vsel %vm262, %v257, %v259
      %v264 = vsel %vm262, %v259, %v261
      %v267 = vadd.f32 %v240, %v263
      %v268 = vadd.f32 %v241, %v264
      %s269 = scalar_lea.vmem %s1, 12
      %v270 = vld [vmem:[%s269] sm:$0xf]
      %v271 = vunpack.c.l.bf16 %v270
      %273 = vset.pattern.permute.xlu0 0
      %274 = vperm.xlu0 %273, %v271
      %v275 = vpop.permute.xlu0 %274
      %v277 = vmul.f32 %v275, %v211
      %v278 = vmul.f32 %v275, %v215
      %v279 = vmul.f32 %v275, %v219
      %283 = vrot.lane.b32.xlu0 %v277, 125
      %v284 = vpop.permute.xlu0 %283
      %285 = vrot.lane.b32.xlu0 %v278, 125
      %v286 = vpop.permute.xlu0 %285
      %287 = vrot.lane.b32.xlu0 %v279, 125
      %v288 = vpop.permute.xlu0 %287
      %vm289 = vcmask 1022976
      %v290 = vsel %vm289, %v284, %v286
      %v291 = vsel %vm289, %v286, %v288
      %v294 = vadd.f32 %v267, %v290
      %v295 = vadd.f32 %v268, %v291
      %s296 = scalar_lea.vmem %s1, 16
      %v297 = vld [vmem:[%s296] sm:$0xf]
      %v298 = vunpack.c.l.bf16 %v297
      %300 = vset.pattern.permute.xlu0 0
      %301 = vperm.xlu0 %300, %v298
      %v302 = vpop.permute.xlu0 %301
      %v304 = vmul.f32 %v302, %v211
      %v305 = vmul.f32 %v302, %v215
      %v306 = vmul.f32 %v302, %v219
      %310 = vrot.lane.b32.xlu0 %v304, 124
      %v311 = vpop.permute.xlu0 %310
      %312 = vrot.lane.b32.xlu0 %v305, 124
      %v313 = vpop.permute.xlu0 %312
      %314 = vrot.lane.b32.xlu0 %v306, 124
      %v315 = vpop.permute.xlu0 %314
      %vm316 = vcmask 1014784
      %v317 = vsel %vm316, %v311, %v313
      %v318 = vsel %vm316, %v313, %v315
      %v321 = vadd.f32 %v294, %v317
      %v322 = vadd.f32 %v295, %v318
      %s323 = scalar_lea.vmem %s1, 20
      %v324 = vld [vmem:[%s323] sm:$0xf]
      %v325 = vunpack.c.l.bf16 %v324
      %327 = vset.pattern.permute.xlu0 0
      %328 = vperm.xlu0 %327, %v325
      %v329 = vpop.permute.xlu0 %328
      %v331 = vmul.f32 %v329, %v211
      %v332 = vmul.f32 %v329, %v215
      %v333 = vmul.f32 %v329, %v219
      %337 = vrot.lane.b32.xlu0 %v331, 123
      %v338 = vpop.permute.xlu0 %337
      %339 = vrot.lane.b32.xlu0 %v332, 123
      %v340 = vpop.permute.xlu0 %339
      %341 = vrot.lane.b32.xlu0 %v333, 123
      %v342 = vpop.permute.xlu0 %341
      %vm343 = vcmask 1006592
      %v344 = vsel %vm343, %v338, %v340
      %v345 = vsel %vm343, %v340, %v342
      %v348 = vadd.f32 %v321, %v344
      %v349 = vadd.f32 %v322, %v345
      %s350 = scalar_lea.vmem %s1, 24
      %v351 = vld [vmem:[%s350] sm:$0xf]
      %v352 = vunpack.c.l.bf16 %v351
      %354 = vset.pattern.permute.xlu0 0
      %355 = vperm.xlu0 %354, %v352
      %v356 = vpop.permute.xlu0 %355
      %v358 = vmul.f32 %v356, %v211
      %v359 = vmul.f32 %v356, %v215
      %v360 = vmul.f32 %v356, %v219
      %364 = vrot.lane.b32.xlu0 %v358, 122
      %v365 = vpop.permute.xlu0 %364
      %366 = vrot.lane.b32.xlu0 %v359, 122
      %v367 = vpop.permute.xlu0 %366
      %368 = vrot.lane.b32.xlu0 %v360, 122
      %v369 = vpop.permute.xlu0 %368
      %vm370 = vcmask 998400
      %v371 = vsel %vm370, %v365, %v367
      %v372 = vsel %vm370, %v367, %v369
      %v375 = vadd.f32 %v348, %v371
      %v376 = vadd.f32 %v349, %v372
      %377 = vst [vmem:[%s167] sm:$0xff] %v375
      %378 = vst [vmem:[%s167 + $0x8] sm:$0xff] %v376
      %p379 = scmp.lt.s32.totalorder %s14, 1
      %s380 = scalar_select %p379, %s14, 1
      %s381 = smul.addr %s380, 2
      %s382 = smul.addr %s381, 8
      %s383 = scalar_lea.vmem %s3, %s382
      // Predicated region
      $region33: #{filter_forward.8} parent=31 // pred_check
        %p384 = pneg %p100
      $region34: #{filter_forward.8} parent=31 // pred_check_branch
        %386 = sbr.rel (%p384) target = $region36
      $region35: #{filter_forward.8} parent=31 // pred_region
        _
      $region36: #{filter_forward.8} parent=31 // pred_fallthru
        _
    $region32: #{filter_forward.8} parent=5 // pred_fallthru
      _
    %p387 = scmp.le.s32.totalorder 2, %s9
    // Predicated region
    $region37: #{filter_forward.8} parent=5 // pred_check
      %p388 = pneg %p387
    $region38: #{filter_forward.8} parent=5 // pred_check_branch
      %390 = sbr.rel (%p388) target = $region40
    $region39: #{filter_forward.8} parent=5 // pred_region
      %s391 = ssub.s32 %s9, 2
      // Predicated region
      $region41: #{filter_forward.8} parent=39 // pred_check
        %p392 = pneg %p106
      $region42: #{filter_forward.8} parent=39 // pred_check_branch
        %394 = sbr.rel (%p392) target = $region44
      $region43: #{filter_forward.8} parent=39 // pred_region
        %p395 = scmp.lt.s32.totalorder %s15, 1
        %s396 = scalar_select %p395, %s15, 1
        %s397 = smul.addr %s396, 2
        %s398 = smul.addr %s397, 8
        %s399 = scalar_lea.vmem %s3, %s398
      $region44: #{filter_forward.8} parent=39 // pred_fallthru
        _
    $region40: #{filter_forward.8} parent=5 // pred_fallthru
      _
  $region6: #{filter_forward.8} parent=0 // loop_footer
    %s13 = sadd.s32 1, %s9
  $region7: #{filter_forward.8} parent=0 // loop_footer_branch
    %8 = sbr.rel target = $region3
  $region8: #{filter_forward.8} parent=0 // loop_exit
    _

// kernel: filter_forward.11
$region0: #{filter_forward.11}
  #allocation0 [shape = 'u32[]', space=smem, size = 0x4, offset = 0x4, fixed_abs, tag = 'smem constant byte address 0x4 - core index']
  #allocation1 [shape = 'u32[144,128]{1,0:T(1,128)}', space=vmem, size = 0x12000, scoped, tag = 'internal scratch']
  %s0 = inlined_call_operand.vmem [shape: bf16[32,16], index: 0, kind: input, shape index: {}]
  %s1 = inlined_call_operand.vmem [shape: f32[16,128], index: 1, kind: input, shape index: {}]
  %s2 = inlined_call_operand.vmem [shape: f32[32,1], index: 2, kind: input, shape index: {}]
  %s3 = inlined_call_operand.vmem [shape: f32[32,128], index: 3, kind: output, shape index: {}]
  %s4 = sld [smem:[#allocation0]]
  $region22: #{filter_forward.11} parent=0
    _
  %s6 = ssub.s32 1, %s4
  %s7 = scalar_select 0, %s6, %s4
  // Predicated region
  $region2: #{filter_forward.11} parent=0 // pred_check
    _
  $region3: #{filter_forward.11} parent=0 // pred_check_branch
    %9 = sbr.rel (0) target = $region5
  $region4: #{filter_forward.11} parent=0 // pred_region
    _
  $region5: #{filter_forward.11} parent=0 // pred_fallthru
    _
  // Predicated region
  $region6: #{filter_forward.11} parent=0 // pred_check
    _
  $region7: #{filter_forward.11} parent=0 // pred_check_branch
    %11 = sbr.rel (0) target = $region9
  $region8: #{filter_forward.11} parent=0 // pred_region
    _
  $region9: #{filter_forward.11} parent=0 // pred_fallthru
    _
  // Predicated region
  $region10: #{filter_forward.11} parent=0 // pred_check
    _
  $region11: #{filter_forward.11} parent=0 // pred_check_branch
    %13 = sbr.rel (0) target = $region13
  $region12: #{filter_forward.11} parent=0 // pred_region
    _
  $region13: #{filter_forward.11} parent=0 // pred_fallthru
    _
  %v15 = vld [vmem:[%s0] sm:$0xf]
  %v16 = vld [vmem:[%s0 + $0x4] sm:$0xf]
  %v17 = vld [vmem:[%s0 + $0x8] sm:$0xf]
  %v18 = vld [vmem:[%s0 + $0xc] sm:$0xf]
  %v19 = vld [vmem:[%s1] sm:$0xff]
  %v20 = vld [vmem:[%s1 + $0x8] sm:$0xff]
  %v21 = vpack.c.bf16 %v20, %v19
  %v22 = vld [vmem:[%s2] sm:$0xff]
  %v23 = vld [vmem:[%s2 + $0x8] sm:$0xff]
  %v24 = vld [vmem:[%s2 + $0x10] sm:$0xff]
  %v25 = vld [vmem:[%s2 + $0x18] sm:$0xff]
  %27 = vset.pattern.permute.xlu0 0
  %28 = vperm.xlu0 %27, %v22
  %v29 = vpop.permute.xlu0 %28
  %32 = vset.pattern.permute.xlu0 0
  %33 = vperm.xlu0 %32, %v23
  %v34 = vpop.permute.xlu0 %33
  %37 = vset.pattern.permute.xlu0 0
  %38 = vperm.xlu0 %37, %v24
  %v39 = vpop.permute.xlu0 %38
  %42 = vset.pattern.permute.xlu0 0
  %43 = vperm.xlu0 %42, %v25
  %v44 = vpop.permute.xlu0 %43
  %v50 = vunpack.c.l.b16 %v15
  %v51 = vunpack.c.l.b16 %v16
  %v52 = vunpack.c.l.b16 %v17
  %v53 = vunpack.c.l.b16 %v18
  %v54 = vpack.c.b16 %v51, %v50
  %v55 = vpack.c.b16 %v53, %v52
  %vm56 = vcmask 130048
  %v58 = vsel %vm56, %v54, 0
  %v61 = vsel %vm56, %v55, 0
  %63 = vmatprep.subr.bf16.mxu0 0
  %64 = vmatpush1.bf16.msra.mxu0 %v21
  %65 = vmatprep.subr.bf16.mxu0 0
  %66 = vmatpush1.bf16.msra.mxu0 0
  %67 = vmatprep.subr.bf16.mxu0 0
  %68 = vmatpush1.bf16.msra.mxu0 0
  %69 = vmatprep.subr.bf16.mxu0 0
  %70 = vmatpush1.bf16.msra.mxu0 0
  %71 = vmatprep.subr.bf16.mxu0 0
  %72 = vmatpush1.bf16.msra.mxu0 0
  %73 = vmatprep.subr.bf16.mxu0 0
  %74 = vmatpush1.bf16.msra.mxu0 0
  %75 = vmatprep.subr.bf16.mxu0 0
  %76 = vmatpush1.bf16.msra.mxu0 0
  %77 = vmatprep.subr.bf16.mxu0 0
  %78 = vmatpush1.bf16.msra.mxu0 0
  %79 = vmatprep.subr.bf16.mxu0 0
  %80 = vmatpush1.bf16.msra.mxu0 0
  %81 = vmatprep.subr.bf16.mxu0 0
  %82 = vmatpush1.bf16.msra.mxu0 0
  %83 = vmatprep.subr.bf16.mxu0 0
  %84 = vmatpush1.bf16.msra.mxu0 0
  %85 = vmatprep.subr.bf16.mxu0 0
  %86 = vmatpush1.bf16.msra.mxu0 0
  %87 = vmatprep.subr.bf16.mxu0 0
  %88 = vmatpush1.bf16.msra.mxu0 0
  %89 = vmatprep.subr.bf16.mxu0 0
  %90 = vmatpush1.bf16.msra.mxu0 0
  %91 = vmatprep.subr.bf16.mxu0 0
  %92 = vmatpush1.bf16.msra.mxu0 0
  %93 = vmatprep.subr.bf16.mxu0 0
  %94 = vmatpush1.bf16.msra.mxu0 0
  %95 = vmatprep.mubr.bf16.mxu0 0
  %96 = vmatmul.mubr.bf16.gmra.mrb[0].mxu0 %v58
  %v97 = vpop.f32.mrb[0].mxu0
  %v98 = vadd.f32 %v29, %v97
  %v99 = vpop.f32.mrb[0].mxu0
  %v100 = vpop.f32.mrb[0].mxu0
  %v101 = vadd.f32 %v34, %v100
  %v102 = vpop.f32.mrb[0].mxu0
  %103 = vmatprep.mubr.bf16.mxu0 0
  %104 = vmatmul.mubr.bf16.gmra.mrb[0].mxu0 %v61
  %v105 = vpop.f32.mrb[0].mxu0
  %v106 = vadd.f32 %v39, %v105
  %v107 = vpop.f32.mrb[0].mxu0
  %v108 = vpop.f32.mrb[0].mxu0
  %v109 = vadd.f32 %v44, %v108
  %v110 = vpop.f32.mrb[0].mxu0
  %111 = vdwg.mxu0
  %112 = vst [vmem:[%s3] sm:$0xff] %v98
  %113 = vst [vmem:[%s3 + $0x8] sm:$0xff] %v101
  %114 = vst [vmem:[%s3 + $0x10] sm:$0xff] %v106
  %115 = vst [vmem:[%s3 + $0x18] sm:$0xff] %v109
  // Predicated region
  $region14: #{filter_forward.11} parent=0 // pred_check
    _
  $region15: #{filter_forward.11} parent=0 // pred_check_branch
    %117 = sbr.rel (0) target = $region17
  $region16: #{filter_forward.11} parent=0 // pred_region
    _
  $region17: #{filter_forward.11} parent=0 // pred_fallthru
    _
  // Predicated region
  $region18: #{filter_forward.11} parent=0 // pred_check
    _
  $region19: #{filter_forward.11} parent=0 // pred_check_branch
    %119 = sbr.rel (0) target = $region21
  $region20: #{filter_forward.11} parent=0 // pred_region
    _
  $region21: #{filter_forward.11} parent=0 // pred_fallthru
    _

// kernel: filter_forward.10
$region0: #{filter_forward.10}
  #allocation0 [shape = 'u32[]', space=smem, size = 0x4, offset = 0x4, fixed_abs, tag = 'smem constant byte address 0x4 - core index']
  #allocation1 [shape = 'u32[144,128]{1,0:T(1,128)}', space=vmem, size = 0x12000, scoped, tag = 'internal scratch']
  %s0 = inlined_call_operand.vmem [shape: bf16[16,32], index: 0, kind: input, shape index: {}]
  %s1 = inlined_call_operand.vmem [shape: f32[32,128], index: 1, kind: input, shape index: {}]
  %s2 = inlined_call_operand.vmem [shape: f32[16,1], index: 2, kind: input, shape index: {}]
  %s3 = inlined_call_operand.vmem [shape: f32[16,128], index: 3, kind: output, shape index: {}]
  %s4 = sld [smem:[#allocation0]]
  $region22: #{filter_forward.10} parent=0
    _
  %s6 = ssub.s32 1, %s4
  %s7 = scalar_select 0, %s6, %s4
  // Predicated region
  $region2: #{filter_forward.10} parent=0 // pred_check
    _
  $region3: #{filter_forward.10} parent=0 // pred_check_branch
    %9 = sbr.rel (0) target = $region5
  $region4: #{filter_forward.10} parent=0 // pred_region
    _
  $region5: #{filter_forward.10} parent=0 // pred_fallthru
    _
  // Predicated region
  $region6: #{filter_forward.10} parent=0 // pred_check
    _
  $region7: #{filter_forward.10} parent=0 // pred_check_branch
    %11 = sbr.rel (0) target = $region9
  $region8: #{filter_forward.10} parent=0 // pred_region
    _
  $region9: #{filter_forward.10} parent=0 // pred_fallthru
    _
  // Predicated region
  $region10: #{filter_forward.10} parent=0 // pred_check
    _
  $region11: #{filter_forward.10} parent=0 // pred_check_branch
    %13 = sbr.rel (0) target = $region13
  $region12: #{filter_forward.10} parent=0 // pred_region
    _
  $region13: #{filter_forward.10} parent=0 // pred_fallthru
    _
  %v15 = vld [vmem:[%s0] sm:$0xf]
  %v16 = vld [vmem:[%s0 + $0x4] sm:$0xf]
  %v17 = vld [vmem:[%s1] sm:$0xff]
  %v18 = vld [vmem:[%s1 + $0x8] sm:$0xff]
  %v19 = vld [vmem:[%s1 + $0x10] sm:$0xff]
  %v20 = vld [vmem:[%s1 + $0x18] sm:$0xff]
  %v21 = vpack.c.bf16 %v18, %v17
  %v22 = vpack.c.bf16 %v20, %v19
  %v23 = vld [vmem:[%s2] sm:$0xff]
  %v24 = vld [vmem:[%s2 + $0x8] sm:$0xff]
  %26 = vset.pattern.permute.xlu0 0
  %27 = vperm.xlu0 %26, %v23
  %v28 = vpop.permute.xlu0 %27
  %31 = vset.pattern.permute.xlu0 0
  %32 = vperm.xlu0 %31, %v24
  %v33 = vpop.permute.xlu0 %32
  %v37 = vunpack.c.l.b16 %v15
  %v38 = vunpack.c.l.b16 %v16
  %v39 = vpack.c.b16 %v38, %v37
  %vm40 = vcmask 261120
  %v42 = vsel %vm40, %v39, 0
  %44 = vmatprep.subr.bf16.mxu0 0
  %45 = vmatpush1.bf16.msra.mxu0 %v21
  %46 = vmatprep.subr.bf16.mxu0 0
  %47 = vmatpush1.bf16.msra.mxu0 %v22
  %48 = vmatprep.subr.bf16.mxu0 0
  %49 = vmatpush1.bf16.msra.mxu0 0
  %50 = vmatprep.subr.bf16.mxu0 0
  %51 = vmatpush1.bf16.msra.mxu0 0
  %52 = vmatprep.subr.bf16.mxu0 0
  %53 = vmatpush1.bf16.msra.mxu0 0
  %54 = vmatprep.subr.bf16.mxu0 0
  %55 = vmatpush1.bf16.msra.mxu0 0
  %56 = vmatprep.subr.bf16.mxu0 0
  %57 = vmatpush1.bf16.msra.mxu0 0
  %58 = vmatprep.subr.bf16.mxu0 0
  %59 = vmatpush1.bf16.msra.mxu0 0
  %60 = vmatprep.subr.bf16.mxu0 0
  %61 = vmatpush1.bf16.msra.mxu0 0
  %62 = vmatprep.subr.bf16.mxu0 0
  %63 = vmatpush1.bf16.msra.mxu0 0
  %64 = vmatprep.subr.bf16.mxu0 0
  %65 = vmatpush1.bf16.msra.mxu0 0
  %66 = vmatprep.subr.bf16.mxu0 0
  %67 = vmatpush1.bf16.msra.mxu0 0
  %68 = vmatprep.subr.bf16.mxu0 0
  %69 = vmatpush1.bf16.msra.mxu0 0
  %70 = vmatprep.subr.bf16.mxu0 0
  %71 = vmatpush1.bf16.msra.mxu0 0
  %72 = vmatprep.subr.bf16.mxu0 0
  %73 = vmatpush1.bf16.msra.mxu0 0
  %74 = vmatprep.subr.bf16.mxu0 0
  %75 = vmatpush1.bf16.msra.mxu0 0
  %76 = vmatprep.mubr.bf16.mxu0 0
  %77 = vmatmul.mubr.bf16.gmra.mrb[0].mxu0 %v42
  %v78 = vpop.f32.mrb[0].mxu0
  %v79 = vadd.f32 %v28, %v78
  %v80 = vpop.f32.mrb[0].mxu0
  %v81 = vpop.f32.mrb[0].mxu0
  %v82 = vadd.f32 %v33, %v81
  %v83 = vpop.f32.mrb[0].mxu0
  %84 = vdwg.mxu0
  %85 = vst [vmem:[%s3] sm:$0xff] %v79
  %86 = vst [vmem:[%s3 + $0x8] sm:$0xff] %v82
  // Predicated region
  $region14: #{filter_forward.10} parent=0 // pred_check
    _
  $region15: #{filter_forward.10} parent=0 // pred_check_branch
    %88 = sbr.rel (0) target = $region17
  $region16: #{filter_forward.10} parent=0 // pred_region
    _
  $region17: #{filter_forward.10} parent=0 // pred_fallthru
    _
  // Predicated region
  $region18: #{filter_forward.10} parent=0 // pred_check
    _
  $region19: #{filter_forward.10} parent=0 // pred_check_branch
    %90 = sbr.rel (0) target = $region21
  $region20: #{filter_forward.10} parent=0 // pred_region
    _
  $region21: #{filter_forward.10} parent=0 // pred_fallthru
    _

// kernel: filter_forward.12
$region0: #{filter_forward.12}
  #allocation0 [shape = 'u32[]', space=smem, size = 0x4, offset = 0x4, fixed_abs, tag = 'smem constant byte address 0x4 - core index']
  #allocation1 [shape = 'u32[144,128]{1,0:T(1,128)}', space=vmem, size = 0x12000, scoped, tag = 'internal scratch']
  #allocation2 [shape = 'bf16[16,136]{1,0:T(16,128)(2,1)}', space=vmem, size = 0x2000, scoped, tag = 'scratch operand']
  %s0 = inlined_call_operand.vmem [shape: f32[2,33,8], index: 0, kind: input, shape index: {}]
  %s1 = inlined_call_operand.vmem [shape: f32[2,16,128], index: 1, kind: input, shape index: {}]
  %s2 = inlined_call_operand.vmem [shape: f32[8,128], index: 2, kind: input, shape index: {}]
  %s3 = inlined_call_operand.vmem [shape: f32[64,33], index: 3, kind: input, shape index: {}]
  %s4 = inlined_call_operand.vmem [shape: bf16[2,16,80], index: 4, kind: input, shape index: {}]
  %s5 = inlined_call_operand.vmem [shape: f32[2,16,1], index: 5, kind: input, shape index: {}]
  %s6 = inlined_call_operand.vmem [shape: f32[2,16,128], index: 6, kind: output, shape index: {}]
  %s7 = sld [smem:[#allocation0]]
  $region57: #{filter_forward.12} parent=0
    _
  %s9 = ssub.s32 1, %s7
  %s10 = scalar_select 0, %s9, %s7
  loop: start=0, step=1, limit=4
  $region2: #{filter_forward.12} parent=0 // loop_pre_header
    _
  $region3: #{filter_forward.12} parent=0 // loop_header
    %s12 = sphi 0, %s16
    %p13 = scmp.ge.s32.totalorder %s12, 4
    %s19 = sphi 0, %s31
    %s20 = sphi 0, %s27
    %s21 = sphi 0, %s19
    %s22 = sphi 0, %s20
    %s23 = sphi 0, %s21
    %s24 = sphi 0, %s22
    %s34 = sphi 0, %s36
    %s37 = sphi 0, %s34
    %s38 = sphi 0, %s37
    %s54 = sphi 0, %s38
    %s62 = sphi 0, %s64
    %s65 = sphi 0, %s62
    %s66 = sphi 0, %s65
    %s82 = sphi 0, %s66
    %s88 = sphi 0, %s90
    %s91 = sphi 0, %s88
    %s92 = sphi 0, %s91
    %s108 = sphi 0, %s92
    %s112 = sphi 0, %s112
    %s114 = sphi 0, %s112
    %s115 = sphi 0, %s114
    %s129 = sphi 0, %s115
    %s133 = sphi 0, %s133
    %s135 = sphi 0, %s133
    %s136 = sphi 0, %s135
    %s150 = sphi 0, %s136
    %s154 = sphi 0, %s154
    %s156 = sphi 0, %s154
    %s157 = sphi 0, %s156
    %s171 = sphi 0, %s157
    %s179 = sphi 0, %s181
    %s182 = sphi 0, %s179
    %s183 = sphi 0, %s182
    %s199 = sphi 0, %s183
  $region4: #{filter_forward.12} parent=0 // loop_header_branch
    %15 = sbr.rel (%p13) target = $region8
  $region5: #{filter_forward.12} parent=0 // loop_body
    %s17 = ssub.s32 %s12, 1
    %s18 = ssub.s32 %s12, 2
    %s25 = sadd.s32 1, %s20
    %p26 = scmp.ge.s32.totalorder %s25, 1
    %s27 = scalar_select %p26, 0, %s25
    %s28 = sadd.s32 1, %s19
    %s29 = scalar_select %p26, %s28, %s19
    %p30 = scmp.ge.s32.totalorder %s29, 2
    %s31 = scalar_select %p30, 0, %s29
    %s32 = ssub.s32 %s19, %s31
    %p33 = scmp.eq.s32.totalorder %s32, 0
    %s35 = sadd.s32 %s34, 1
    %s36 = scalar_select %p33, %s34, %s35
    %p39 = pneg %p33
    %p40 = scmp.eq.s32.totalorder %s12, 1
    %p41 = por %p39, %p40
    %p42 = scmp.ne.s32.totalorder %s34, %s37
    %p43 = scmp.eq.s32.totalorder %s12, 0
    %p44 = por %p42, %p43
    %p45 = scmp.ne.s32.totalorder %s34, %s37
    %p46 = scmp.eq.s32.totalorder %s17, 1
    %p47 = por %p45, %p46
    %p48 = scmp.ne.s32.totalorder %s37, %s38
    %p49 = scmp.eq.s32.totalorder %s17, 0
    %p50 = por %p48, %p49
    %p51 = scmp.ne.s32.totalorder %s37, %s38
    %p52 = scmp.eq.s32.totalorder %s18, 1
    %p53 = por %p51, %p52
    %p55 = scmp.ne.s32.totalorder %s38, %s54
    %p56 = scmp.eq.s32.totalorder %s18, 0
    %p57 = por %p55, %p56
    %s58 = ssub.s32 %s19, %s31
    %s59 = ssub.s32 %s20, %s27
    %s60 = sor.u32 %s58, %s59
    %p61 = scmp.eq.s32.totalorder %s60, 0
    %s63 = sadd.s32 %s62, 1
    %s64 = scalar_select %p61, %s62, %s63
    %p67 = pneg %p61
    %p68 = scmp.eq.s32.totalorder %s12, 1
    %p69 = por %p67, %p68
    %p70 = scmp.ne.s32.totalorder %s62, %s65
    %p71 = scmp.eq.s32.totalorder %s12, 0
    %p72 = por %p70, %p71
    %p73 = scmp.ne.s32.totalorder %s62, %s65
    %p74 = scmp.eq.s32.totalorder %s17, 1
    %p75 = por %p73, %p74
    %p76 = scmp.ne.s32.totalorder %s65, %s66
    %p77 = scmp.eq.s32.totalorder %s17, 0
    %p78 = por %p76, %p77
    %p79 = scmp.ne.s32.totalorder %s65, %s66
    %p80 = scmp.eq.s32.totalorder %s18, 1
    %p81 = por %p79, %p80
    %p83 = scmp.ne.s32.totalorder %s66, %s82
    %p84 = scmp.eq.s32.totalorder %s18, 0
    %p85 = por %p83, %p84
    %s86 = ssub.s32 %s20, %s27
    %p87 = scmp.eq.s32.totalorder %s86, 0
    %s89 = sadd.s32 %s88, 1
    %s90 = scalar_select %p87, %s88, %s89
    %p93 = pneg %p87
    %p94 = scmp.eq.s32.totalorder %s12, 1
    %p95 = por %p93, %p94
    %p96 = scmp.ne.s32.totalorder %s88, %s91
    %p97 = scmp.eq.s32.totalorder %s12, 0
    %p98 = por %p96, %p97
    %p99 = scmp.ne.s32.totalorder %s88, %s91
    %p100 = scmp.eq.s32.totalorder %s17, 1
    %p101 = por %p99, %p100
    %p102 = scmp.ne.s32.totalorder %s91, %s92
    %p103 = scmp.eq.s32.totalorder %s17, 0
    %p104 = por %p102, %p103
    %p105 = scmp.ne.s32.totalorder %s91, %s92
    %p106 = scmp.eq.s32.totalorder %s18, 1
    %p107 = por %p105, %p106
    %p109 = scmp.ne.s32.totalorder %s92, %s108
    %p110 = scmp.eq.s32.totalorder %s18, 0
    %p111 = por %p109, %p110
    %s113 = sadd.s32 %s112, 1
    %p116 = scmp.eq.s32.totalorder %s12, 1
    %p117 = scmp.ne.s32.totalorder %s112, %s114
    %p118 = scmp.eq.s32.totalorder %s12, 0
    %p119 = por %p117, %p118
    %p120 = scmp.ne.s32.totalorder %s112, %s114
    %p121 = scmp.eq.s32.totalorder %s17, 1
    %p122 = por %p120, %p121
    %p123 = scmp.ne.s32.totalorder %s114, %s115
    %p124 = scmp.eq.s32.totalorder %s17, 0
    %p125 = por %p123, %p124
    %p126 = scmp.ne.s32.totalorder %s114, %s115
    %p127 = scmp.eq.s32.totalorder %s18, 1
    %p128 = por %p126, %p127
    %p130 = scmp.ne.s32.totalorder %s115, %s129
    %p131 = scmp.eq.s32.totalorder %s18, 0
    %p132 = por %p130, %p131
    %s134 = sadd.s32 %s133, 1
    %p137 = scmp.eq.s32.totalorder %s12, 1
    %p138 = scmp.ne.s32.totalorder %s133, %s135
    %p139 = scmp.eq.s32.totalorder %s12, 0
    %p140 = por %p138, %p139
    %p141 = scmp.ne.s32.totalorder %s133, %s135
    %p142 = scmp.eq.s32.totalorder %s17, 1
    %p143 = por %p141, %p142
    %p144 = scmp.ne.s32.totalorder %s135, %s136
    %p145 = scmp.eq.s32.totalorder %s17, 0
    %p146 = por %p144, %p145
    %p147 = scmp.ne.s32.totalorder %s135, %s136
    %p148 = scmp.eq.s32.totalorder %s18, 1
    %p149 = por %p147, %p148
    %p151 = scmp.ne.s32.totalorder %s136, %s150
    %p152 = scmp.eq.s32.totalorder %s18, 0
    %p153 = por %p151, %p152
    %s155 = sadd.s32 %s154, 1
    %p158 = scmp.eq.s32.totalorder %s12, 1
    %p159 = scmp.ne.s32.totalorder %s154, %s156
    %p160 = scmp.eq.s32.totalorder %s12, 0
    %p161 = por %p159, %p160
    %p162 = scmp.ne.s32.totalorder %s154, %s156
    %p163 = scmp.eq.s32.totalorder %s17, 1
    %p164 = por %p162, %p163
    %p165 = scmp.ne.s32.totalorder %s156, %s157
    %p166 = scmp.eq.s32.totalorder %s17, 0
    %p167 = por %p165, %p166
    %p168 = scmp.ne.s32.totalorder %s156, %s157
    %p169 = scmp.eq.s32.totalorder %s18, 1
    %p170 = por %p168, %p169
    %p172 = scmp.ne.s32.totalorder %s157, %s171
    %p173 = scmp.eq.s32.totalorder %s18, 0
    %p174 = por %p172, %p173
    %s175 = ssub.s32 %s19, %s31
    %s176 = ssub.s32 %s20, %s27
    %s177 = sor.u32 %s175, %s176
    %p178 = scmp.eq.s32.totalorder %s177, 0
    %s180 = sadd.s32 %s179, 1
    %s181 = scalar_select %p178, %s179, %s180
    %p184 = pneg %p178
    %p185 = scmp.eq.s32.totalorder %s12, 1
    %p186 = por %p184, %p185
    %p187 = scmp.ne.s32.totalorder %s179, %s182
    %p188 = scmp.eq.s32.totalorder %s12, 0
    %p189 = por %p187, %p188
    %p190 = scmp.ne.s32.totalorder %s179, %s182
    %p191 = scmp.eq.s32.totalorder %s17, 1
    %p192 = por %p190, %p191
    %p193 = scmp.ne.s32.totalorder %s182, %s183
    %p194 = scmp.eq.s32.totalorder %s17, 0
    %p195 = por %p193, %p194
    %p196 = scmp.ne.s32.totalorder %s182, %s183
    %p197 = scmp.eq.s32.totalorder %s18, 1
    %p198 = por %p196, %p197
    %p200 = scmp.ne.s32.totalorder %s183, %s199
    %p201 = scmp.eq.s32.totalorder %s18, 0
    %p202 = por %p200, %p201
    %p203 = scmp.le.s32.totalorder 1, %s12
    %p204 = scmp.lt.s32.totalorder %s12, 3
    %p205 = pnand %p203, %p204
    %p206 = pneg %p205
    // Predicated region
    $region9: #{filter_forward.12} parent=5 // pred_check
      _
    $region10: #{filter_forward.12} parent=5 // pred_check_branch
      %208 = sbr.rel (%p205) target = $region12
    $region11: #{filter_forward.12} parent=5 // pred_region
      %s209 = ssub.s32 %s12, 1
      // Predicated region
      $region13: #{filter_forward.12} parent=11 // pred_check
        %p210 = pneg %p104
      $region14: #{filter_forward.12} parent=11 // pred_check_branch
        %212 = sbr.rel (%p210) target = $region16
      $region15: #{filter_forward.12} parent=11 // pred_region
        %p213 = scmp.lt.s32.totalorder %s22, 0
        %s214 = scalar_select %p213, %s22, 0
        %s215 = smul.addr %s214, 8
        %s216 = scalar_lea.vmem %s2, %s215
      $region16: #{filter_forward.12} parent=11 // pred_fallthru
        _
      // Predicated region
      $region17: #{filter_forward.12} parent=11 // pred_check
        %p217 = pneg %p125
      $region18: #{filter_forward.12} parent=11 // pred_check_branch
        %219 = sbr.rel (%p217) target = $region20
      $region19: #{filter_forward.12} parent=11 // pred_region
        _
      $region20: #{filter_forward.12} parent=11 // pred_fallthru
        _
      // Predicated region
      $region21: #{filter_forward.12} parent=11 // pred_check
        %p220 = pneg %p146
      $region22: #{filter_forward.12} parent=11 // pred_check_branch
        %222 = sbr.rel (%p220) target = $region24
      $region23: #{filter_forward.12} parent=11 // pred_region
        _
      $region24: #{filter_forward.12} parent=11 // pred_fallthru
        _
      // Predicated region
      $region25: #{filter_forward.12} parent=11 // pred_check
        %p223 = pneg %p167
      $region26: #{filter_forward.12} parent=11 // pred_check_branch
        %225 = sbr.rel (%p223) target = $region28
      $region27: #{filter_forward.12} parent=11 // pred_region
        _
      $region28: #{filter_forward.12} parent=11 // pred_fallthru
        _
    $region12: #{filter_forward.12} parent=5 // pred_fallthru
      _
    %p226 = scmp.lt.s32.totalorder %s12, 2
    // Predicated region
    $region29: #{filter_forward.12} parent=5 // pred_check
      %p227 = pneg %p226
    $region30: #{filter_forward.12} parent=5 // pred_check_branch
      %229 = sbr.rel (%p227) target = $region32
    $region31: #{filter_forward.12} parent=5 // pred_region
      // Predicated region
      $region33: #{filter_forward.12} parent=31 // pred_check
        %p230 = pneg %p44
      $region34: #{filter_forward.12} parent=31 // pred_check_branch
        %232 = sbr.rel (%p230) target = $region36
      $region35: #{filter_forward.12} parent=31 // pred_region
        %p233 = scmp.lt.s32.totalorder %s19, 1
        %s234 = scalar_select %p233, %s19, 1
        %s235 = smul.addr %s234, 5
        %s236 = smul.addr %s235, 8
        %s237 = scalar_lea.vmem %s0, %s236
      $region36: #{filter_forward.12} parent=31 // pred_fallthru
        _
      // Predicated region
      $region37: #{filter_forward.12} parent=31 // pred_check
        %p238 = pneg %p72
      $region38: #{filter_forward.12} parent=31 // pred_check_branch
        %240 = sbr.rel (%p238) target = $region40
      $region39: #{filter_forward.12} parent=31 // pred_region
        %p241 = scmp.lt.s32.totalorder %s19, 1
        %s242 = scalar_select %p241, %s19, 1
        %p243 = scmp.lt.s32.totalorder %s20, 0
        %s244 = scalar_select %p243, %s20, 0
        %s245 = smul.addr %s242, 2
        %s246 = sadd.s32 %s244, %s245
        %s247 = smul.addr %s246, 8
        %s248 = scalar_lea.vmem %s1, %s247
      $region40: #{filter_forward.12} parent=31 // pred_fallthru
        _
    $region32: #{filter_forward.12} parent=5 // pred_fallthru
      _
    %p249 = scmp.le.s32.totalorder 1, %s12
    %p250 = scmp.lt.s32.totalorder %s12, 3
    %p251 = pnand %p249, %p250
    %p252 = pneg %p251
    // Predicated region
    $region41: #{filter_forward.12} parent=5 // pred_check
      _
    $region42: #{filter_forward.12} parent=5 // pred_check_branch
      %254 = sbr.rel (%p251) target = $region44
    $region43: #{filter_forward.12} parent=5 // pred_region
      %s255 = ssub.s32 %s12, 1
      %p256 = scmp.lt.s32.totalorder %s21, 1
      %s257 = scalar_select %p256, %s21, 1
      %s258 = smul.addr %s257, 5
      %s259 = smul.addr %s258, 8
      %s260 = scalar_lea.vmem %s0, %s259
      %p261 = pneg %p50
      %p262 = pneg %p47
      %p263 = scmp.lt.s32.totalorder %s21, 1
      %s264 = scalar_select %p263, %s21, 1
      %p265 = scmp.lt.s32.totalorder %s22, 0
      %s266 = scalar_select %p265, %s22, 0
      %s267 = smul.addr %s264, 2
      %s268 = sadd.s32 %s266, %s267
      %s269 = smul.addr %s268, 8
      %s270 = scalar_lea.vmem %s1, %s269
      %p271 = pneg %p78
      %p272 = pneg %p75
      %p273 = scmp.lt.s32.totalorder %s22, 0
      %s274 = scalar_select %p273, %s22, 0
      %s275 = smul.addr %s274, 8
      %s276 = scalar_lea.vmem %s2, %s275
      %p277 = pneg %p104
      %p278 = pneg %p101
      %p279 = pneg %p125
      %p280 = pneg %p122
      %p281 = pneg %p146
      %p282 = pneg %p143
      %p283 = pneg %p167
      %p284 = pneg %p164
      %p285 = pneg %p195
      %p286 = pneg %p192
      %p287 = scmp.lt.s32.totalorder %s21, 1
      %s288 = scalar_select %p287, %s21, 1
      %p289 = scmp.lt.s32.totalorder %s22, 0
      %s290 = scalar_select %p289, %s22, 0
      %s291 = smul.addr %s288, 2
      %s292 = sadd.s32 %s290, %s291
      %s293 = smul.addr %s292, 8
      %s294 = scalar_lea.vmem %s6, %s293
      %p295 = scmp.lt.s32.totalorder %s21, 1
      %s296 = scalar_select %p295, %s21, 1
      %s297 = smul.addr %s296, 5
      %s298 = smul.addr %s297, 8
      %s299 = scalar_lea.vmem %s0, %s298
      %p300 = scmp.lt.s32.totalorder %s21, 1
      %s301 = scalar_select %p300, %s21, 1
      %p302 = scmp.lt.s32.totalorder %s22, 0
      %s303 = scalar_select %p302, %s22, 0
      %s304 = smul.addr %s301, 2
      %s305 = sadd.s32 %s303, %s304
      %s306 = smul.addr %s305, 8
      %s307 = scalar_lea.vmem %s1, %s306
      %p308 = scmp.lt.s32.totalorder %s22, 0
      %s309 = scalar_select %p308, %s22, 0
      %s310 = smul.addr %s309, 8
      %s311 = scalar_lea.vmem %s2, %s310
      %p312 = scmp.lt.s32.totalorder %s21, 1
      %s313 = scalar_select %p312, %s21, 1
      %p314 = scmp.lt.s32.totalorder %s22, 0
      %s315 = scalar_select %p314, %s22, 0
      %s316 = smul.addr %s313, 2
      %s317 = sadd.s32 %s315, %s316
      %s318 = smul.addr %s317, 8
      %s319 = scalar_lea.vmem %s6, %s318
      %vm321 = vcmask 64512
      %322 = vst.msk [vmem:[#allocation2] sm:$0xff] %vm321, 0
      %v323 = vld [vmem:[%s299] sm:$0xff]
      %v324 = vld [vmem:[%s299 + $0x8] sm:$0xff]
      %v325 = vld [vmem:[%s299 + $0x10] sm:$0xff]
      %v326 = vld [vmem:[%s299 + $0x18] sm:$0xff]
      %v327 = vld [vmem:[%s299 + $0x20] sm:$0x1]
      %v328 = vld [vmem:[%s3] sm:$0xff]
      %v329 = vld [vmem:[%s3 + $0x8] sm:$0xff]
      %v330 = vld [vmem:[%s3 + $0x10] sm:$0xff]
      %v331 = vld [vmem:[%s3 + $0x18] sm:$0xff]
      %v332 = vld [vmem:[%s3 + $0x20] sm:$0xff]
      %v333 = vld [vmem:[%s3 + $0x28] sm:$0xff]
      %v334 = vld [vmem:[%s3 + $0x30] sm:$0xff]
      %v335 = vld [vmem:[%s3 + $0x38] sm:$0xff]
      %vm336 = vcmask 269312
      %v338 = vsel %vm336, %v328, 0
      %v341 = vsel %vm336, %v329, 0
      %v344 = vsel %vm336, %v330, 0
      %v347 = vsel %vm336, %v331, 0
      %v350 = vsel %vm336, %v332, 0
      %v353 = vsel %vm336, %v333, 0
      %v356 = vsel %vm336, %v334, 0
      %v359 = vsel %vm336, %v335, 0
      %vm361 = vcmask 1040384
      %v363 = vsel %vm361, %v327, 0
      %365 = vmatprep.subr.mxu0 0.0
      %366 = vmatpush1.msra.mxu0 %v323
      %367 = vmatprep.subr.mxu0 0.0
      %368 = vmatpush1.msra.mxu0 %v324
      %369 = vmatprep.subr.mxu0 0.0
      %370 = vmatpush1.msra.mxu0 %v325
      %371 = vmatprep.subr.mxu0 0.0
      %372 = vmatpush1.msra.mxu0 %v326
      %373 = vmatprep.subr.mxu0 0.0
      %374 = vmatpush1.msra.mxu0 %v363
      %375 = vmatprep.subr.mxu0 0.0
      %376 = vmatpush1.msra.mxu0 0.0
      %377 = vmatprep.subr.mxu0 0.0
      %378 = vmatpush1.msra.mxu0 0.0
      %379 = vmatprep.subr.mxu0 0.0
      %380 = vmatpush1.msra.mxu0 0.0
      %381 = vmatprep.subr.mxu0 0.0
      %382 = vmatpush1.msra.mxu0 0.0
      %383 = vmatprep.subr.mxu0 0.0
      %384 = vmatpush1.msra.mxu0 0.0
      %385 = vmatprep.subr.mxu0 0.0
      %386 = vmatpush1.msra.mxu0 0.0
      %387 = vmatprep.subr.mxu0 0.0
      %388 = vmatpush1.msra.mxu0 0.0
      %389 = vmatprep.subr.mxu0 0.0
      %390 = vmatpush1.msra.mxu0 0.0
      %391 = vmatprep.subr.mxu0 0.0
      %392 = vmatpush1.msra.mxu0 0.0
      %393 = vmatprep.subr.mxu0 0.0
      %394 = vmatpush1.msra.mxu0 0.0
      %395 = vmatprep.subr.mxu0 0.0
      %396 = vmatpush1.msra.mxu0 0.0
      %397 = vmatprep.subr.mxu0 0.0
      %398 = vmatpush1.msra.mxu0 0.0
      %399 = vmatprep.subr.mxu0 0.0
      %400 = vmatpush1.msra.mxu0 0.0
      %401 = vmatprep.subr.mxu0 0.0
      %402 = vmatpush1.msra.mxu0 0.0
      %403 = vmatprep.subr.mxu0 0.0
      %404 = vmatpush1.msra.mxu0 0.0
      %405 = vmatprep.subr.mxu0 0.0
      %406 = vmatpush1.msra.mxu0 0.0
      %407 = vmatprep.subr.mxu0 0.0
      %408 = vmatpush1.msra.mxu0 0.0
      %409 = vmatprep.subr.mxu0 0.0
      %410 = vmatpush1.msra.mxu0 0.0
      %411 = vmatprep.subr.mxu0 0.0
      %412 = vmatpush1.msra.mxu0 0.0
      %413 = vmatprep.subr.mxu0 0.0
      %414 = vmatpush1.msra.mxu0 0.0
      %415 = vmatprep.subr.mxu0 0.0
      %416 = vmatpush1.msra.mxu0 0.0
      %417 = vmatprep.subr.mxu0 0.0
      %418 = vmatpush1.msra.mxu0 0.0
      %419 = vmatprep.subr.mxu0 0.0
      %420 = vmatpush1.msra.mxu0 0.0
      %421 = vmatprep.subr.mxu0 0.0
      %422 = vmatpush1.msra.mxu0 0.0
      %423 = vmatprep.subr.mxu0 0.0
      %424 = vmatpush1.msra.mxu0 0.0
      %425 = vmatprep.subr.mxu0 0.0
      %426 = vmatpush1.msra.mxu0 0.0
      %427 = vmatprep.subr.mxu0 0.0
      %428 = vmatpush1.msra.mxu0 0.0
      %429 = vmatprep.mubr.f32.mxu0 0.0
      %430 = vmatmul.mubr.f32.gmra.mrb[0].mxu0 %v338
      %v431 = vpop.f32.mrb[0].mxu0
      %v432 = vadd.f32 0.0, %v431
      %v433 = vpop.f32.mrb[0].mxu0
      %434 = vmatprep.mubr.f32.mxu0 0.0
      %435 = vmatmul.mubr.f32.gmra.mrb[0].mxu0 %v341
      %v436 = vpop.f32.mrb[0].mxu0
      %v437 = vadd.f32 0.0, %v436
      %v438 = vpop.f32.mrb[0].mxu0
      %439 = vmatprep.mubr.f32.mxu0 0.0
      %440 = vmatmul.mubr.f32.gmra.mrb[0].mxu0 %v344
      %v441 = vpop.f32.mrb[0].mxu0
      %v442 = vadd.f32 0.0, %v441
      %v443 = vpop.f32.mrb[0].mxu0
      %444 = vmatprep.mubr.f32.mxu0 0.0
      %445 = vmatmul.mubr.f32.gmra.mrb[0].mxu0 %v347
      %v446 = vpop.f32.mrb[0].mxu0
      %v447 = vadd.f32 0.0, %v446
      %v448 = vpop.f32.mrb[0].mxu0
      %449 = vmatprep.mubr.f32.mxu0 0.0
      %450 = vmatmul.mubr.f32.gmra.mrb[0].mxu0 %v350
      %v451 = vpop.f32.mrb[0].mxu0
      %v452 = vadd.f32 0.0, %v451
      %v453 = vpop.f32.mrb[0].mxu0
      %454 = vmatprep.mubr.f32.mxu0 0.0
      %455 = vmatmul.mubr.f32.gmra.mrb[0].mxu0 %v353
      %v456 = vpop.f32.mrb[0].mxu0
      %v457 = vadd.f32 0.0, %v456
      %v458 = vpop.f32.mrb[0].mxu0
      %459 = vmatprep.mubr.f32.mxu0 0.0
      %460 = vmatmul.mubr.f32.gmra.mrb[0].mxu0 %v356
      %v461 = vpop.f32.mrb[0].mxu0
      %v462 = vadd.f32 0.0, %v461
      %v463 = vpop.f32.mrb[0].mxu0
      %464 = vmatprep.mubr.f32.mxu0 0.0
      %465 = vmatmul.mubr.f32.gmra.mrb[0].mxu0 %v359
      %v466 = vpop.f32.mrb[0].mxu0
      %v467 = vadd.f32 0.0, %v466
      %v468 = vpop.f32.mrb[0].mxu0
      %469 = vdwg.mxu0
      %v470 = vld [vmem:[%s311] sm:$0xff]
      %v472 = vsel %vm321, %v432, 0
      %v475 = vsel %vm321, %v437, 0
      %v478 = vsel %vm321, %v442, 0
      %v481 = vsel %vm321, %v447, 0
      %v484 = vsel %vm321, %v452, 0
      %v487 = vsel %vm321, %v457, 0
      %v490 = vsel %vm321, %v462, 0
      %v493 = vsel %vm321, %v467, 0
      %495 = vmatprep.subr.mxu0 0.0
      %496 = vmatpush1.msra.mxu0 %v470
      %497 = vmatprep.subr.mxu0 0.0
      %498 = vmatpush1.msra.mxu0 0.0
      %499 = vmatprep.subr.mxu0 0.0
      %500 = vmatpush1.msra.mxu0 0.0
      %501 = vmatprep.subr.mxu0 0.0
      %502 = vmatpush1.msra.mxu0 0.0
      %503 = vmatprep.subr.mxu0 0.0
      %504 = vmatpush1.msra.mxu0 0.0
      %505 = vmatprep.subr.mxu0 0.0
      %506 = vmatpush1.msra.mxu0 0.0
      %507 = vmatprep.subr.mxu0 0.0
      %508 = vmatpush1.msra.mxu0 0.0
      %509 = vmatprep.subr.mxu0 0.0
      %510 = vmatpush1.msra.mxu0 0.0
      %511 = vmatprep.subr.mxu0 0.0
      %512 = vmatpush1.msra.mxu0 0.0
      %513 = vmatprep.subr.mxu0 0.0
      %514 = vmatpush1.msra.mxu0 0.0
      %515 = vmatprep.subr.mxu0 0.0
      %516 = vmatpush1.msra.mxu0 0.0
      %517 = vmatprep.subr.mxu0 0.0
      %518 = vmatpush1.msra.mxu0 0.0
      %519 = vmatprep.subr.mxu0 0.0
      %520 = vmatpush1.msra.mxu0 0.0
      %521 = vmatprep.subr.mxu0 0.0
      %522 = vmatpush1.msra.mxu0 0.0
      %523 = vmatprep.subr.mxu0 0.0
      %524 = vmatpush1.msra.mxu0 0.0
      %525 = vmatprep.subr.mxu0 0.0
      %526 = vmatpush1.msra.mxu0 0.0
      %527 = vmatprep.subr.mxu0 0.0
      %528 = vmatpush1.msra.mxu0 0.0
      %529 = vmatprep.subr.mxu0 0.0
      %530 = vmatpush1.msra.mxu0 0.0
      %531 = vmatprep.subr.mxu0 0.0
      %532 = vmatpush1.msra.mxu0 0.0
      %533 = vmatprep.subr.mxu0 0.0
      %534 = vmatpush1.msra.mxu0 0.0
      %535 = vmatprep.subr.mxu0 0.0
      %536 = vmatpush1.msra.mxu0 0.0
      %537 = vmatprep.subr.mxu0 0.0
      %538 = vmatpush1.msra.mxu0 0.0
      %539 = vmatprep.subr.mxu0 0.0
      %540 = vmatpush1.msra.mxu0 0.0
      %541 = vmatprep.subr.mxu0 0.0
      %542 = vmatpush1.msra.mxu0 0.0
      %543 = vmatprep.subr.mxu0 0.0
      %544 = vmatpush1.msra.mxu0 0.0
      %545 = vmatprep.subr.mxu0 0.0
      %546 = vmatpush1.msra.mxu0 0.0
      %547 = vmatprep.subr.mxu0 0.0
      %548 = vmatpush1.msra.mxu0 0.0
      %549 = vmatprep.subr.mxu0 0.0
      %550 = vmatpush1.msra.mxu0 0.0
      %551 = vmatprep.subr.mxu0 0.0
      %552 = vmatpush1.msra.mxu0 0.0
      %553 = vmatprep.subr.mxu0 0.0
      %554 = vmatpush1.msra.mxu0 0.0
      %555 = vmatprep.subr.mxu0 0.0
      %556 = vmatpush1.msra.mxu0 0.0
      %557 = vmatprep.subr.mxu0 0.0
      %558 = vmatpush1.msra.mxu0 0.0
      %559 = vmatprep.mubr.f32.mxu0 0.0
      %560 = vmatmul.mubr.f32.gmra.mrb[0].mxu0 %v472
      %v561 = vpop.f32.mrb[0].mxu0
      %v562 = vadd.f32 0.0, %v561
      %v563 = vpop.f32.mrb[0].mxu0
      %564 = vmatprep.mubr.f32.mxu0 0.0
      %565 = vmatmul.mubr.f32.gmra.mrb[0].mxu0 %v475
      %v566 = vpop.f32.mrb[0].mxu0
      %v567 = vadd.f32 0.0, %v566
      %v568 = vpop.f32.mrb[0].mxu0
      %569 = vmatprep.mubr.f32.mxu0 0.0
      %570 = vmatmul.mubr.f32.gmra.mrb[0].mxu0 %v478
      %v571 = vpop.f32.mrb[0].mxu0
      %v572 = vadd.f32 0.0, %v571
      %v573 = vpop.f32.mrb[0].mxu0
      %574 = vmatprep.mubr.f32.mxu0 0.0
      %575 = vmatmul.mubr.f32.gmra.mrb[0].mxu0 %v481
      %v576 = vpop.f32.mrb[0].mxu0
      %v577 = vadd.f32 0.0, %v576
      %v578 = vpop.f32.mrb[0].mxu0
      %579 = vmatprep.mubr.f32.mxu0 0.0
      %580 = vmatmul.mubr.f32.gmra.mrb[0].mxu0 %v484
      %v581 = vpop.f32.mrb[0].mxu0
      %v582 = vadd.f32 0.0, %v581
      %v583 = vpop.f32.mrb[0].mxu0
      %584 = vmatprep.mubr.f32.mxu0 0.0
      %585 = vmatmul.mubr.f32.gmra.mrb[0].mxu0 %v487
      %v586 = vpop.f32.mrb[0].mxu0
      %v587 = vadd.f32 0.0, %v586
      %v588 = vpop.f32.mrb[0].mxu0
      %589 = vmatprep.mubr.f32.mxu0 0.0
      %590 = vmatmul.mubr.f32.gmra.mrb[0].mxu0 %v490
      %v591 = vpop.f32.mrb[0].mxu0
      %v592 = vadd.f32 0.0, %v591
      %v593 = vpop.f32.mrb[0].mxu0
      %594 = vmatprep.mubr.f32.mxu0 0.0
      %595 = vmatmul.mubr.f32.gmra.mrb[0].mxu0 %v493
      %v596 = vpop.f32.mrb[0].mxu0
      %v597 = vadd.f32 0.0, %v596
      %v598 = vpop.f32.mrb[0].mxu0
      %599 = vdwg.mxu0
      %v600 = vld [vmem:[%s307] sm:$0xff]
      %v601 = vld [vmem:[%s307 + $0x8] sm:$0xff]
      %v602 = vmul.f32 %v600, %v562
      %v603 = vmul.f32 %v601, %v567
      %v604 = vadd.f32 %v602, %v582
      %v605 = vadd.f32 %v603, %v587
      %v606 = vpack.c.bf16 %v605, %v604
      %608 = vrot.lane.b32.xlu0 %v606, 8
      %v609 = vpop.permute.xlu0 %608
      %vm611 = vcmask 1047616
      %612 = vst.msk [vmem:[#allocation2] sm:$0xff] %vm611, %v609
      %613 = vst.msk [vmem:[#allocation2 + $0x8] sm:$0xff] %vm321, %v609
      %v614 = vld [vmem:[#allocation2] sm:$0xff]
      %v615 = vld [vmem:[#allocation2 + $0x8] sm:$0xff]
      %618 = vrot.lane.b32.xlu0 %v614, 127
      %v619 = vpop.permute.xlu0 %618
      %620 = vrot.lane.b32.xlu0 %v615, 127
      %v621 = vpop.permute.xlu0 %620
      %vm622 = vcmask 1039360
      %v623 = vsel %vm622, %v619, %v621
      %624 = vrot.lane.b32.xlu0 %v614, 126
      %v625 = vpop.permute.xlu0 %624
      %626 = vrot.lane.b32.xlu0 %v615, 126
      %v627 = vpop.permute.xlu0 %626
      %vm628 = vcmask 1031168
      %v629 = vsel %vm628, %v625, %v627
      %630 = vrot.lane.b32.xlu0 %v614, 125
      %v631 = vpop.permute.xlu0 %630
      %632 = vrot.lane.b32.xlu0 %v615, 125
      %v633 = vpop.permute.xlu0 %632
      %vm634 = vcmask 1022976
      %v635 = vsel %vm634, %v631, %v633
      %636 = vrot.lane.b32.xlu0 %v614, 124
      %v637 = vpop.permute.xlu0 %636
      %638 = vrot.lane.b32.xlu0 %v615, 124
      %v639 = vpop.permute.xlu0 %638
      %vm640 = vcmask 1014784
      %v641 = vsel %vm640, %v637, %v639
      %v642 = vld [vmem:[%s4] sm:$0xf]
      %v643 = vld [vmem:[%s4 + $0x4] sm:$0xf]
      %v644 = vld [vmem:[%s5] sm:$0xff]
      %v645 = vld [vmem:[%s5 + $0x8] sm:$0xff]
      %647 = vset.pattern.permute.xlu0 0
      %648 = vperm.xlu0 %647, %v644
      %v649 = vpop.permute.xlu0 %648
      %652 = vset.pattern.permute.xlu0 0
      %653 = vperm.xlu0 %652, %v645
      %v654 = vpop.permute.xlu0 %653
      %v658 = vunpack.c.l.b16 %v642
      %v659 = vunpack.c.l.b16 %v643
      %v660 = vpack.c.b16 %v659, %v658
      %661 = vrot.lane.b32.xlu0 %v623, 124
      %v662 = vpop.permute.xlu0 %661
      %663 = vrot.lane.b32.xlu0 %v621, 124
      %v664 = vpop.permute.xlu0 %663
      %665 = vrot.lane.b32.xlu0 %v629, 124
      %v666 = vpop.permute.xlu0 %665
      %667 = vrot.lane.b32.xlu0 %v627, 124
      %v668 = vpop.permute.xlu0 %667
      %669 = vrot.lane.b32.xlu0 %v635, 124
      %v670 = vpop.permute.xlu0 %669
      %671 = vrot.lane.b32.xlu0 %v633, 124
      %v672 = vpop.permute.xlu0 %671
      %673 = vrot.lane.b32.xlu0 %v641, 124
      %v674 = vpop.permute.xlu0 %673
      %675 = vrot.lane.b32.xlu0 %v639, 124
      %v676 = vpop.permute.xlu0 %675
      %v677 = vsel %vm640, %v662, %v664
      %v678 = vsel %vm640, %v666, %v668
      %v679 = vsel %vm640, %v670, %v672
      %v680 = vsel %vm640, %v674, %v676
      %vm686 = vcmask 654336
      %v688 = vsel %vm686, %v660, 0
      %690 = vmatprep.subr.bf16.mxu0 0
      %691 = vmatpush1.bf16.msra.mxu0 %v641
      %692 = vmatprep.subr.bf16.mxu0 0
      %693 = vmatpush1.bf16.msra.mxu0 %v677
      %694 = vmatprep.subr.bf16.mxu0 0
      %695 = vmatpush1.bf16.msra.mxu0 %v678
      %696 = vmatprep.subr.bf16.mxu0 0
      %697 = vmatpush1.bf16.msra.mxu0 %v679
      %698 = vmatprep.subr.bf16.mxu0 0
      %699 = vmatpush1.bf16.msra.mxu0 %v680
      %700 = vmatprep.subr.bf16.mxu0 0
      %701 = vmatpush1.bf16.msra.mxu0 0
      %702 = vmatprep.subr.bf16.mxu0 0
      %703 = vmatpush1.bf16.msra.mxu0 0
      %704 = vmatprep.subr.bf16.mxu0 0
      %705 = vmatpush1.bf16.msra.mxu0 0
      %706 = vmatprep.subr.bf16.mxu0 0
      %707 = vmatpush1.bf16.msra.mxu0 0
      %708 = vmatprep.subr.bf16.mxu0 0
      %709 = vmatpush1.bf16.msra.mxu0 0
      %710 = vmatprep.subr.bf16.mxu0 0
      %711 = vmatpush1.bf16.msra.mxu0 0
      %712 = vmatprep.subr.bf16.mxu0 0
      %713 = vmatpush1.bf16.msra.mxu0 0
      %714 = vmatprep.subr.bf16.mxu0 0
      %715 = vmatpush1.bf16.msra.mxu0 0
      %716 = vmatprep.subr.bf16.mxu0 0
      %717 = vmatpush1.bf16.msra.mxu0 0
      %718 = vmatprep.subr.bf16.mxu0 0
      %719 = vmatpush1.bf16.msra.mxu0 0
      %720 = vmatprep.subr.bf16.mxu0 0
      %721 = vmatpush1.bf16.msra.mxu0 0
      %722 = vmatprep.mubr.bf16.mxu0 0
      %723 = vmatmul.mubr.bf16.gmra.mrb[0].mxu0 %v688
      %v724 = vpop.f32.mrb[0].mxu0
      %v725 = vadd.f32 %v649, %v724
      %v726 = vpop.f32.mrb[0].mxu0
      %v727 = vpop.f32.mrb[0].mxu0
      %v728 = vadd.f32 %v654, %v727
      %v729 = vpop.f32.mrb[0].mxu0
      %730 = vdwg.mxu0
      %v731 = vmul.f32 %v725, %v572
      %v732 = vmul.f32 %v728, %v577
      %v733 = vadd.f32 %v731, %v592
      %v734 = vadd.f32 %v732, %v597
      %v735 = vpack.c.bf16 %v734, %v733
      %737 = vrot.lane.b32.xlu0 %v735, 8
      %v738 = vpop.permute.xlu0 %737
      %740 = vst.msk [vmem:[#allocation2] sm:$0xff] %vm611, %v738
      %741 = vst.msk [vmem:[#allocation2 + $0x8] sm:$0xff] %vm321, %v738
      %v742 = vld [vmem:[#allocation2] sm:$0xff]
      %v743 = vld [vmem:[#allocation2 + $0x8] sm:$0xff]
      %746 = vrot.lane.b32.xlu0 %v742, 126
      %v747 = vpop.permute.xlu0 %746
      %748 = vrot.lane.b32.xlu0 %v743, 126
      %v749 = vpop.permute.xlu0 %748
      %v750 = vsel %vm628, %v747, %v749
      %752 = vrot.lane.b32.xlu0 %v742, 124
      %v753 = vpop.permute.xlu0 %752
      %754 = vrot.lane.b32.xlu0 %v743, 124
      %v755 = vpop.permute.xlu0 %754
      %v756 = vsel %vm640, %v753, %v755
      %758 = vrot.lane.b32.xlu0 %v742, 122
      %v759 = vpop.permute.xlu0 %758
      %760 = vrot.lane.b32.xlu0 %v743, 122
      %v761 = vpop.permute.xlu0 %760
      %vm762 = vcmask 998400
      %v763 = vsel %vm762, %v759, %v761
      %765 = vrot.lane.b32.xlu0 %v742, 120
      %v766 = vpop.permute.xlu0 %765
      %767 = vrot.lane.b32.xlu0 %v743, 120
      %v768 = vpop.permute.xlu0 %767
      %vm769 = vcmask 982016
      %v770 = vsel %vm769, %v766, %v768
      %s772 = scalar_lea.vmem %s4, 8
      %v773 = vld [vmem:[%s772] sm:$0xf]
      %v774 = vld [vmem:[%s772 + $0x4] sm:$0xf]
      %s775 = scalar_lea.vmem %s5, 16
      %v776 = vld [vmem:[%s775] sm:$0xff]
      %v777 = vld [vmem:[%s775 + $0x8] sm:$0xff]
      %779 = vset.pattern.permute.xlu0 0
      %780 = vperm.xlu0 %779, %v776
      %v781 = vpop.permute.xlu0 %780
      %784 = vset.pattern.permute.xlu0 0
      %785 = vperm.xlu0 %784, %v777
      %v786 = vpop.permute.xlu0 %785
      %v790 = vunpack.c.l.b16 %v773
      %v791 = vunpack.c.l.b16 %v774
      %v792 = vpack.c.b16 %v791, %v790
      %v794 = vsel %vm686, %v792, 0
      %796 = vmatprep.subr.bf16.mxu0 0
      %797 = vmatpush1.bf16.msra.mxu0 %v742
      %798 = vmatprep.subr.bf16.mxu0 0
      %799 = vmatpush1.bf16.msra.mxu0 %v750
      %800 = vmatprep.subr.bf16.mxu0 0
      %801 = vmatpush1.bf16.msra.mxu0 %v756
      %802 = vmatprep.subr.bf16.mxu0 0
      %803 = vmatpush1.bf16.msra.mxu0 %v763
      %804 = vmatprep.subr.bf16.mxu0 0
      %805 = vmatpush1.bf16.msra.mxu0 %v770
      %806 = vmatprep.subr.bf16.mxu0 0
      %807 = vmatpush1.bf16.msra.mxu0 0
      %808 = vmatprep.subr.bf16.mxu0 0
      %809 = vmatpush1.bf16.msra.mxu0 0
      %810 = vmatprep.subr.bf16.mxu0 0
      %811 = vmatpush1.bf16.msra.mxu0 0
      %812 = vmatprep.subr.bf16.mxu0 0
      %813 = vmatpush1.bf16.msra.mxu0 0
      %814 = vmatprep.subr.bf16.mxu0 0
      %815 = vmatpush1.bf16.msra.mxu0 0
      %816 = vmatprep.subr.bf16.mxu0 0
      %817 = vmatpush1.bf16.msra.mxu0 0
      %818 = vmatprep.subr.bf16.mxu0 0
      %819 = vmatpush1.bf16.msra.mxu0 0
      %820 = vmatprep.subr.bf16.mxu0 0
      %821 = vmatpush1.bf16.msra.mxu0 0
      %822 = vmatprep.subr.bf16.mxu0 0
      %823 = vmatpush1.bf16.msra.mxu0 0
      %824 = vmatprep.subr.bf16.mxu0 0
      %825 = vmatpush1.bf16.msra.mxu0 0
      %826 = vmatprep.subr.bf16.mxu0 0
      %827 = vmatpush1.bf16.msra.mxu0 0
      %828 = vmatprep.mubr.bf16.mxu0 0
      %829 = vmatmul.mubr.bf16.gmra.mrb[0].mxu0 %v794
      %v830 = vpop.f32.mrb[0].mxu0
      %v831 = vadd.f32 %v781, %v830
      %v832 = vpop.f32.mrb[0].mxu0
      %v833 = vpop.f32.mrb[0].mxu0
      %v834 = vadd.f32 %v786, %v833
      %v835 = vpop.f32.mrb[0].mxu0
      %836 = vdwg.mxu0
      %837 = vst [vmem:[%s319] sm:$0xff] %v831
      %838 = vst [vmem:[%s319 + $0x8] sm:$0xff] %v834
      %p839 = scmp.lt.s32.totalorder %s21, 1
      %s840 = scalar_select %p839, %s21, 1
      %p841 = scmp.lt.s32.totalorder %s22, 0
      %s842 = scalar_select %p841, %s22, 0
      %s843 = smul.addr %s840, 2
      %s844 = sadd.s32 %s842, %s843
      %s845 = smul.addr %s844, 8
      %s846 = scalar_lea.vmem %s6, %s845
      // Predicated region
      $region45: #{filter_forward.12} parent=43 // pred_check
        %p847 = pneg %p192
      $region46: #{filter_forward.12} parent=43 // pred_check_branch
        %849 = sbr.rel (%p847) target = $region48
      $region47: #{filter_forward.12} parent=43 // pred_region
        _
      $region48: #{filter_forward.12} parent=43 // pred_fallthru
        _
    $region44: #{filter_forward.12} parent=5 // pred_fallthru
      _
    %p850 = scmp.le.s32.totalorder 2, %s12
    // Predicated region
    $region49: #{filter_forward.12} parent=5 // pred_check
      %p851 = pneg %p850
    $region50: #{filter_forward.12} parent=5 // pred_check_branch
      %853 = sbr.rel (%p851) target = $region52
    $region51: #{filter_forward.12} parent=5 // pred_region
      %s854 = ssub.s32 %s12, 2
      // Predicated region
      $region53: #{filter_forward.12} parent=51 // pred_check
        %p855 = pneg %p198
      $region54: #{filter_forward.12} parent=51 // pred_check_branch
        %857 = sbr.rel (%p855) target = $region56
      $region55: #{filter_forward.12} parent=51 // pred_region
        %p858 = scmp.lt.s32.totalorder %s23, 1
        %s859 = scalar_select %p858, %s23, 1
        %p860 = scmp.lt.s32.totalorder %s24, 0
        %s861 = scalar_select %p860, %s24, 0
        %s862 = smul.addr %s859, 2
        %s863 = sadd.s32 %s861, %s862
        %s864 = smul.addr %s863, 8
        %s865 = scalar_lea.vmem %s6, %s864
      $region56: #{filter_forward.12} parent=51 // pred_fallthru
        _
    $region52: #{filter_forward.12} parent=5 // pred_fallthru
      _
  $region6: #{filter_forward.12} parent=0 // loop_footer
    %s16 = sadd.s32 1, %s12
  $region7: #{filter_forward.12} parent=0 // loop_footer_branch
    %11 = sbr.rel target = $region3
  $region8: #{filter_forward.12} parent=0 // loop_exit
    _

// kernel: filter_forward.15
$region0: #{filter_forward.15}
  #allocation0 [shape = 'u32[]', space=smem, size = 0x4, offset = 0x4, fixed_abs, tag = 'smem constant byte address 0x4 - core index']
  #allocation1 [shape = 'u32[144,128]{1,0:T(1,128)}', space=vmem, size = 0x12000, scoped, tag = 'internal scratch']
  #allocation2 [shape = 'f32[1,1]{1,0:T(1,128)S(1)}', space=vmem, size = 0x200, scoped, tag = 'scoped memory for filter_forward.15']
  %s0 = inlined_call_operand.vmem [shape: f32[2,8,262], index: 0, kind: input, shape index: {}]
  %s1 = inlined_call_operand.vmem [shape: bf16[1,56], index: 1, kind: input, shape index: {}]
  %s2 = inlined_call_operand.<no memory space> [shape: f32[1,1], index: 2, kind: input, shape index: {}]
  %s3 = inlined_call_operand.hbm [shape: f32[2,1,256], index: 3, kind: output, shape index: {}]
  %s4 = sld [smem:[#allocation0]]
  $region45: #{filter_forward.15} parent=0
    _
  %s6 = ssub.s32 1, %s4
  %s7 = scalar_select 0, %s6, %s4
  %v8 = vstv %s2
  %9 = vst [vmem:[#allocation2] sm:$0x1] %v8
  $region1: #{filter_forward.15} parent=0
    #allocation3 [shape = 'u8[2048]{0}', space=vmem, size = 0x800, scoped, tag = 'output window, operand 0']
    #allocation4 [shape = 's32[2]{0}', space=sflag, size = 0x8, scoped, tag = 'scoped memory for filter_forward.15']
    %10 = vsyncpa [#allocation4], 0
    %s11 = scalar_lea.sflag [#allocation4], 1
    %12 = vsyncpa %s11, 0
    loop: start=0, step=1, limit=4
    $region2: #{filter_forward.15} parent=1 // loop_pre_header
      _
    $region3: #{filter_forward.15} parent=1 // loop_header
      %s14 = sphi 0, %s18
      %p15 = scmp.ge.s32.totalorder %s14, 4
      %s24 = sphi 0, %s26
      %s27 = sphi 0, %s24
      %s28 = sphi 0, %s27
      %s44 = sphi 0, %s28
      %s48 = sphi 0, %s48
      %s50 = sphi 0, %s48
      %s51 = sphi 0, %s50
      %s65 = sphi 0, %s51
      %s69 = sphi 0, %s69
      %s71 = sphi 0, %s69
      %s72 = sphi 0, %s71
      %s86 = sphi 0, %s72
      %s92 = sphi 0, %s94
      %s95 = sphi 0, %s92
      %s96 = sphi 0, %s95
      %s112 = sphi 0, %s96
    $region4: #{filter_forward.15} parent=1 // loop_header_branch
      %17 = sbr.rel (%p15) target = $region8
    $region5: #{filter_forward.15} parent=1 // loop_body
      %s19 = ssub.s32 %s14, 1
      %s20 = ssub.s32 %s14, 2
      %s21 = sadd.s32 %s14, 1
      %s22 = ssub.s32 %s14, %s21
      %p23 = scmp.eq.s32.totalorder %s22, 0
      %s25 = sadd.s32 %s24, 1
      %s26 = scalar_select %p23, %s24, %s25
      %p29 = pneg %p23
      %p30 = scmp.eq.s32.totalorder %s14, 1
      %p31 = por %p29, %p30
      %p32 = scmp.ne.s32.totalorder %s24, %s27
      %p33 = scmp.eq.s32.totalorder %s14, 0
      %p34 = por %p32, %p33
      %p35 = scmp.ne.s32.totalorder %s24, %s27
      %p36 = scmp.eq.s32.totalorder %s19, 1
      %p37 = por %p35, %p36
      %p38 = scmp.ne.s32.totalorder %s27, %s28
      %p39 = scmp.eq.s32.totalorder %s19, 0
      %p40 = por %p38, %p39
      %p41 = scmp.ne.s32.totalorder %s27, %s28
      %p42 = scmp.eq.s32.totalorder %s20, 1
      %p43 = por %p41, %p42
      %p45 = scmp.ne.s32.totalorder %s28, %s44
      %p46 = scmp.eq.s32.totalorder %s20, 0
      %p47 = por %p45, %p46
      %s49 = sadd.s32 %s48, 1
      %p52 = scmp.eq.s32.totalorder %s14, 1
      %p53 = scmp.ne.s32.totalorder %s48, %s50
      %p54 = scmp.eq.s32.totalorder %s14, 0
      %p55 = por %p53, %p54
      %p56 = scmp.ne.s32.totalorder %s48, %s50
      %p57 = scmp.eq.s32.totalorder %s19, 1
      %p58 = por %p56, %p57
      %p59 = scmp.ne.s32.totalorder %s50, %s51
      %p60 = scmp.eq.s32.totalorder %s19, 0
      %p61 = por %p59, %p60
      %p62 = scmp.ne.s32.totalorder %s50, %s51
      %p63 = scmp.eq.s32.totalorder %s20, 1
      %p64 = por %p62, %p63
      %p66 = scmp.ne.s32.totalorder %s51, %s65
      %p67 = scmp.eq.s32.totalorder %s20, 0
      %p68 = por %p66, %p67
      %s70 = sadd.s32 %s69, 1
      %p73 = scmp.eq.s32.totalorder %s14, 1
      %p74 = scmp.ne.s32.totalorder %s69, %s71
      %p75 = scmp.eq.s32.totalorder %s14, 0
      %p76 = por %p74, %p75
      %p77 = scmp.ne.s32.totalorder %s69, %s71
      %p78 = scmp.eq.s32.totalorder %s19, 1
      %p79 = por %p77, %p78
      %p80 = scmp.ne.s32.totalorder %s71, %s72
      %p81 = scmp.eq.s32.totalorder %s19, 0
      %p82 = por %p80, %p81
      %p83 = scmp.ne.s32.totalorder %s71, %s72
      %p84 = scmp.eq.s32.totalorder %s20, 1
      %p85 = por %p83, %p84
      %p87 = scmp.ne.s32.totalorder %s72, %s86
      %p88 = scmp.eq.s32.totalorder %s20, 0
      %p89 = por %p87, %p88
      %s90 = ssub.s32 %s14, %s21
      %p91 = scmp.eq.s32.totalorder %s90, 0
      %s93 = sadd.s32 %s92, 1
      %s94 = scalar_select %p91, %s92, %s93
      %p97 = pneg %p91
      %p98 = scmp.eq.s32.totalorder %s14, 1
      %p99 = por %p97, %p98
      %p100 = scmp.ne.s32.totalorder %s92, %s95
      %p101 = scmp.eq.s32.totalorder %s14, 0
      %p102 = por %p100, %p101
      %p103 = scmp.ne.s32.totalorder %s92, %s95
      %p104 = scmp.eq.s32.totalorder %s19, 1
      %p105 = por %p103, %p104
      %p106 = scmp.ne.s32.totalorder %s95, %s96
      %p107 = scmp.eq.s32.totalorder %s19, 0
      %p108 = por %p106, %p107
      %p109 = scmp.ne.s32.totalorder %s95, %s96
      %p110 = scmp.eq.s32.totalorder %s20, 1
      %p111 = por %p109, %p110
      %p113 = scmp.ne.s32.totalorder %s96, %s112
      %p114 = scmp.eq.s32.totalorder %s20, 0
      %p115 = por %p113, %p114
      %p116 = scmp.le.s32.totalorder 1, %s14
      %p117 = scmp.lt.s32.totalorder %s14, 3
      %p118 = pnand %p116, %p117
      %p119 = pneg %p118
      // Predicated region
      $region9: #{filter_forward.15} parent=5 // pred_check
        _
      $region10: #{filter_forward.15} parent=5 // pred_check_branch
        %121 = sbr.rel (%p118) target = $region12
      $region11: #{filter_forward.15} parent=5 // pred_region
        %s122 = ssub.s32 %s14, 1
        // Predicated region
        $region13: #{filter_forward.15} parent=11 // pred_check
          %p123 = pneg %p61
        $region14: #{filter_forward.15} parent=11 // pred_check_branch
          %125 = sbr.rel (%p123) target = $region16
        $region15: #{filter_forward.15} parent=11 // pred_region
          _
        $region16: #{filter_forward.15} parent=11 // pred_fallthru
          _
        // Predicated region
        $region17: #{filter_forward.15} parent=11 // pred_check
          %p126 = pneg %p82
        $region18: #{filter_forward.15} parent=11 // pred_check_branch
          %128 = sbr.rel (%p126) target = $region20
        $region19: #{filter_forward.15} parent=11 // pred_region
          _
        $region20: #{filter_forward.15} parent=11 // pred_fallthru
          _
      $region12: #{filter_forward.15} parent=5 // pred_fallthru
        _
      %p129 = scmp.lt.s32.totalorder %s14, 2
      // Predicated region
      $region21: #{filter_forward.15} parent=5 // pred_check
        %p130 = pneg %p129
      $region22: #{filter_forward.15} parent=5 // pred_check_branch
        %132 = sbr.rel (%p130) target = $region24
      $region23: #{filter_forward.15} parent=5 // pred_region
        // Predicated region
        $region25: #{filter_forward.15} parent=23 // pred_check
          %p133 = pneg %p34
        $region26: #{filter_forward.15} parent=23 // pred_check_branch
          %135 = sbr.rel (%p133) target = $region28
        $region27: #{filter_forward.15} parent=23 // pred_region
          %p136 = scmp.lt.s32.totalorder %s14, 1
          %s137 = scalar_select %p136, %s14, 1
          %s138 = smul.addr %s137, 3
          %s139 = smul.addr %s138, 8
          %s140 = scalar_lea.vmem %s0, %s139
        $region28: #{filter_forward.15} parent=23 // pred_fallthru
          _
      $region24: #{filter_forward.15} parent=5 // pred_fallthru
        _
      %p141 = scmp.le.s32.totalorder 1, %s14
      %p142 = scmp.lt.s32.totalorder %s14, 3
      %p143 = pnand %p141, %p142
      %p144 = pneg %p143
      // Predicated region
      $region29: #{filter_forward.15} parent=5 // pred_check
        _
      $region30: #{filter_forward.15} parent=5 // pred_check_branch
        %146 = sbr.rel (%p143) target = $region32
      $region31: #{filter_forward.15} parent=5 // pred_region
        %s147 = ssub.s32 %s14, 1
        %p148 = scmp.lt.s32.totalorder %s19, 1
        %s149 = scalar_select %p148, %s19, 1
        %s150 = smul.addr %s149, 3
        %s151 = smul.addr %s150, 8
        %s152 = scalar_lea.vmem %s0, %s151
        %p153 = pneg %p40
        %p154 = pneg %p37
        %p155 = pneg %p61
        %p156 = pneg %p58
        %p157 = pneg %p82
        %p158 = pneg %p79
        %p159 = pneg %p108
        %p160 = pneg %p105
        %s161 = sand.u32 %s95, 1
        %s162 = scalar_lea.sflag [#allocation4], %s161
        %s163 = sand.u32 %s95, 1
        %s164 = smul.addr %s163, 2
        %s165 = scalar_lea.vmem [#allocation3], %s164
        %p166 = scmp.lt.s32.totalorder %s19, 1
        %s167 = scalar_select %p166, %s19, 1
        %s168 = smul.addr %s167, 3
        %s169 = smul.addr %s168, 8
        %s170 = scalar_lea.vmem %s0, %s169
        %v172 = vld [vmem:[%s170] sm:$0xff]
        %v173 = vld [vmem:[%s170 + $0x8] sm:$0xff]
        %v174 = vpack.c.bf16 %v172, %v172
        %v175 = vpack.c.bf16 %v173, %v173
        %v176 = vld [vmem:[%s170 + $0x10] sm:$0xff]
        %v177 = vpack.c.bf16 %v176, %v176
        %v181 = vrot.slane %v174, 4
        %v182 = vrot.slane %v175, 4
        %v183 = vrot.slane %v177, 4
        %184 = vrot.lane.b32.xlu0 %v181, 127
        %v185 = vpop.permute.xlu0 %184
        %186 = vrot.lane.b32.xlu0 %v182, 127
        %v187 = vpop.permute.xlu0 %186
        %188 = vrot.lane.b32.xlu0 %v183, 127
        %v189 = vpop.permute.xlu0 %188
        %vm190 = vcmask 1039360
        %v191 = vsel %vm190, %v185, %v187
        %v192 = vsel %vm190, %v187, %v189
        %193 = vrot.lane.b32.xlu0 %v174, 126
        %v194 = vpop.permute.xlu0 %193
        %195 = vrot.lane.b32.xlu0 %v175, 126
        %v196 = vpop.permute.xlu0 %195
        %197 = vrot.lane.b32.xlu0 %v177, 126
        %v198 = vpop.permute.xlu0 %197
        %vm199 = vcmask 1031168
        %v200 = vsel %vm199, %v194, %v196
        %v201 = vsel %vm199, %v196, %v198
        %202 = vrot.lane.b32.xlu0 %v181, 125
        %v203 = vpop.permute.xlu0 %202
        %204 = vrot.lane.b32.xlu0 %v182, 125
        %v205 = vpop.permute.xlu0 %204
        %206 = vrot.lane.b32.xlu0 %v183, 125
        %v207 = vpop.permute.xlu0 %206
        %vm208 = vcmask 1022976
        %v209 = vsel %vm208, %v203, %v205
        %v210 = vsel %vm208, %v205, %v207
        %211 = vrot.lane.b32.xlu0 %v174, 124
        %v212 = vpop.permute.xlu0 %211
        %213 = vrot.lane.b32.xlu0 %v175, 124
        %v214 = vpop.permute.xlu0 %213
        %215 = vrot.lane.b32.xlu0 %v177, 124
        %v216 = vpop.permute.xlu0 %215
        %vm217 = vcmask 1014784
        %v218 = vsel %vm217, %v212, %v214
        %v219 = vsel %vm217, %v214, %v216
        %220 = vrot.lane.b32.xlu0 %v181, 123
        %v221 = vpop.permute.xlu0 %220
        %222 = vrot.lane.b32.xlu0 %v182, 123
        %v223 = vpop.permute.xlu0 %222
        %224 = vrot.lane.b32.xlu0 %v183, 123
        %v225 = vpop.permute.xlu0 %224
        %vm226 = vcmask 1006592
        %v227 = vsel %vm226, %v221, %v223
        %v228 = vsel %vm226, %v223, %v225
        %229 = vrot.lane.b32.xlu0 %v174, 122
        %v230 = vpop.permute.xlu0 %229
        %231 = vrot.lane.b32.xlu0 %v175, 122
        %v232 = vpop.permute.xlu0 %231
        %233 = vrot.lane.b32.xlu0 %v177, 122
        %v234 = vpop.permute.xlu0 %233
        %vm235 = vcmask 998400
        %v236 = vsel %vm235, %v230, %v232
        %v237 = vsel %vm235, %v232, %v234
        %vm238 = vcmask 1043456
        %v241 = vsel %vm238, %v174, %v191
        %v245 = vsel %vm238, %v175, %v192
        %v249 = vsel %vm238, %v200, %v209
        %v253 = vsel %vm238, %v201, %v210
        %v257 = vsel %vm238, %v218, %v227
        %v261 = vsel %vm238, %v219, %v228
        %v263 = vld [vmem:[%s1] sm:$0x1]
        %v264 = vld [vmem:[#allocation2] sm:$0x1]
        %266 = vset.pattern.permute.xlu0 0
        %267 = vperm.xlu0 %266, %v264
        %v268 = vpop.permute.xlu0 %267
        %v270 = vlaneseq
        %v271 = vshrl.u32 %v270, 7
        %v272 = vsub.s32 0, %v271
        %v273 = vrot.slane %v268, %v272
        %vm274 = vcmask 457728
        %v276 = vsel %vm274, %v263, 0
        %v279 = vsel %vm238, %v236, 0
        %v282 = vsel %vm238, %v237, 0
        %284 = vmatprep.subr.bf16.mxu0 %v245
        %285 = vmatpush1.bf16.msra.mxu0 %v241
        %286 = vmatprep.subr.bf16.mxu0 %v253
        %287 = vmatpush1.bf16.msra.mxu0 %v249
        %288 = vmatprep.subr.bf16.mxu0 %v261
        %289 = vmatpush1.bf16.msra.mxu0 %v257
        %290 = vmatprep.subr.bf16.mxu0 %v282
        %291 = vmatpush1.bf16.msra.mxu0 %v279
        %292 = vmatprep.subr.bf16.mxu0 0
        %293 = vmatpush1.bf16.msra.mxu0 0
        %294 = vmatprep.subr.bf16.mxu0 0
        %295 = vmatpush1.bf16.msra.mxu0 0
        %296 = vmatprep.subr.bf16.mxu0 0
        %297 = vmatpush1.bf16.msra.mxu0 0
        %298 = vmatprep.subr.bf16.mxu0 0
        %299 = vmatpush1.bf16.msra.mxu0 0
        %300 = vmatprep.subr.bf16.mxu0 0
        %301 = vmatpush1.bf16.msra.mxu0 0
        %302 = vmatprep.subr.bf16.mxu0 0
        %303 = vmatpush1.bf16.msra.mxu0 0
        %304 = vmatprep.subr.bf16.mxu0 0
        %305 = vmatpush1.bf16.msra.mxu0 0
        %306 = vmatprep.subr.bf16.mxu0 0
        %307 = vmatpush1.bf16.msra.mxu0 0
        %308 = vmatprep.subr.bf16.mxu0 0
        %309 = vmatpush1.bf16.msra.mxu0 0
        %310 = vmatprep.subr.bf16.mxu0 0
        %311 = vmatpush1.bf16.msra.mxu0 0
        %312 = vmatprep.subr.bf16.mxu0 0
        %313 = vmatpush1.bf16.msra.mxu0 0
        %314 = vmatprep.subr.bf16.mxu0 0
        %315 = vmatpush1.bf16.msra.mxu0 0
        %316 = vmatprep.mubr.bf16.mxu0 0
        %317 = vmatmul.mubr.bf16.gmra.mrb[0].mxu0 %v276
        %v318 = vpop.f32.mrb[0].mxu0
        %v319 = vadd.f32 %v273, %v318
        %v320 = vpop.f32.mrb[0].mxu0
        %v321 = vadd.f32 %v273, %v320
        %v322 = vpop.f32.mrb[0].mxu0
        %v323 = vpop.f32.mrb[0].mxu0
        %324 = vdwg.mxu0
        %v325 = vtanh.pop %v319
        %v326 = vtanh.pop %v321
        %v329 = vcombine.low %v325, %v326
        %v331 = vunpack.c.l.s4 1966171168
        %v332 = vunpack.c.0.s8 %v331
        %v333 = vlaneseq
        %v334 = vshrl.u32 %v333, 7
        %v335 = vsub.s32 %v332, %v334
        %v336 = vrot.slane %v329, %v335
        %v338 = vunpack.c.l.s4 1966171168
        %v339 = vunpack.c.0.s8 %v338
        %v340 = vlaneseq
        %v341 = vshrl.u32 %v340, 7
        %v342 = vsub.s32 %v339, %v341
        %v343 = vrot.slane %v336, %v342
        %v345 = vlaneseq
        %vm346 = vcmp.ge.s32.totalorder %v345, 0
        %vm347 = vcmp.lt.s32.totalorder %v345, 256
        %vm348 = vmand %vm346, %vm347
        %349 = vst.msk [vmem:[%s165] sm:$0x3] %vm348, %v343
        %s350 = sand.u32 %s95, 1
        %s351 = scalar_lea.sflag [#allocation4], %s350
        %s352 = sand.u32 %s95, 1
        %s353 = smul.addr %s352, 2
        %s354 = scalar_lea.vmem [#allocation3], %s353
        // Predicated region
        $region33: #{filter_forward.15} parent=31 // pred_check
          %p355 = pneg %p105
        $region34: #{filter_forward.15} parent=31 // pred_check_branch
          %357 = sbr.rel (%p355) target = $region36
        $region35: #{filter_forward.15} parent=31 // pred_region
          %s359 = ssub.s32 32, 32
          %360 = vsyncadd %s351, %s359
          %s361 = smul.addr %s19, 2
          %s362 = smul.addr %s361, 16
          %s363 = scalar_lea.hbm %s3, %s362
          %s365 = sshll.u32 %s354, 4
          %s366 = int_to_ptr.vmem [resolvable:$true] %s365
          %368 = dma.vmem_to_hbm [thread:$0]  %s366, 32, %s363, %s351
        $region36: #{filter_forward.15} parent=31 // pred_fallthru
          _
      $region32: #{filter_forward.15} parent=5 // pred_fallthru
        _
      %p369 = scmp.le.s32.totalorder 2, %s14
      // Predicated region
      $region37: #{filter_forward.15} parent=5 // pred_check
        %p370 = pneg %p369
      $region38: #{filter_forward.15} parent=5 // pred_check_branch
        %372 = sbr.rel (%p370) target = $region40
      $region39: #{filter_forward.15} parent=5 // pred_region
        %s373 = ssub.s32 %s14, 2
        // Predicated region
        $region41: #{filter_forward.15} parent=39 // pred_check
          %p374 = pneg %p111
        $region42: #{filter_forward.15} parent=39 // pred_check_branch
          %376 = sbr.rel (%p374) target = $region44
        $region43: #{filter_forward.15} parent=39 // pred_region
          %s377 = sand.u32 %s96, 1
          %s378 = scalar_lea.sflag [#allocation4], %s377
          %s379 = sand.u32 %s96, 1
          %s380 = smul.addr %s379, 2
          %s381 = scalar_lea.vmem [#allocation3], %s380
          %382 = dma.done %s378, 32
        $region44: #{filter_forward.15} parent=39 // pred_fallthru
          _
      $region40: #{filter_forward.15} parent=5 // pred_fallthru
        _
    $region6: #{filter_forward.15} parent=1 // loop_footer
      %s18 = sadd.s32 1, %s14
    $region7: #{filter_forward.15} parent=1 // loop_footer_branch
      %13 = sbr.rel target = $region3
    $region8: #{filter_forward.15} parent=1 // loop_exit
      _
    %383 = vsyncpa [#allocation4], 1
    %s384 = scalar_lea.sflag [#allocation4], 1
    %385 = vsyncpa %s384, 1

// kernel: filter_forward.14
$region0: #{filter_forward.14}
  #allocation0 [shape = 'u32[]', space=smem, size = 0x4, offset = 0x4, fixed_abs, tag = 'smem constant byte address 0x4 - core index']
  #allocation1 [shape = 'u32[144,128]{1,0:T(1,128)}', space=vmem, size = 0x12000, scoped, tag = 'internal scratch']
  #allocation2 [shape = 'bf16[8,136]{1,0:T(8,128)(2,1)}', space=vmem, size = 0x1000, scoped, tag = 'scratch operand']
  #allocation3 [shape = 'bf16[8,4]{1,0:T(8,128)(2,1)}', space=vmem, size = 0x800, scoped, tag = 'scratch operand']
  #allocation4 [shape = 'bf16[8,8]{1,0:T(8,128)(2,1)}', space=vmem, size = 0x800, scoped, tag = 'scratch operand']
  %s0 = inlined_call_operand.vmem [shape: f32[2,33,8], index: 0, kind: input, shape index: {}]
  %s1 = inlined_call_operand.vmem [shape: f32[2,8,256], index: 1, kind: input, shape index: {}]
  %s2 = inlined_call_operand.vmem [shape: f32[8,256], index: 2, kind: input, shape index: {}]
  %s3 = inlined_call_operand.vmem [shape: f32[32,33], index: 3, kind: input, shape index: {}]
  %s4 = inlined_call_operand.vmem [shape: bf16[2,8,40], index: 4, kind: input, shape index: {}]
  %s5 = inlined_call_operand.vmem [shape: f32[2,8,1], index: 5, kind: input, shape index: {}]
  %s6 = inlined_call_operand.vmem [shape: f32[2,8,256], index: 6, kind: output, shape index: {}]
  %s7 = sld [smem:[#allocation0]]
  $region61: #{filter_forward.14} parent=0
    _
  %s9 = ssub.s32 1, %s7
  %s10 = scalar_select 0, %s9, %s7
  loop: start=0, step=1, limit=6
  $region2: #{filter_forward.14} parent=0 // loop_pre_header
    _
  $region3: #{filter_forward.14} parent=0 // loop_header
    %s12 = sphi 0, %s16
    %p13 = scmp.ge.s32.totalorder %s12, 6
    %s19 = sphi 0, %s31
    %s20 = sphi 0, %s27
    %s21 = sphi 0, %s19
    %s22 = sphi 0, %s20
    %s23 = sphi 0, %s21
    %s24 = sphi 0, %s22
    %s34 = sphi 0, %s36
    %s37 = sphi 0, %s34
    %s38 = sphi 0, %s37
    %s54 = sphi 0, %s38
    %s62 = sphi 0, %s64
    %s65 = sphi 0, %s62
    %s66 = sphi 0, %s65
    %s82 = sphi 0, %s66
    %s88 = sphi 0, %s90
    %s91 = sphi 0, %s88
    %s92 = sphi 0, %s91
    %s108 = sphi 0, %s92
    %s112 = sphi 0, %s112
    %s114 = sphi 0, %s112
    %s115 = sphi 0, %s114
    %s129 = sphi 0, %s115
    %s133 = sphi 0, %s133
    %s135 = sphi 0, %s133
    %s136 = sphi 0, %s135
    %s150 = sphi 0, %s136
    %s154 = sphi 0, %s154
    %s156 = sphi 0, %s154
    %s157 = sphi 0, %s156
    %s171 = sphi 0, %s157
    %s179 = sphi 0, %s181
    %s182 = sphi 0, %s179
    %s183 = sphi 0, %s182
    %s199 = sphi 0, %s183
  $region4: #{filter_forward.14} parent=0 // loop_header_branch
    %15 = sbr.rel (%p13) target = $region8
  $region5: #{filter_forward.14} parent=0 // loop_body
    %s17 = ssub.s32 %s12, 1
    %s18 = ssub.s32 %s12, 2
    %s25 = sadd.s32 1, %s20
    %p26 = scmp.ge.s32.totalorder %s25, 2
    %s27 = scalar_select %p26, 0, %s25
    %s28 = sadd.s32 1, %s19
    %s29 = scalar_select %p26, %s28, %s19
    %p30 = scmp.ge.s32.totalorder %s29, 2
    %s31 = scalar_select %p30, 0, %s29
    %s32 = ssub.s32 %s19, %s31
    %p33 = scmp.eq.s32.totalorder %s32, 0
    %s35 = sadd.s32 %s34, 1
    %s36 = scalar_select %p33, %s34, %s35
    %p39 = pneg %p33
    %p40 = scmp.eq.s32.totalorder %s12, 3
    %p41 = por %p39, %p40
    %p42 = scmp.ne.s32.totalorder %s34, %s37
    %p43 = scmp.eq.s32.totalorder %s12, 0
    %p44 = por %p42, %p43
    %p45 = scmp.ne.s32.totalorder %s34, %s37
    %p46 = scmp.eq.s32.totalorder %s17, 3
    %p47 = por %p45, %p46
    %p48 = scmp.ne.s32.totalorder %s37, %s38
    %p49 = scmp.eq.s32.totalorder %s17, 0
    %p50 = por %p48, %p49
    %p51 = scmp.ne.s32.totalorder %s37, %s38
    %p52 = scmp.eq.s32.totalorder %s18, 3
    %p53 = por %p51, %p52
    %p55 = scmp.ne.s32.totalorder %s38, %s54
    %p56 = scmp.eq.s32.totalorder %s18, 0
    %p57 = por %p55, %p56
    %s58 = ssub.s32 %s19, %s31
    %s59 = ssub.s32 %s20, %s27
    %s60 = sor.u32 %s58, %s59
    %p61 = scmp.eq.s32.totalorder %s60, 0
    %s63 = sadd.s32 %s62, 1
    %s64 = scalar_select %p61, %s62, %s63
    %p67 = pneg %p61
    %p68 = scmp.eq.s32.totalorder %s12, 3
    %p69 = por %p67, %p68
    %p70 = scmp.ne.s32.totalorder %s62, %s65
    %p71 = scmp.eq.s32.totalorder %s12, 0
    %p72 = por %p70, %p71
    %p73 = scmp.ne.s32.totalorder %s62, %s65
    %p74 = scmp.eq.s32.totalorder %s17, 3
    %p75 = por %p73, %p74
    %p76 = scmp.ne.s32.totalorder %s65, %s66
    %p77 = scmp.eq.s32.totalorder %s17, 0
    %p78 = por %p76, %p77
    %p79 = scmp.ne.s32.totalorder %s65, %s66
    %p80 = scmp.eq.s32.totalorder %s18, 3
    %p81 = por %p79, %p80
    %p83 = scmp.ne.s32.totalorder %s66, %s82
    %p84 = scmp.eq.s32.totalorder %s18, 0
    %p85 = por %p83, %p84
    %s86 = ssub.s32 %s20, %s27
    %p87 = scmp.eq.s32.totalorder %s86, 0
    %s89 = sadd.s32 %s88, 1
    %s90 = scalar_select %p87, %s88, %s89
    %p93 = pneg %p87
    %p94 = scmp.eq.s32.totalorder %s12, 3
    %p95 = por %p93, %p94
    %p96 = scmp.ne.s32.totalorder %s88, %s91
    %p97 = scmp.eq.s32.totalorder %s12, 0
    %p98 = por %p96, %p97
    %p99 = scmp.ne.s32.totalorder %s88, %s91
    %p100 = scmp.eq.s32.totalorder %s17, 3
    %p101 = por %p99, %p100
    %p102 = scmp.ne.s32.totalorder %s91, %s92
    %p103 = scmp.eq.s32.totalorder %s17, 0
    %p104 = por %p102, %p103
    %p105 = scmp.ne.s32.totalorder %s91, %s92
    %p106 = scmp.eq.s32.totalorder %s18, 3
    %p107 = por %p105, %p106
    %p109 = scmp.ne.s32.totalorder %s92, %s108
    %p110 = scmp.eq.s32.totalorder %s18, 0
    %p111 = por %p109, %p110
    %s113 = sadd.s32 %s112, 1
    %p116 = scmp.eq.s32.totalorder %s12, 3
    %p117 = scmp.ne.s32.totalorder %s112, %s114
    %p118 = scmp.eq.s32.totalorder %s12, 0
    %p119 = por %p117, %p118
    %p120 = scmp.ne.s32.totalorder %s112, %s114
    %p121 = scmp.eq.s32.totalorder %s17, 3
    %p122 = por %p120, %p121
    %p123 = scmp.ne.s32.totalorder %s114, %s115
    %p124 = scmp.eq.s32.totalorder %s17, 0
    %p125 = por %p123, %p124
    %p126 = scmp.ne.s32.totalorder %s114, %s115
    %p127 = scmp.eq.s32.totalorder %s18, 3
    %p128 = por %p126, %p127
    %p130 = scmp.ne.s32.totalorder %s115, %s129
    %p131 = scmp.eq.s32.totalorder %s18, 0
    %p132 = por %p130, %p131
    %s134 = sadd.s32 %s133, 1
    %p137 = scmp.eq.s32.totalorder %s12, 3
    %p138 = scmp.ne.s32.totalorder %s133, %s135
    %p139 = scmp.eq.s32.totalorder %s12, 0
    %p140 = por %p138, %p139
    %p141 = scmp.ne.s32.totalorder %s133, %s135
    %p142 = scmp.eq.s32.totalorder %s17, 3
    %p143 = por %p141, %p142
    %p144 = scmp.ne.s32.totalorder %s135, %s136
    %p145 = scmp.eq.s32.totalorder %s17, 0
    %p146 = por %p144, %p145
    %p147 = scmp.ne.s32.totalorder %s135, %s136
    %p148 = scmp.eq.s32.totalorder %s18, 3
    %p149 = por %p147, %p148
    %p151 = scmp.ne.s32.totalorder %s136, %s150
    %p152 = scmp.eq.s32.totalorder %s18, 0
    %p153 = por %p151, %p152
    %s155 = sadd.s32 %s154, 1
    %p158 = scmp.eq.s32.totalorder %s12, 3
    %p159 = scmp.ne.s32.totalorder %s154, %s156
    %p160 = scmp.eq.s32.totalorder %s12, 0
    %p161 = por %p159, %p160
    %p162 = scmp.ne.s32.totalorder %s154, %s156
    %p163 = scmp.eq.s32.totalorder %s17, 3
    %p164 = por %p162, %p163
    %p165 = scmp.ne.s32.totalorder %s156, %s157
    %p166 = scmp.eq.s32.totalorder %s17, 0
    %p167 = por %p165, %p166
    %p168 = scmp.ne.s32.totalorder %s156, %s157
    %p169 = scmp.eq.s32.totalorder %s18, 3
    %p170 = por %p168, %p169
    %p172 = scmp.ne.s32.totalorder %s157, %s171
    %p173 = scmp.eq.s32.totalorder %s18, 0
    %p174 = por %p172, %p173
    %s175 = ssub.s32 %s19, %s31
    %s176 = ssub.s32 %s20, %s27
    %s177 = sor.u32 %s175, %s176
    %p178 = scmp.eq.s32.totalorder %s177, 0
    %s180 = sadd.s32 %s179, 1
    %s181 = scalar_select %p178, %s179, %s180
    %p184 = pneg %p178
    %p185 = scmp.eq.s32.totalorder %s12, 3
    %p186 = por %p184, %p185
    %p187 = scmp.ne.s32.totalorder %s179, %s182
    %p188 = scmp.eq.s32.totalorder %s12, 0
    %p189 = por %p187, %p188
    %p190 = scmp.ne.s32.totalorder %s179, %s182
    %p191 = scmp.eq.s32.totalorder %s17, 3
    %p192 = por %p190, %p191
    %p193 = scmp.ne.s32.totalorder %s182, %s183
    %p194 = scmp.eq.s32.totalorder %s17, 0
    %p195 = por %p193, %p194
    %p196 = scmp.ne.s32.totalorder %s182, %s183
    %p197 = scmp.eq.s32.totalorder %s18, 3
    %p198 = por %p196, %p197
    %p200 = scmp.ne.s32.totalorder %s183, %s199
    %p201 = scmp.eq.s32.totalorder %s18, 0
    %p202 = por %p200, %p201
    %p203 = scmp.le.s32.totalorder 1, %s12
    %p204 = scmp.lt.s32.totalorder %s12, 5
    %p205 = pnand %p203, %p204
    %p206 = pneg %p205
    // Predicated region
    $region9: #{filter_forward.14} parent=5 // pred_check
      _
    $region10: #{filter_forward.14} parent=5 // pred_check_branch
      %208 = sbr.rel (%p205) target = $region12
    $region11: #{filter_forward.14} parent=5 // pred_region
      %s209 = ssub.s32 %s12, 1
      // Predicated region
      $region13: #{filter_forward.14} parent=11 // pred_check
        %p210 = pneg %p125
      $region14: #{filter_forward.14} parent=11 // pred_check_branch
        %212 = sbr.rel (%p210) target = $region16
      $region15: #{filter_forward.14} parent=11 // pred_region
        _
      $region16: #{filter_forward.14} parent=11 // pred_fallthru
        _
      // Predicated region
      $region17: #{filter_forward.14} parent=11 // pred_check
        %p213 = pneg %p146
      $region18: #{filter_forward.14} parent=11 // pred_check_branch
        %215 = sbr.rel (%p213) target = $region20
      $region19: #{filter_forward.14} parent=11 // pred_region
        _
      $region20: #{filter_forward.14} parent=11 // pred_fallthru
        _
      // Predicated region
      $region21: #{filter_forward.14} parent=11 // pred_check
        %p216 = pneg %p167
      $region22: #{filter_forward.14} parent=11 // pred_check_branch
        %218 = sbr.rel (%p216) target = $region24
      $region23: #{filter_forward.14} parent=11 // pred_region
        _
      $region24: #{filter_forward.14} parent=11 // pred_fallthru
        _
    $region12: #{filter_forward.14} parent=5 // pred_fallthru
      _
    %p219 = scmp.lt.s32.totalorder %s12, 4
    // Predicated region
    $region25: #{filter_forward.14} parent=5 // pred_check
      %p220 = pneg %p219
    $region26: #{filter_forward.14} parent=5 // pred_check_branch
      %222 = sbr.rel (%p220) target = $region28
    $region27: #{filter_forward.14} parent=5 // pred_region
      // Predicated region
      $region29: #{filter_forward.14} parent=27 // pred_check
        %p223 = pneg %p44
      $region30: #{filter_forward.14} parent=27 // pred_check_branch
        %225 = sbr.rel (%p223) target = $region32
      $region31: #{filter_forward.14} parent=27 // pred_region
        %p226 = scmp.lt.s32.totalorder %s19, 1
        %s227 = scalar_select %p226, %s19, 1
        %s228 = smul.addr %s227, 5
        %s229 = smul.addr %s228, 8
        %s230 = scalar_lea.vmem %s0, %s229
      $region32: #{filter_forward.14} parent=27 // pred_fallthru
        _
      // Predicated region
      $region33: #{filter_forward.14} parent=27 // pred_check
        %p231 = pneg %p72
      $region34: #{filter_forward.14} parent=27 // pred_check_branch
        %233 = sbr.rel (%p231) target = $region36
      $region35: #{filter_forward.14} parent=27 // pred_region
        %p234 = scmp.lt.s32.totalorder %s19, 1
        %s235 = scalar_select %p234, %s19, 1
        %p236 = scmp.lt.s32.totalorder %s20, 1
        %s237 = scalar_select %p236, %s20, 1
        %s238 = smul.addr %s235, 2
        %s239 = sadd.s32 %s237, %s238
        %s240 = smul.addr %s239, 8
        %s241 = scalar_lea.vmem %s1, %s240
      $region36: #{filter_forward.14} parent=27 // pred_fallthru
        _
      // Predicated region
      $region37: #{filter_forward.14} parent=27 // pred_check
        %p242 = pneg %p98
      $region38: #{filter_forward.14} parent=27 // pred_check_branch
        %244 = sbr.rel (%p242) target = $region40
      $region39: #{filter_forward.14} parent=27 // pred_region
        %p245 = scmp.lt.s32.totalorder %s20, 1
        %s246 = scalar_select %p245, %s20, 1
        %s247 = smul.addr %s246, 8
        %s248 = scalar_lea.vmem %s2, %s247
      $region40: #{filter_forward.14} parent=27 // pred_fallthru
        _
    $region28: #{filter_forward.14} parent=5 // pred_fallthru
      _
    %p249 = scmp.le.s32.totalorder 1, %s12
    %p250 = scmp.lt.s32.totalorder %s12, 5
    %p251 = pnand %p249, %p250
    %p252 = pneg %p251
    // Predicated region
    $region41: #{filter_forward.14} parent=5 // pred_check
      _
    $region42: #{filter_forward.14} parent=5 // pred_check_branch
      %254 = sbr.rel (%p251) target = $region44
    $region43: #{filter_forward.14} parent=5 // pred_region
      %s255 = ssub.s32 %s12, 1
      %p256 = scmp.lt.s32.totalorder %s21, 1
      %s257 = scalar_select %p256, %s21, 1
      %s258 = smul.addr %s257, 5
      %s259 = smul.addr %s258, 8
      %s260 = scalar_lea.vmem %s0, %s259
      %p261 = pneg %p50
      %p262 = pneg %p47
      %p263 = scmp.lt.s32.totalorder %s21, 1
      %s264 = scalar_select %p263, %s21, 1
      %p265 = scmp.lt.s32.totalorder %s22, 1
      %s266 = scalar_select %p265, %s22, 1
      %s267 = smul.addr %s264, 2
      %s268 = sadd.s32 %s266, %s267
      %s269 = smul.addr %s268, 8
      %s270 = scalar_lea.vmem %s1, %s269
      %p271 = pneg %p78
      %p272 = pneg %p75
      %p273 = scmp.lt.s32.totalorder %s22, 1
      %s274 = scalar_select %p273, %s22, 1
      %s275 = smul.addr %s274, 8
      %s276 = scalar_lea.vmem %s2, %s275
      %p277 = pneg %p104
      %p278 = pneg %p101
      %p279 = pneg %p125
      %p280 = pneg %p122
      %p281 = pneg %p146
      %p282 = pneg %p143
      %p283 = pneg %p167
      %p284 = pneg %p164
      %p285 = pneg %p195
      %p286 = pneg %p192
      %p287 = scmp.lt.s32.totalorder %s21, 1
      %s288 = scalar_select %p287, %s21, 1
      %p289 = scmp.lt.s32.totalorder %s22, 1
      %s290 = scalar_select %p289, %s22, 1
      %s291 = smul.addr %s288, 2
      %s292 = sadd.s32 %s290, %s291
      %s293 = smul.addr %s292, 8
      %s294 = scalar_lea.vmem %s6, %s293
      %p295 = scmp.lt.s32.totalorder %s21, 1
      %s296 = scalar_select %p295, %s21, 1
      %s297 = smul.addr %s296, 5
      %s298 = smul.addr %s297, 8
      %s299 = scalar_lea.vmem %s0, %s298
      %p300 = scmp.lt.s32.totalorder %s21, 1
      %s301 = scalar_select %p300, %s21, 1
      %p302 = scmp.lt.s32.totalorder %s22, 1
      %s303 = scalar_select %p302, %s22, 1
      %s304 = smul.addr %s301, 2
      %s305 = sadd.s32 %s303, %s304
      %s306 = smul.addr %s305, 8
      %s307 = scalar_lea.vmem %s1, %s306
      %p308 = scmp.lt.s32.totalorder %s22, 1
      %s309 = scalar_select %p308, %s22, 1
      %s310 = smul.addr %s309, 8
      %s311 = scalar_lea.vmem %s2, %s310
      %p312 = scmp.lt.s32.totalorder %s21, 1
      %s313 = scalar_select %p312, %s21, 1
      %p314 = scmp.lt.s32.totalorder %s22, 1
      %s315 = scalar_select %p314, %s22, 1
      %s316 = smul.addr %s313, 2
      %s317 = sadd.s32 %s315, %s316
      %s318 = smul.addr %s317, 8
      %s319 = scalar_lea.vmem %s6, %s318
      %p321 = scmp.eq.s32.totalorder %s22, 0
      // Predicated region
      $region45: #{filter_forward.14} parent=43 // pred_check
        %p322 = pneg %p321
      $region46: #{filter_forward.14} parent=43 // pred_check_branch
        %324 = sbr.rel (%p322) target = $region48
      $region47: #{filter_forward.14} parent=43 // pred_region
        %vm325 = vcmask 27648
        %326 = vst.msk [vmem:[#allocation3] sm:$0xf] %vm325, 0
        %vm327 = vcmask 60416
        %328 = vst.msk [vmem:[#allocation4] sm:$0xf] %vm327, 0
      $region48: #{filter_forward.14} parent=43 // pred_fallthru
        _
      %v329 = vld [vmem:[%s299] sm:$0xff]
      %v330 = vld [vmem:[%s299 + $0x8] sm:$0xff]
      %v331 = vld [vmem:[%s299 + $0x10] sm:$0xff]
      %v332 = vld [vmem:[%s299 + $0x18] sm:$0xff]
      %v333 = vld [vmem:[%s299 + $0x20] sm:$0x1]
      %v334 = vld [vmem:[%s3] sm:$0xff]
      %v335 = vld [vmem:[%s3 + $0x8] sm:$0xff]
      %v336 = vld [vmem:[%s3 + $0x10] sm:$0xff]
      %v337 = vld [vmem:[%s3 + $0x18] sm:$0xff]
      %vm338 = vcmask 269312
      %v340 = vsel %vm338, %v334, 0
      %v343 = vsel %vm338, %v335, 0
      %v346 = vsel %vm338, %v336, 0
      %v349 = vsel %vm338, %v337, 0
      %vm351 = vcmask 1040384
      %v353 = vsel %vm351, %v333, 0
      %355 = vmatprep.subr.mxu0 0.0
      %356 = vmatpush1.msra.mxu0 %v329
      %357 = vmatprep.subr.mxu0 0.0
      %358 = vmatpush1.msra.mxu0 %v330
      %359 = vmatprep.subr.mxu0 0.0
      %360 = vmatpush1.msra.mxu0 %v331
      %361 = vmatprep.subr.mxu0 0.0
      %362 = vmatpush1.msra.mxu0 %v332
      %363 = vmatprep.subr.mxu0 0.0
      %364 = vmatpush1.msra.mxu0 %v353
      %365 = vmatprep.subr.mxu0 0.0
      %366 = vmatpush1.msra.mxu0 0.0
      %367 = vmatprep.subr.mxu0 0.0
      %368 = vmatpush1.msra.mxu0 0.0
      %369 = vmatprep.subr.mxu0 0.0
      %370 = vmatpush1.msra.mxu0 0.0
      %371 = vmatprep.subr.mxu0 0.0
      %372 = vmatpush1.msra.mxu0 0.0
      %373 = vmatprep.subr.mxu0 0.0
      %374 = vmatpush1.msra.mxu0 0.0
      %375 = vmatprep.subr.mxu0 0.0
      %376 = vmatpush1.msra.mxu0 0.0
      %377 = vmatprep.subr.mxu0 0.0
      %378 = vmatpush1.msra.mxu0 0.0
      %379 = vmatprep.subr.mxu0 0.0
      %380 = vmatpush1.msra.mxu0 0.0
      %381 = vmatprep.subr.mxu0 0.0
      %382 = vmatpush1.msra.mxu0 0.0
      %383 = vmatprep.subr.mxu0 0.0
      %384 = vmatpush1.msra.mxu0 0.0
      %385 = vmatprep.subr.mxu0 0.0
      %386 = vmatpush1.msra.mxu0 0.0
      %387 = vmatprep.subr.mxu0 0.0
      %388 = vmatpush1.msra.mxu0 0.0
      %389 = vmatprep.subr.mxu0 0.0
      %390 = vmatpush1.msra.mxu0 0.0
      %391 = vmatprep.subr.mxu0 0.0
      %392 = vmatpush1.msra.mxu0 0.0
      %393 = vmatprep.subr.mxu0 0.0
      %394 = vmatpush1.msra.mxu0 0.0
      %395 = vmatprep.subr.mxu0 0.0
      %396 = vmatpush1.msra.mxu0 0.0
      %397 = vmatprep.subr.mxu0 0.0
      %398 = vmatpush1.msra.mxu0 0.0
      %399 = vmatprep.subr.mxu0 0.0
      %400 = vmatpush1.msra.mxu0 0.0
      %401 = vmatprep.subr.mxu0 0.0
      %402 = vmatpush1.msra.mxu0 0.0
      %403 = vmatprep.subr.mxu0 0.0
      %404 = vmatpush1.msra.mxu0 0.0
      %405 = vmatprep.subr.mxu0 0.0
      %406 = vmatpush1.msra.mxu0 0.0
      %407 = vmatprep.subr.mxu0 0.0
      %408 = vmatpush1.msra.mxu0 0.0
      %409 = vmatprep.subr.mxu0 0.0
      %410 = vmatpush1.msra.mxu0 0.0
      %411 = vmatprep.subr.mxu0 0.0
      %412 = vmatpush1.msra.mxu0 0.0
      %413 = vmatprep.subr.mxu0 0.0
      %414 = vmatpush1.msra.mxu0 0.0
      %415 = vmatprep.subr.mxu0 0.0
      %416 = vmatpush1.msra.mxu0 0.0
      %417 = vmatprep.subr.mxu0 0.0
      %418 = vmatpush1.msra.mxu0 0.0
      %419 = vmatprep.mubr.f32.mxu0 0.0
      %420 = vmatmul.mubr.f32.gmra.mrb[0].mxu0 %v340
      %v421 = vpop.f32.mrb[0].mxu0
      %v422 = vadd.f32 0.0, %v421
      %v423 = vpop.f32.mrb[0].mxu0
      %424 = vmatprep.mubr.f32.mxu0 0.0
      %425 = vmatmul.mubr.f32.gmra.mrb[0].mxu0 %v343
      %v426 = vpop.f32.mrb[0].mxu0
      %v427 = vadd.f32 0.0, %v426
      %v428 = vpop.f32.mrb[0].mxu0
      %429 = vmatprep.mubr.f32.mxu0 0.0
      %430 = vmatmul.mubr.f32.gmra.mrb[0].mxu0 %v346
      %v431 = vpop.f32.mrb[0].mxu0
      %v432 = vadd.f32 0.0, %v431
      %v433 = vpop.f32.mrb[0].mxu0
      %434 = vmatprep.mubr.f32.mxu0 0.0
      %435 = vmatmul.mubr.f32.gmra.mrb[0].mxu0 %v349
      %v436 = vpop.f32.mrb[0].mxu0
      %v437 = vadd.f32 0.0, %v436
      %v438 = vpop.f32.mrb[0].mxu0
      %439 = vdwg.mxu0
      %v440 = vld [vmem:[%s311] sm:$0xff]
      %vm441 = vcmask 64512
      %v443 = vsel %vm441, %v422, 0
      %v446 = vsel %vm441, %v427, 0
      %v449 = vsel %vm441, %v432, 0
      %v452 = vsel %vm441, %v437, 0
      %454 = vmatprep.subr.mxu0 0.0
      %455 = vmatpush1.msra.mxu0 %v440
      %456 = vmatprep.subr.mxu0 0.0
      %457 = vmatpush1.msra.mxu0 0.0
      %458 = vmatprep.subr.mxu0 0.0
      %459 = vmatpush1.msra.mxu0 0.0
      %460 = vmatprep.subr.mxu0 0.0
      %461 = vmatpush1.msra.mxu0 0.0
      %462 = vmatprep.subr.mxu0 0.0
      %463 = vmatpush1.msra.mxu0 0.0
      %464 = vmatprep.subr.mxu0 0.0
      %465 = vmatpush1.msra.mxu0 0.0
      %466 = vmatprep.subr.mxu0 0.0
      %467 = vmatpush1.msra.mxu0 0.0
      %468 = vmatprep.subr.mxu0 0.0
      %469 = vmatpush1.msra.mxu0 0.0
      %470 = vmatprep.subr.mxu0 0.0
      %471 = vmatpush1.msra.mxu0 0.0
      %472 = vmatprep.subr.mxu0 0.0
      %473 = vmatpush1.msra.mxu0 0.0
      %474 = vmatprep.subr.mxu0 0.0
      %475 = vmatpush1.msra.mxu0 0.0
      %476 = vmatprep.subr.mxu0 0.0
      %477 = vmatpush1.msra.mxu0 0.0
      %478 = vmatprep.subr.mxu0 0.0
      %479 = vmatpush1.msra.mxu0 0.0
      %480 = vmatprep.subr.mxu0 0.0
      %481 = vmatpush1.msra.mxu0 0.0
      %482 = vmatprep.subr.mxu0 0.0
      %483 = vmatpush1.msra.mxu0 0.0
      %484 = vmatprep.subr.mxu0 0.0
      %485 = vmatpush1.msra.mxu0 0.0
      %486 = vmatprep.subr.mxu0 0.0
      %487 = vmatpush1.msra.mxu0 0.0
      %488 = vmatprep.subr.mxu0 0.0
      %489 = vmatpush1.msra.mxu0 0.0
      %490 = vmatprep.subr.mxu0 0.0
      %491 = vmatpush1.msra.mxu0 0.0
      %492 = vmatprep.subr.mxu0 0.0
      %493 = vmatpush1.msra.mxu0 0.0
      %494 = vmatprep.subr.mxu0 0.0
      %495 = vmatpush1.msra.mxu0 0.0
      %496 = vmatprep.subr.mxu0 0.0
      %497 = vmatpush1.msra.mxu0 0.0
      %498 = vmatprep.subr.mxu0 0.0
      %499 = vmatpush1.msra.mxu0 0.0
      %500 = vmatprep.subr.mxu0 0.0
      %501 = vmatpush1.msra.mxu0 0.0
      %502 = vmatprep.subr.mxu0 0.0
      %503 = vmatpush1.msra.mxu0 0.0
      %504 = vmatprep.subr.mxu0 0.0
      %505 = vmatpush1.msra.mxu0 0.0
      %506 = vmatprep.subr.mxu0 0.0
      %507 = vmatpush1.msra.mxu0 0.0
      %508 = vmatprep.subr.mxu0 0.0
      %509 = vmatpush1.msra.mxu0 0.0
      %510 = vmatprep.subr.mxu0 0.0
      %511 = vmatpush1.msra.mxu0 0.0
      %512 = vmatprep.subr.mxu0 0.0
      %513 = vmatpush1.msra.mxu0 0.0
      %514 = vmatprep.subr.mxu0 0.0
      %515 = vmatpush1.msra.mxu0 0.0
      %516 = vmatprep.subr.mxu0 0.0
      %517 = vmatpush1.msra.mxu0 0.0
      %518 = vmatprep.mubr.f32.mxu0 0.0
      %519 = vmatmul.mubr.f32.gmra.mrb[0].mxu0 %v443
      %v520 = vpop.f32.mrb[0].mxu0
      %v521 = vadd.f32 0.0, %v520
      %v522 = vpop.f32.mrb[0].mxu0
      %523 = vmatprep.mubr.f32.mxu0 0.0
      %524 = vmatmul.mubr.f32.gmra.mrb[0].mxu0 %v446
      %v525 = vpop.f32.mrb[0].mxu0
      %v526 = vadd.f32 0.0, %v525
      %v527 = vpop.f32.mrb[0].mxu0
      %528 = vmatprep.mubr.f32.mxu0 0.0
      %529 = vmatmul.mubr.f32.gmra.mrb[0].mxu0 %v449
      %v530 = vpop.f32.mrb[0].mxu0
      %v531 = vadd.f32 0.0, %v530
      %v532 = vpop.f32.mrb[0].mxu0
      %533 = vmatprep.mubr.f32.mxu0 0.0
      %534 = vmatmul.mubr.f32.gmra.mrb[0].mxu0 %v452
      %v535 = vpop.f32.mrb[0].mxu0
      %v536 = vadd.f32 0.0, %v535
      %v537 = vpop.f32.mrb[0].mxu0
      %538 = vdwg.mxu0
      %v539 = vld [vmem:[%s307] sm:$0xff]
      %v540 = vmul.f32 %v539, %v521
      %v541 = vadd.f32 %v540, %v531
      %v542 = vpack.c.bf16 %v541, %v541
      %v543 = vld [vmem:[#allocation3] sm:$0xf]
      %545 = vrot.lane.b32.xlu0 %v543, 4
      %v546 = vpop.permute.xlu0 %545
      %vm548 = vcmask 60448
      %549 = vst.msk [vmem:[#allocation2] sm:$0xf] %vm548, %v546
      %v551 = vunpack.c.l.b16 %v542
      %v552 = vpack.c.b16 %v551, %v551
      %553 = vrot.lane.b32.xlu0 %v552, 4
      %v554 = vpop.permute.xlu0 %553
      %vm556 = vcmask 27648
      %557 = vst.msk [vmem:[#allocation3] sm:$0xf] %vm556, %v554
      %558 = vrot.lane.b32.xlu0 %v552, 8
      %v559 = vpop.permute.xlu0 %558
      %v560 = vrot.slane %v559, 4
      %vm561 = vcmask 64512
      %v562 = vsel %vm561, %v560, %v559
      %vm564 = vcmask 1043520
      %vm565 = vcmask 64516
      %vm566 = vmor %vm565, %vm564
      %567 = vst.msk [vmem:[#allocation2] sm:$0xff] %vm566, %v562
      %v568 = vld [vmem:[#allocation2] sm:$0xff]
      %v570 = vunpack.c.l.b16 %v568
      %v571 = vunpack.c.h.b16 %v568
      %v572 = vpack.c.b16 %v570, %v570
      %v573 = vpack.c.b16 %v571, %v571
      %574 = vrot.lane.b32.xlu0 %v572, 127
      %v575 = vpop.permute.xlu0 %574
      %576 = vrot.lane.b32.xlu0 %v573, 127
      %v577 = vpop.permute.xlu0 %576
      %vm578 = vcmask 1039360
      %v579 = vsel %vm578, %v575, %v577
      %580 = vrot.lane.b32.xlu0 %v572, 126
      %v581 = vpop.permute.xlu0 %580
      %582 = vrot.lane.b32.xlu0 %v573, 126
      %v583 = vpop.permute.xlu0 %582
      %vm584 = vcmask 1031168
      %v585 = vsel %vm584, %v581, %v583
      %586 = vrot.lane.b32.xlu0 %v572, 125
      %v587 = vpop.permute.xlu0 %586
      %588 = vrot.lane.b32.xlu0 %v573, 125
      %v589 = vpop.permute.xlu0 %588
      %vm590 = vcmask 1022976
      %v591 = vsel %vm590, %v587, %v589
      %592 = vrot.lane.b32.xlu0 %v572, 124
      %v593 = vpop.permute.xlu0 %592
      %594 = vrot.lane.b32.xlu0 %v573, 124
      %v595 = vpop.permute.xlu0 %594
      %vm596 = vcmask 1014784
      %v597 = vsel %vm596, %v593, %v595
      %vm598 = vcmask 1043456
      %v601 = vsel %vm598, %v572, %v579
      %v604 = vsel %vm598, %v573, %v577
      %v607 = vsel %vm598, %v585, %v591
      %v610 = vsel %vm598, %v583, %v589
      %v611 = vld [vmem:[%s4] sm:$0xf]
      %v612 = vld [vmem:[%s5] sm:$0xff]
      %614 = vset.pattern.permute.xlu0 0
      %615 = vperm.xlu0 %614, %v612
      %v616 = vpop.permute.xlu0 %615
      %622 = vrot.lane.b32.xlu0 %v601, 124
      %v623 = vpop.permute.xlu0 %622
      %624 = vrot.lane.b32.xlu0 %v604, 124
      %v625 = vpop.permute.xlu0 %624
      %626 = vrot.lane.b32.xlu0 %v607, 124
      %v627 = vpop.permute.xlu0 %626
      %628 = vrot.lane.b32.xlu0 %v610, 124
      %v629 = vpop.permute.xlu0 %628
      %630 = vrot.lane.b32.xlu0 %v597, 124
      %v631 = vpop.permute.xlu0 %630
      %632 = vrot.lane.b32.xlu0 %v595, 124
      %v633 = vpop.permute.xlu0 %632
      %v634 = vsel %vm596, %v623, %v625
      %v635 = vsel %vm596, %v627, %v629
      %v636 = vsel %vm596, %v631, %v633
      %vm639 = vcmask 326656
      %v641 = vsel %vm639, %v611, 0
      %v644 = vsel %vm598, %v636, 0
      %646 = vmatprep.subr.bf16.mxu0 0
      %647 = vmatpush1.bf16.msra.mxu0 %v634
      %648 = vmatprep.subr.bf16.mxu0 0
      %649 = vmatpush1.bf16.msra.mxu0 %v635
      %650 = vmatprep.subr.bf16.mxu0 0
      %651 = vmatpush1.bf16.msra.mxu0 %v644
      %652 = vmatprep.subr.bf16.mxu0 0
      %653 = vmatpush1.bf16.msra.mxu0 0
      %654 = vmatprep.subr.bf16.mxu0 0
      %655 = vmatpush1.bf16.msra.mxu0 0
      %656 = vmatprep.subr.bf16.mxu0 0
      %657 = vmatpush1.bf16.msra.mxu0 0
      %658 = vmatprep.subr.bf16.mxu0 0
      %659 = vmatpush1.bf16.msra.mxu0 0
      %660 = vmatprep.subr.bf16.mxu0 0
      %661 = vmatpush1.bf16.msra.mxu0 0
      %662 = vmatprep.subr.bf16.mxu0 0
      %663 = vmatpush1.bf16.msra.mxu0 0
      %664 = vmatprep.subr.bf16.mxu0 0
      %665 = vmatpush1.bf16.msra.mxu0 0
      %666 = vmatprep.subr.bf16.mxu0 0
      %667 = vmatpush1.bf16.msra.mxu0 0
      %668 = vmatprep.subr.bf16.mxu0 0
      %669 = vmatpush1.bf16.msra.mxu0 0
      %670 = vmatprep.subr.bf16.mxu0 0
      %671 = vmatpush1.bf16.msra.mxu0 0
      %672 = vmatprep.subr.bf16.mxu0 0
      %673 = vmatpush1.bf16.msra.mxu0 0
      %674 = vmatprep.subr.bf16.mxu0 0
      %675 = vmatpush1.bf16.msra.mxu0 0
      %676 = vmatprep.subr.bf16.mxu0 0
      %677 = vmatpush1.bf16.msra.mxu0 0
      %678 = vmatprep.mubr.bf16.mxu0 0
      %679 = vmatmul.mubr.bf16.gmra.mrb[0].mxu0 %v641
      %v680 = vpop.f32.mrb[0].mxu0
      %v681 = vadd.f32 %v616, %v680
      %v682 = vpop.f32.mrb[0].mxu0
      %v683 = vpop.f32.mrb[0].mxu0
      %v684 = vpop.f32.mrb[0].mxu0
      %685 = vdwg.mxu0
      %v686 = vmul.f32 %v681, %v526
      %v687 = vadd.f32 %v686, %v536
      %v688 = vpack.c.bf16 %v687, %v687
      %v689 = vld [vmem:[#allocation4] sm:$0xf]
      %vm690 = vcmask 60416
      %691 = vst.msk [vmem:[#allocation2] sm:$0xf] %vm690, %v689
      %v693 = vunpack.c.l.b16 %v688
      %v694 = vpack.c.b16 %v693, %v693
      %695 = vrot.lane.b32.xlu0 %v694, 8
      %v696 = vpop.permute.xlu0 %695
      %698 = vst.msk [vmem:[#allocation4] sm:$0xf] %vm690, %v696
      %v699 = vrot.slane %v696, 4
      %v700 = vsel %vm561, %v699, %v696
      %702 = vst.msk [vmem:[#allocation2] sm:$0xff] %vm566, %v700
      %v703 = vld [vmem:[#allocation2] sm:$0xf]
      %v704 = vld [vmem:[#allocation2] sm:$0xff]
      %v706 = vunpack.c.l.b16 %v704
      %v707 = vunpack.c.h.b16 %v704
      %v708 = vpack.c.b16 %v706, %v706
      %v709 = vpack.c.b16 %v707, %v707
      %710 = vrot.lane.b32.xlu0 %v708, 126
      %v711 = vpop.permute.xlu0 %710
      %712 = vrot.lane.b32.xlu0 %v709, 126
      %v713 = vpop.permute.xlu0 %712
      %v714 = vsel %vm584, %v711, %v713
      %715 = vrot.lane.b32.xlu0 %v708, 124
      %v716 = vpop.permute.xlu0 %715
      %717 = vrot.lane.b32.xlu0 %v709, 124
      %v718 = vpop.permute.xlu0 %717
      %v719 = vsel %vm596, %v716, %v718
      %720 = vrot.lane.b32.xlu0 %v708, 122
      %v721 = vpop.permute.xlu0 %720
      %722 = vrot.lane.b32.xlu0 %v709, 122
      %v723 = vpop.permute.xlu0 %722
      %vm724 = vcmask 998400
      %v725 = vsel %vm724, %v721, %v723
      %726 = vrot.lane.b32.xlu0 %v708, 120
      %v727 = vpop.permute.xlu0 %726
      %728 = vrot.lane.b32.xlu0 %v709, 120
      %v729 = vpop.permute.xlu0 %728
      %vm730 = vcmask 982016
      %v731 = vsel %vm730, %v727, %v729
      %v734 = vsel %vm598, %v703, %v714
      %v738 = vsel %vm598, %v719, %v725
      %s740 = scalar_lea.vmem %s4, 4
      %v741 = vld [vmem:[%s740] sm:$0xf]
      %s742 = scalar_lea.vmem %s5, 8
      %v743 = vld [vmem:[%s742] sm:$0xff]
      %745 = vset.pattern.permute.xlu0 0
      %746 = vperm.xlu0 %745, %v743
      %v747 = vpop.permute.xlu0 %746
      %v750 = vsel %vm639, %v741, 0
      %v753 = vsel %vm598, %v731, 0
      %755 = vmatprep.subr.bf16.mxu0 0
      %756 = vmatpush1.bf16.msra.mxu0 %v734
      %757 = vmatprep.subr.bf16.mxu0 0
      %758 = vmatpush1.bf16.msra.mxu0 %v738
      %759 = vmatprep.subr.bf16.mxu0 0
      %760 = vmatpush1.bf16.msra.mxu0 %v753
      %761 = vmatprep.subr.bf16.mxu0 0
      %762 = vmatpush1.bf16.msra.mxu0 0
      %763 = vmatprep.subr.bf16.mxu0 0
      %764 = vmatpush1.bf16.msra.mxu0 0
      %765 = vmatprep.subr.bf16.mxu0 0
      %766 = vmatpush1.bf16.msra.mxu0 0
      %767 = vmatprep.subr.bf16.mxu0 0
      %768 = vmatpush1.bf16.msra.mxu0 0
      %769 = vmatprep.subr.bf16.mxu0 0
      %770 = vmatpush1.bf16.msra.mxu0 0
      %771 = vmatprep.subr.bf16.mxu0 0
      %772 = vmatpush1.bf16.msra.mxu0 0
      %773 = vmatprep.subr.bf16.mxu0 0
      %774 = vmatpush1.bf16.msra.mxu0 0
      %775 = vmatprep.subr.bf16.mxu0 0
      %776 = vmatpush1.bf16.msra.mxu0 0
      %777 = vmatprep.subr.bf16.mxu0 0
      %778 = vmatpush1.bf16.msra.mxu0 0
      %779 = vmatprep.subr.bf16.mxu0 0
      %780 = vmatpush1.bf16.msra.mxu0 0
      %781 = vmatprep.subr.bf16.mxu0 0
      %782 = vmatpush1.bf16.msra.mxu0 0
      %783 = vmatprep.subr.bf16.mxu0 0
      %784 = vmatpush1.bf16.msra.mxu0 0
      %785 = vmatprep.subr.bf16.mxu0 0
      %786 = vmatpush1.bf16.msra.mxu0 0
      %787 = vmatprep.mubr.bf16.mxu0 0
      %788 = vmatmul.mubr.bf16.gmra.mrb[0].mxu0 %v750
      %v789 = vpop.f32.mrb[0].mxu0
      %v790 = vadd.f32 %v747, %v789
      %v791 = vpop.f32.mrb[0].mxu0
      %v792 = vpop.f32.mrb[0].mxu0
      %v793 = vpop.f32.mrb[0].mxu0
      %794 = vdwg.mxu0
      %795 = vst [vmem:[%s319] sm:$0xff] %v790
      %p796 = scmp.lt.s32.totalorder %s21, 1
      %s797 = scalar_select %p796, %s21, 1
      %p798 = scmp.lt.s32.totalorder %s22, 1
      %s799 = scalar_select %p798, %s22, 1
      %s800 = smul.addr %s797, 2
      %s801 = sadd.s32 %s799, %s800
      %s802 = smul.addr %s801, 8
      %s803 = scalar_lea.vmem %s6, %s802
      // Predicated region
      $region49: #{filter_forward.14} parent=43 // pred_check
        %p804 = pneg %p192
      $region50: #{filter_forward.14} parent=43 // pred_check_branch
        %806 = sbr.rel (%p804) target = $region52
      $region51: #{filter_forward.14} parent=43 // pred_region
        _
      $region52: #{filter_forward.14} parent=43 // pred_fallthru
        _
    $region44: #{filter_forward.14} parent=5 // pred_fallthru
      _
    %p807 = scmp.le.s32.totalorder 2, %s12
    // Predicated region
    $region53: #{filter_forward.14} parent=5 // pred_check
      %p808 = pneg %p807
    $region54: #{filter_forward.14} parent=5 // pred_check_branch
      %810 = sbr.rel (%p808) target = $region56
    $region55: #{filter_forward.14} parent=5 // pred_region
      %s811 = ssub.s32 %s12, 2
      // Predicated region
      $region57: #{filter_forward.14} parent=55 // pred_check
        %p812 = pneg %p198
      $region58: #{filter_forward.14} parent=55 // pred_check_branch
        %814 = sbr.rel (%p812) target = $region60
      $region59: #{filter_forward.14} parent=55 // pred_region
        %p815 = scmp.lt.s32.totalorder %s23, 1
        %s816 = scalar_select %p815, %s23, 1
        %p817 = scmp.lt.s32.totalorder %s24, 1
        %s818 = scalar_select %p817, %s24, 1
        %s819 = smul.addr %s816, 2
        %s820 = sadd.s32 %s818, %s819
        %s821 = smul.addr %s820, 8
        %s822 = scalar_lea.vmem %s6, %s821
      $region60: #{filter_forward.14} parent=55 // pred_fallthru
        _
    $region56: #{filter_forward.14} parent=5 // pred_fallthru
      _
  $region6: #{filter_forward.14} parent=0 // loop_footer
    %s16 = sadd.s32 1, %s12
  $region7: #{filter_forward.14} parent=0 // loop_footer_branch
    %11 = sbr.rel target = $region3
  $region8: #{filter_forward.14} parent=0 // loop_exit
    _

</llo_original>
